<compile_context>
chip_gen: v6e
topology: v6e:2x2x1
jax: 0.10.0
libtpu: 0.0.40
codegen_flags: <defaults>
</compile_context>

<pallas_src>
import jax
import jax.numpy as jnp
from jax.experimental import pallas as pl
from jax.experimental.pallas import tpu as pltpu


# =============================================================================
# In-kernel helper: lane shift.  All activations use layout (C, H*W): channels
# on sublanes, flattened pixels lane-dense.
# =============================================================================
def _shift_lanes(x, s):
    """out[:, p] = x[:, p + s] for in-range p+s.

    Lanes whose source is out of range hold either zero (concat path) or a
    wrapped value (roll path); callers either mask them (conv taps) or never
    read them (maxpool gathers only even positions), so both fills are OK.
    """
    c, hw = x.shape
    if s == 0:
        return x
    if hw % 128 == 0:
        # lane rotation on the otherwise-idle XLU slot
        return pltpu.roll(x, (-s) % hw, axis=1)
    fill = jnp.zeros((c, abs(s)), x.dtype)
    if s > 0:
        return jnp.concatenate([x[:, s:], fill], axis=1)
    return jnp.concatenate([fill, x[:, :hw + s]], axis=1)


# =============================================================================
# Host-side constant builders (hoisted out of the kernel body).
# =============================================================================
def _host_tap_masks(h, w):
    """(9, h*w) f32 0/1: pixel p has a valid (y+ry, x+rx) neighbour."""
    p = jnp.arange(h * w, dtype=jnp.int32)
    y, x = p // w, p % w
    rows = []
    for ry in (-1, 0, 1):
        for rx in (-1, 0, 1):
            rows.append((y + ry >= 0) & (y + ry < h) &
                        (x + rx >= 0) & (x + rx < w))
    return jnp.stack(rows).astype(jnp.float32)


def _host_pool_sel(h, w):
    """(h*w, (h/2)*(w/2)) bf16 0/1 gather of the even-(y,x) positions."""
    w2 = w // 2
    q = jnp.arange(h * w, dtype=jnp.int32)[:, None]
    p = jnp.arange((h // 2) * w2, dtype=jnp.int32)[None, :]
    return (q == 2 * (p // w2) * w + 2 * (p % w2)).astype(jnp.bfloat16)


def _host_up_sel(h, w):
    """(h*w, (2h)*(2w)) bf16 0/1 nearest-neighbour 2x upsample."""
    w2 = 2 * w
    q = jnp.arange(h * w, dtype=jnp.int32)[:, None]
    p = jnp.arange((2 * h) * w2, dtype=jnp.int32)[None, :]
    return (q == ((p // w2) // 2) * w + ((p % w2) // 2)).astype(jnp.bfloat16)


# =============================================================================
# Parameter init (deterministic, mimics kaiming_normal_) -- canonical format:
# weight (9, Cin, Cout) == HWIO flattened over taps, bias (Cout,).
# =============================================================================
def _init_conv(key, cin, cout):
    kw, kb = jax.random.split(key)
    std = (2.0 / (cin * 9)) ** 0.5
    w = std * jax.random.normal(kw, (9, cin, cout), jnp.float32)
    bound = 1.0 / (cin * 9) ** 0.5
    b = jax.random.uniform(kb, (cout,), jnp.float32, -bound, bound)
    return w, b


def init_params(key, cfg):
    layers, fr, ch, ncls, rep = (cfg["layers"], cfg["feature_root"],
                                 cfg["channels"], cfg["n_class"],
                                 cfg["conv_repeat"])
    params = {"down": [], "up": {}, "predict": None}
    for layer in range(layers):
        f = fr * 2 ** layer
        cin = ch if layer == 0 else f // 2
        convs = []
        for _ in range(rep):
            key, sub = jax.random.split(key)
            convs.append(_init_conv(sub, cin, f))
            cin = f
        params["down"].append(convs)
    for layer in range(layers - 2, -1, -1):
        f = fr * 2 ** layer
        cin = f * 3
        convs = []
        for _ in range(rep):
            key, sub = jax.random.split(key)
            convs.append(_init_conv(sub, cin, f))
            cin = f
        params["up"][layer] = convs
    key, sub = jax.random.split(key)
    params["predict"] = _init_conv(sub, fr, ncls)
    return params


# =============================================================================
# Host-side kernel-input preparation: tap-fused lane-dense bf16 weights,
# f32 biases, boundary masks and pool/upsample selection matrices.
# =============================================================================
def _prep_kernel_inputs(params, cfg, H, W, c_pad):
    layers, ch = cfg["layers"], cfg["channels"]

    def pack_w(w):                    # (9, Cin, Cout) -> (Cout, 9*Cin) bf16
        cout = w.shape[2]
        return jnp.transpose(w, (2, 0, 1)).reshape(cout, -1).astype(jnp.bfloat16)

    wb = []
    for layer in range(layers):
        for r, (w, b) in enumerate(params["down"][layer]):
            if layer == 0 and r == 0 and c_pad != ch:
                w = jnp.pad(w, ((0, 0), (0, c_pad - ch), (0, 0)))
            wb.append((pack_w(w), b.reshape(-1, 1).astype(jnp.float32)))
    for layer in range(layers - 2, -1, -1):          # unsplit cat weights
        for w, b in params["up"][layer]:
            wb.append((pack_w(w), b.reshape(-1, 1).astype(jnp.float32)))
    w, b = params["predict"]
    wb.append((pack_w(w), b.reshape(-1, 1).astype(jnp.float32)))

    masks = [_host_tap_masks(H >> l, W >> l) for l in range(layers)]
    pool_sels = [_host_pool_sel(H >> l, W >> l) for l in range(layers - 1)]
    up_sels = [_host_up_sel(H >> (l + 1), W >> (l + 1)) for l in range(layers - 1)]
    return wb, masks, pool_sels, up_sels


# =============================================================================
# Fused UNet forward: one pallas_call, NCHW in / NCHW out.
# =============================================================================
def unet_forward_pallas(x_nchw, params, cfg):
    layers, rep, ncls = cfg["layers"], cfg["conv_repeat"], cfg["n_class"]
    n, c, H, W = x_nchw.shape
    hw = H * W
    c_pad = -(-c // 8) * 8                   # align input channels to sublanes

    wb, masks, pool_sels, up_sels = _prep_kernel_inputs(params, cfg, H, W, c_pad)
    n_conv = len(wb)

    x_flat = x_nchw.reshape(n, c, hw)
    if c_pad != c:
        x_flat = jnp.pad(x_flat, ((0, 0), (0, c_pad - c), (0, 0)))

    def kernel(*refs):
        x_ref, o_ref = refs[0], refs[-1]
        pos = 1
        conv_refs = [(refs[pos + 2 * i], refs[pos + 2 * i + 1])
                     for i in range(n_conv)]
        pos += 2 * n_conv
        mask_refs = refs[pos:pos + layers]; pos += layers
        pool_refs = refs[pos:pos + layers - 1]; pos += layers - 1
        upsel_refs = refs[pos:pos + layers - 1]; pos += layers - 1

        conv_iter = iter(conv_refs)

        def conv3x3(xv, lvl, act):
            """3x3 same-pad conv (+bias +act) as ONE (Cout,9Cin)x(9Cin,HW) dot."""
            w_ref, b_ref = next(conv_iter)
            w_img = W >> lvl
            m_ref = mask_refs[lvl]
            taps = []
            for t in range(9):
                ry, rx = t // 3 - 1, t % 3 - 1
                taps.append(_shift_lanes(xv, ry * w_img + rx) * m_ref[t:t + 1, :])
            xt = jnp.concatenate(taps, axis=0).astype(jnp.bfloat16)
            acc = jnp.dot(w_ref[...], xt, preferred_element_type=jnp.float32)
            acc = acc + b_ref[...]
            if act == "relu":
                return jnp.maximum(acc, 0.0)
            # Softmax2d == channel softmax: 2-row sublane reduce + EUP recip.
            mx = jnp.max(acc, axis=0, keepdims=True)
            e = jnp.exp(acc - mx)
            return e * pl.reciprocal(jnp.sum(e, axis=0, keepdims=True),
                                     approx=True)

        def maxpool2(xv, lvl):
            w_img = W >> lvl
            mh = jnp.maximum(xv, _shift_lanes(xv, 1))
            mv = jnp.maximum(mh, _shift_lanes(mh, w_img))
            return jnp.dot(mv.astype(jnp.bfloat16), pool_refs[lvl][...],
                           preferred_element_type=jnp.float32)

        def upsample2(xv, tgt_lvl):
            return jnp.dot(xv.astype(jnp.bfloat16), upsel_refs[tgt_lvl][...],
                           preferred_element_type=jnp.float32)

        # ---- down path -----------------------------------------------------
        cur = x_ref[...]                                   # (Cpad, H*W) f32
        down = []
        for layer in range(layers):
            if layer > 0:
                cur = maxpool2(cur, layer - 1)
            for _ in range(rep):
                cur = conv3x3(cur, layer, "relu")
            down.append(cur)

        # ---- up path (torch.cat == sublane concat, unsplit weight) ----------
        up = None
        for layer in range(layers - 2, -1, -1):
            src = down[layer + 1] if layer == layers - 2 else up
            cat = jnp.concatenate([down[layer], upsample2(src, layer)], axis=0)
            cur = conv3x3(cat, layer, "relu")
            for _ in range(1, rep):
                cur = conv3x3(cur, layer, "relu")
            up = cur

        o_ref[...] = conv3x3(up, 0, "softmax").astype(o_ref.dtype)

    # ---- specs --------------------------------------------------------------
    flat_inputs = [x_flat]
    for w2d, b in wb:
        flat_inputs += [w2d, b]
    flat_inputs += list(masks) + list(pool_sels) + list(up_sels)

    in_specs = [pl.BlockSpec((None, c_pad, hw), lambda i: (i, 0, 0))]
    for a in flat_inputs[1:]:
        in_specs.append(pl.BlockSpec(a.shape, lambda i: (0, 0)))

    # ---- advisory cost estimate (conv MACs) ---------------------------------
    lvl_seq = []
    for layer in range(layers):
        lvl_seq += [layer] * rep
    for layer in range(layers - 2, -1, -1):
        lvl_seq += [layer] * rep
    lvl_seq.append(0)                                       # predict conv
    flops = 0
    for (w2d, _), lvl in zip(wb, lvl_seq):
        cout, k = w2d.shape
        flops += 2 * cout * k * ((H >> lvl) * (W >> lvl))
    flops *= n
    bytes_accessed = (x_flat.size * 4
                      + sum(w.size * 2 + b.size * 4 for w, b in wb)
                      + sum(m.size * 4 for m in masks)
                      + sum(s.size * 2 for s in pool_sels + up_sels)
                      + n * ncls * hw * 4)

    out_flat = pl.pallas_call(
        kernel,
        out_shape=jax.ShapeDtypeStruct((n, ncls, hw), jnp.float32),
        grid_spec=pltpu.PrefetchScalarGridSpec(
            num_scalar_prefetch=0,
            grid=(n,),
            in_specs=in_specs,
            out_specs=pl.BlockSpec((None, ncls, hw), lambda i: (i, 0, 0)),
        ),
        compiler_params=pltpu.CompilerParams(
            dimension_semantics=("parallel",)),
        cost_estimate=pl.CostEstimate(
            flops=int(flops), transcendentals=int(n * ncls * hw),
            bytes_accessed=int(bytes_accessed)),
    )(*flat_inputs)

    return out_flat.reshape(n, ncls, H, W)


# =============================================================================
# Pure-JAX reference (f32 lax.conv) for the correctness check only.
# =============================================================================
def _ref_conv3x3_nchw(x, w9, b):
    cin, cout = w9.shape[1], w9.shape[2]
    w_hwio = w9.reshape(3, 3, cin, cout)
    y = jax.lax.conv_general_dilated(
        x, w_hwio, window_strides=(1, 1), padding="SAME",
        dimension_numbers=("NCHW", "HWIO", "NCHW"))
    return y + b.reshape(1, cout, 1, 1)


def unet_forward_reference(x, params, cfg):
    layers = cfg["layers"]
    down = []
    h = x
    for layer in range(layers):
        if layer > 0:
            n_, c_, hh_, ww_ = h.shape
            h = jnp.max(h.reshape(n_, c_, hh_ // 2, 2, ww_ // 2, 2), axis=(3, 5))
        for w, b in params["down"][layer]:
            h = jnp.maximum(_ref_conv3x3_nchw(h, w, b), 0.0)
        down.append(h)
    up = None
    for layer in range(layers - 2, -1, -1):
        src = down[layer + 1] if layer == layers - 2 else up
        src = jnp.repeat(jnp.repeat(src, 2, axis=2), 2, axis=3)
        h = jnp.concatenate([down[layer], src], axis=1)
        for w, b in params["up"][layer]:
            h = jnp.maximum(_ref_conv3x3_nchw(h, w, b), 0.0)
        up = h
    wp, bp = params["predict"]
    return jax.nn.softmax(_ref_conv3x3_nchw(up, wp, bp), axis=1)


if __name__ == "__main__":
    config = {
        "layers": 3, "feature_root": 8, "channels": 4, "n_class": 2,
        "conv_repeat": 2, "use_bn": False, "use_gn": False,
        "track_running_stats": False, "bn_momentum": 0.1,
        "num_groups": 4, "loss": "BCE",
    }

    key = jax.random.PRNGKey(0)
    kx, kp = jax.random.split(key)
    x = jax.random.normal(kx, (2, config["channels"], 16, 16), jnp.float32)
    params = init_params(kp, config)

    out = jax.block_until_ready(unet_forward_pallas(x, params, config))
    assert out.shape == (2, config["n_class"], 16, 16), out.shape

    ref = jax.block_until_ready(unet_forward_reference(x, params, config))
    max_err = float(jnp.max(jnp.abs(out - ref)))
    # bf16 MXU operands -> parity with the f32 lax.conv reference is ~1e-2.
    assert max_err < 5e-2, f"max abs error {max_err}"

    print("KERNEL_OK")
</pallas_src>

<mosaic_0001>
module attributes {stable_mosaic.version = 11 : i64} {
  func.func @kernel(%arg0: i32, %arg1: memref<1x8x256xf32, #tpu.memory_space<vmem>>, %arg2: memref<8x72xbf16, #tpu.memory_space<vmem>>, %arg3: memref<8x1xf32, #tpu.memory_space<vmem>>, %arg4: memref<8x72xbf16, #tpu.memory_space<vmem>>, %arg5: memref<8x1xf32, #tpu.memory_space<vmem>>, %arg6: memref<16x72xbf16, #tpu.memory_space<vmem>>, %arg7: memref<16x1xf32, #tpu.memory_space<vmem>>, %arg8: memref<16x144xbf16, #tpu.memory_space<vmem>>, %arg9: memref<16x1xf32, #tpu.memory_space<vmem>>, %arg10: memref<32x144xbf16, #tpu.memory_space<vmem>>, %arg11: memref<32x1xf32, #tpu.memory_space<vmem>>, %arg12: memref<32x288xbf16, #tpu.memory_space<vmem>>, %arg13: memref<32x1xf32, #tpu.memory_space<vmem>>, %arg14: memref<16x432xbf16, #tpu.memory_space<vmem>>, %arg15: memref<16x1xf32, #tpu.memory_space<vmem>>, %arg16: memref<16x144xbf16, #tpu.memory_space<vmem>>, %arg17: memref<16x1xf32, #tpu.memory_space<vmem>>, %arg18: memref<8x216xbf16, #tpu.memory_space<vmem>>, %arg19: memref<8x1xf32, #tpu.memory_space<vmem>>, %arg20: memref<8x72xbf16, #tpu.memory_space<vmem>>, %arg21: memref<8x1xf32, #tpu.memory_space<vmem>>, %arg22: memref<2x72xbf16, #tpu.memory_space<vmem>>, %arg23: memref<2x1xf32, #tpu.memory_space<vmem>>, %arg24: memref<9x256xf32, #tpu.memory_space<vmem>>, %arg25: memref<9x64xf32, #tpu.memory_space<vmem>>, %arg26: memref<9x16xf32, #tpu.memory_space<vmem>>, %arg27: memref<256x64xbf16, #tpu.memory_space<vmem>>, %arg28: memref<64x16xbf16, #tpu.memory_space<vmem>>, %arg29: memref<64x256xbf16, #tpu.memory_space<vmem>>, %arg30: memref<16x64xbf16, #tpu.memory_space<vmem>>, %arg31: memref<1x2x256xf32, #tpu.memory_space<vmem>>) attributes {dimension_semantics = [#tpu.dimension_semantics<parallel>], iteration_bounds = array<i64: 2>, scalar_prefetch = 0 : i64, scratch_operands = 0 : i64, tpu.core_type = #tpu.core_type<tc>, window_params = [{transform_indices = @transform_0, window_bounds = array<i64: 1, 8, 256>}, {pipeline_mode = #tpu.pipeline_mode<synchronous>, transform_indices = @transform_1, window_bounds = array<i64: 8, 72>}, {pipeline_mode = #tpu.pipeline_mode<synchronous>, transform_indices = @transform_2, window_bounds = array<i64: 8, 1>}, {pipeline_mode = #tpu.pipeline_mode<synchronous>, transform_indices = @transform_3, window_bounds = array<i64: 8, 72>}, {pipeline_mode = #tpu.pipeline_mode<synchronous>, transform_indices = @transform_4, window_bounds = array<i64: 8, 1>}, {pipeline_mode = #tpu.pipeline_mode<synchronous>, transform_indices = @transform_5, window_bounds = array<i64: 16, 72>}, {pipeline_mode = #tpu.pipeline_mode<synchronous>, transform_indices = @transform_6, window_bounds = array<i64: 16, 1>}, {pipeline_mode = #tpu.pipeline_mode<synchronous>, transform_indices = @transform_7, window_bounds = array<i64: 16, 144>}, {pipeline_mode = #tpu.pipeline_mode<synchronous>, transform_indices = @transform_8, window_bounds = array<i64: 16, 1>}, {pipeline_mode = #tpu.pipeline_mode<synchronous>, transform_indices = @transform_9, window_bounds = array<i64: 32, 144>}, {pipeline_mode = #tpu.pipeline_mode<synchronous>, transform_indices = @transform_10, window_bounds = array<i64: 32, 1>}, {pipeline_mode = #tpu.pipeline_mode<synchronous>, transform_indices = @transform_11, window_bounds = array<i64: 32, 288>}, {pipeline_mode = #tpu.pipeline_mode<synchronous>, transform_indices = @transform_12, window_bounds = array<i64: 32, 1>}, {pipeline_mode = #tpu.pipeline_mode<synchronous>, transform_indices = @transform_13, window_bounds = array<i64: 16, 432>}, {pipeline_mode = #tpu.pipeline_mode<synchronous>, transform_indices = @transform_14, window_bounds = array<i64: 16, 1>}, {pipeline_mode = #tpu.pipeline_mode<synchronous>, transform_indices = @transform_15, window_bounds = array<i64: 16, 144>}, {pipeline_mode = #tpu.pipeline_mode<synchronous>, transform_indices = @transform_16, window_bounds = array<i64: 16, 1>}, {pipeline_mode = #tpu.pipeline_mode<synchronous>, transform_indices = @transform_17, window_bounds = array<i64: 8, 216>}, {pipeline_mode = #tpu.pipeline_mode<synchronous>, transform_indices = @transform_18, window_bounds = array<i64: 8, 1>}, {pipeline_mode = #tpu.pipeline_mode<synchronous>, transform_indices = @transform_19, window_bounds = array<i64: 8, 72>}, {pipeline_mode = #tpu.pipeline_mode<synchronous>, transform_indices = @transform_20, window_bounds = array<i64: 8, 1>}, {pipeline_mode = #tpu.pipeline_mode<synchronous>, transform_indices = @transform_21, window_bounds = array<i64: 2, 72>}, {pipeline_mode = #tpu.pipeline_mode<synchronous>, transform_indices = @transform_22, window_bounds = array<i64: 2, 1>}, {pipeline_mode = #tpu.pipeline_mode<synchronous>, transform_indices = @transform_23, window_bounds = array<i64: 9, 256>}, {pipeline_mode = #tpu.pipeline_mode<synchronous>, transform_indices = @transform_24, window_bounds = array<i64: 9, 64>}, {pipeline_mode = #tpu.pipeline_mode<synchronous>, transform_indices = @transform_25, window_bounds = array<i64: 9, 16>}, {pipeline_mode = #tpu.pipeline_mode<synchronous>, transform_indices = @transform_26, window_bounds = array<i64: 256, 64>}, {pipeline_mode = #tpu.pipeline_mode<synchronous>, transform_indices = @transform_27, window_bounds = array<i64: 64, 16>}, {pipeline_mode = #tpu.pipeline_mode<synchronous>, transform_indices = @transform_28, window_bounds = array<i64: 64, 256>}, {pipeline_mode = #tpu.pipeline_mode<synchronous>, transform_indices = @transform_29, window_bounds = array<i64: 16, 64>}, {transform_indices = @transform_30, window_bounds = array<i64: 1, 2, 256>}]} {
    %c0 = arith.constant 0 : index
    %c0_0 = arith.constant 0 : index
    %c0_1 = arith.constant 0 : index
    %0 = vector.load %arg1[%c0, %c0_0, %c0_1] : memref<1x8x256xf32, #tpu.memory_space<vmem>>, vector<1x8x256xf32>
    %1 = vector.shape_cast %0 : vector<1x8x256xf32> to vector<8x256xf32>
    %c17_i32 = arith.constant 17 : i32
    %2 = tpu.dynamic_rotate %1 by %c17_i32 dim 1 : vector<8x256xf32>, i32 -> vector<8x256xf32>
    %c0_2 = arith.constant 0 : index
    %c0_3 = arith.constant 0 : index
    %3 = vector.load %arg24[%c0_2, %c0_3] : memref<9x256xf32, #tpu.memory_space<vmem>>, vector<1x256xf32>
    %4 = vector.broadcast %3 : vector<1x256xf32> to vector<8x256xf32>
    %5 = arith.mulf %2, %4 : vector<8x256xf32>
    %c16_i32 = arith.constant 16 : i32
    %6 = tpu.dynamic_rotate %1 by %c16_i32 dim 1 : vector<8x256xf32>, i32 -> vector<8x256xf32>
    %c1 = arith.constant 1 : index
    %c0_4 = arith.constant 0 : index
    %7 = vector.load %arg24[%c1, %c0_4] : memref<9x256xf32, #tpu.memory_space<vmem>>, vector<1x256xf32>
    %8 = vector.broadcast %7 : vector<1x256xf32> to vector<8x256xf32>
    %9 = arith.mulf %6, %8 : vector<8x256xf32>
    %c15_i32 = arith.constant 15 : i32
    %10 = tpu.dynamic_rotate %1 by %c15_i32 dim 1 : vector<8x256xf32>, i32 -> vector<8x256xf32>
    %c2 = arith.constant 2 : index
    %c0_5 = arith.constant 0 : index
    %11 = vector.load %arg24[%c2, %c0_5] : memref<9x256xf32, #tpu.memory_space<vmem>>, vector<1x256xf32>
    %12 = vector.broadcast %11 : vector<1x256xf32> to vector<8x256xf32>
    %13 = arith.mulf %10, %12 : vector<8x256xf32>
    %c1_i32 = arith.constant 1 : i32
    %14 = tpu.dynamic_rotate %1 by %c1_i32 dim 1 : vector<8x256xf32>, i32 -> vector<8x256xf32>
    %c3 = arith.constant 3 : index
    %c0_6 = arith.constant 0 : index
    %15 = vector.load %arg24[%c3, %c0_6] : memref<9x256xf32, #tpu.memory_space<vmem>>, vector<1x256xf32>
    %16 = vector.broadcast %15 : vector<1x256xf32> to vector<8x256xf32>
    %17 = arith.mulf %14, %16 : vector<8x256xf32>
    %c4 = arith.constant 4 : index
    %c0_7 = arith.constant 0 : index
    %18 = vector.load %arg24[%c4, %c0_7] : memref<9x256xf32, #tpu.memory_space<vmem>>, vector<1x256xf32>
    %19 = vector.broadcast %18 : vector<1x256xf32> to vector<8x256xf32>
    %20 = arith.mulf %1, %19 : vector<8x256xf32>
    %c255_i32 = arith.constant 255 : i32
    %21 = tpu.dynamic_rotate %1 by %c255_i32 dim 1 : vector<8x256xf32>, i32 -> vector<8x256xf32>
    %c5 = arith.constant 5 : index
    %c0_8 = arith.constant 0 : index
    %22 = vector.load %arg24[%c5, %c0_8] : memref<9x256xf32, #tpu.memory_space<vmem>>, vector<1x256xf32>
    %23 = vector.broadcast %22 : vector<1x256xf32> to vector<8x256xf32>
    %24 = arith.mulf %21, %23 : vector<8x256xf32>
    %c241_i32 = arith.constant 241 : i32
    %25 = tpu.dynamic_rotate %1 by %c241_i32 dim 1 : vector<8x256xf32>, i32 -> vector<8x256xf32>
    %c6 = arith.constant 6 : index
    %c0_9 = arith.constant 0 : index
    %26 = vector.load %arg24[%c6, %c0_9] : memref<9x256xf32, #tpu.memory_space<vmem>>, vector<1x256xf32>
    %27 = vector.broadcast %26 : vector<1x256xf32> to vector<8x256xf32>
    %28 = arith.mulf %25, %27 : vector<8x256xf32>
    %c240_i32 = arith.constant 240 : i32
    %29 = tpu.dynamic_rotate %1 by %c240_i32 dim 1 : vector<8x256xf32>, i32 -> vector<8x256xf32>
    %c7 = arith.constant 7 : index
    %c0_10 = arith.constant 0 : index
    %30 = vector.load %arg24[%c7, %c0_10] : memref<9x256xf32, #tpu.memory_space<vmem>>, vector<1x256xf32>
    %31 = vector.broadcast %30 : vector<1x256xf32> to vector<8x256xf32>
    %32 = arith.mulf %29, %31 : vector<8x256xf32>
    %c239_i32 = arith.constant 239 : i32
    %33 = tpu.dynamic_rotate %1 by %c239_i32 dim 1 : vector<8x256xf32>, i32 -> vector<8x256xf32>
    %c8 = arith.constant 8 : index
    %c0_11 = arith.constant 0 : index
    %34 = vector.load %arg24[%c8, %c0_11] : memref<9x256xf32, #tpu.memory_space<vmem>>, vector<1x256xf32>
    %35 = vector.broadcast %34 : vector<1x256xf32> to vector<8x256xf32>
    %36 = arith.mulf %33, %35 : vector<8x256xf32>
    %37 = tpu.concatenate %5, %9, %13, %17, %20, %24, %28, %32, %36 in 0 : vector<8x256xf32>, vector<8x256xf32>, vector<8x256xf32>, vector<8x256xf32>, vector<8x256xf32>, vector<8x256xf32>, vector<8x256xf32>, vector<8x256xf32>, vector<8x256xf32> -> vector<72x256xf32>
    %38 = arith.truncf %37 : vector<72x256xf32> to vector<72x256xbf16>
    %c0_12 = arith.constant 0 : index
    %c0_13 = arith.constant 0 : index
    %39 = vector.load %arg2[%c0_12, %c0_13] : memref<8x72xbf16, #tpu.memory_space<vmem>>, vector<8x72xbf16>
    %cst = arith.constant dense<0.000000e+00> : vector<8x256xf32>
    %40 = tpu.matmul %39, %38, %cst {dimension_numbers = #tpu.dot_dimension_numbers<[1], [0], [0], [1], [0, 0, 1, 1], [], []>} : vector<8x72xbf16>, vector<72x256xbf16>, vector<8x256xf32> -> vector<8x256xf32>
    %c0_14 = arith.constant 0 : index
    %c0_15 = arith.constant 0 : index
    %41 = vector.load %arg3[%c0_14, %c0_15] : memref<8x1xf32, #tpu.memory_space<vmem>>, vector<8x1xf32>
    %42 = vector.broadcast %41 : vector<8x1xf32> to vector<8x256xf32>
    %43 = arith.addf %40, %42 : vector<8x256xf32>
    %cst_16 = arith.constant 0.000000e+00 : f32
    %44 = vector.broadcast %cst_16 : f32 to vector<8x256xf32>
    %45 = arith.maximumf %43, %44 : vector<8x256xf32>
    %c17_i32_17 = arith.constant 17 : i32
    %46 = tpu.dynamic_rotate %45 by %c17_i32_17 dim 1 : vector<8x256xf32>, i32 -> vector<8x256xf32>
    %c0_18 = arith.constant 0 : index
    %c0_19 = arith.constant 0 : index
    %47 = vector.load %arg24[%c0_18, %c0_19] : memref<9x256xf32, #tpu.memory_space<vmem>>, vector<1x256xf32>
    %48 = vector.broadcast %47 : vector<1x256xf32> to vector<8x256xf32>
    %49 = arith.mulf %46, %48 : vector<8x256xf32>
    %c16_i32_20 = arith.constant 16 : i32
    %50 = tpu.dynamic_rotate %45 by %c16_i32_20 dim 1 : vector<8x256xf32>, i32 -> vector<8x256xf32>
    %c1_21 = arith.constant 1 : index
    %c0_22 = arith.constant 0 : index
    %51 = vector.load %arg24[%c1_21, %c0_22] : memref<9x256xf32, #tpu.memory_space<vmem>>, vector<1x256xf32>
    %52 = vector.broadcast %51 : vector<1x256xf32> to vector<8x256xf32>
    %53 = arith.mulf %50, %52 : vector<8x256xf32>
    %c15_i32_23 = arith.constant 15 : i32
    %54 = tpu.dynamic_rotate %45 by %c15_i32_23 dim 1 : vector<8x256xf32>, i32 -> vector<8x256xf32>
    %c2_24 = arith.constant 2 : index
    %c0_25 = arith.constant 0 : index
    %55 = vector.load %arg24[%c2_24, %c0_25] : memref<9x256xf32, #tpu.memory_space<vmem>>, vector<1x256xf32>
    %56 = vector.broadcast %55 : vector<1x256xf32> to vector<8x256xf32>
    %57 = arith.mulf %54, %56 : vector<8x256xf32>
    %c1_i32_26 = arith.constant 1 : i32
    %58 = tpu.dynamic_rotate %45 by %c1_i32_26 dim 1 : vector<8x256xf32>, i32 -> vector<8x256xf32>
    %c3_27 = arith.constant 3 : index
    %c0_28 = arith.constant 0 : index
    %59 = vector.load %arg24[%c3_27, %c0_28] : memref<9x256xf32, #tpu.memory_space<vmem>>, vector<1x256xf32>
    %60 = vector.broadcast %59 : vector<1x256xf32> to vector<8x256xf32>
    %61 = arith.mulf %58, %60 : vector<8x256xf32>
    %c4_29 = arith.constant 4 : index
    %c0_30 = arith.constant 0 : index
    %62 = vector.load %arg24[%c4_29, %c0_30] : memref<9x256xf32, #tpu.memory_space<vmem>>, vector<1x256xf32>
    %63 = vector.broadcast %62 : vector<1x256xf32> to vector<8x256xf32>
    %64 = arith.mulf %45, %63 : vector<8x256xf32>
    %c255_i32_31 = arith.constant 255 : i32
    %65 = tpu.dynamic_rotate %45 by %c255_i32_31 dim 1 : vector<8x256xf32>, i32 -> vector<8x256xf32>
    %c5_32 = arith.constant 5 : index
    %c0_33 = arith.constant 0 : index
    %66 = vector.load %arg24[%c5_32, %c0_33] : memref<9x256xf32, #tpu.memory_space<vmem>>, vector<1x256xf32>
    %67 = vector.broadcast %66 : vector<1x256xf32> to vector<8x256xf32>
    %68 = arith.mulf %65, %67 : vector<8x256xf32>
    %c241_i32_34 = arith.constant 241 : i32
    %69 = tpu.dynamic_rotate %45 by %c241_i32_34 dim 1 : vector<8x256xf32>, i32 -> vector<8x256xf32>
    %c6_35 = arith.constant 6 : index
    %c0_36 = arith.constant 0 : index
    %70 = vector.load %arg24[%c6_35, %c0_36] : memref<9x256xf32, #tpu.memory_space<vmem>>, vector<1x256xf32>
    %71 = vector.broadcast %70 : vector<1x256xf32> to vector<8x256xf32>
    %72 = arith.mulf %69, %71 : vector<8x256xf32>
    %c240_i32_37 = arith.constant 240 : i32
    %73 = tpu.dynamic_rotate %45 by %c240_i32_37 dim 1 : vector<8x256xf32>, i32 -> vector<8x256xf32>
    %c7_38 = arith.constant 7 : index
    %c0_39 = arith.constant 0 : index
    %74 = vector.load %arg24[%c7_38, %c0_39] : memref<9x256xf32, #tpu.memory_space<vmem>>, vector<1x256xf32>
    %75 = vector.broadcast %74 : vector<1x256xf32> to vector<8x256xf32>
    %76 = arith.mulf %73, %75 : vector<8x256xf32>
    %c239_i32_40 = arith.constant 239 : i32
    %77 = tpu.dynamic_rotate %45 by %c239_i32_40 dim 1 : vector<8x256xf32>, i32 -> vector<8x256xf32>
    %c8_41 = arith.constant 8 : index
    %c0_42 = arith.constant 0 : index
    %78 = vector.load %arg24[%c8_41, %c0_42] : memref<9x256xf32, #tpu.memory_space<vmem>>, vector<1x256xf32>
    %79 = vector.broadcast %78 : vector<1x256xf32> to vector<8x256xf32>
    %80 = arith.mulf %77, %79 : vector<8x256xf32>
    %81 = tpu.concatenate %49, %53, %57, %61, %64, %68, %72, %76, %80 in 0 : vector<8x256xf32>, vector<8x256xf32>, vector<8x256xf32>, vector<8x256xf32>, vector<8x256xf32>, vector<8x256xf32>, vector<8x256xf32>, vector<8x256xf32>, vector<8x256xf32> -> vector<72x256xf32>
    %82 = arith.truncf %81 : vector<72x256xf32> to vector<72x256xbf16>
    %c0_43 = arith.constant 0 : index
    %c0_44 = arith.constant 0 : index
    %83 = vector.load %arg4[%c0_43, %c0_44] : memref<8x72xbf16, #tpu.memory_space<vmem>>, vector<8x72xbf16>
    %cst_45 = arith.constant dense<0.000000e+00> : vector<8x256xf32>
    %84 = tpu.matmul %83, %82, %cst_45 {dimension_numbers = #tpu.dot_dimension_numbers<[1], [0], [0], [1], [0, 0, 1, 1], [], []>} : vector<8x72xbf16>, vector<72x256xbf16>, vector<8x256xf32> -> vector<8x256xf32>
    %c0_46 = arith.constant 0 : index
    %c0_47 = arith.constant 0 : index
    %85 = vector.load %arg5[%c0_46, %c0_47] : memref<8x1xf32, #tpu.memory_space<vmem>>, vector<8x1xf32>
    %86 = vector.broadcast %85 : vector<8x1xf32> to vector<8x256xf32>
    %87 = arith.addf %84, %86 : vector<8x256xf32>
    %cst_48 = arith.constant 0.000000e+00 : f32
    %88 = vector.broadcast %cst_48 : f32 to vector<8x256xf32>
    %89 = arith.maximumf %87, %88 : vector<8x256xf32>
    %c255_i32_49 = arith.constant 255 : i32
    %90 = tpu.dynamic_rotate %89 by %c255_i32_49 dim 1 : vector<8x256xf32>, i32 -> vector<8x256xf32>
    %91 = arith.maximumf %89, %90 : vector<8x256xf32>
    %c240_i32_50 = arith.constant 240 : i32
    %92 = tpu.dynamic_rotate %91 by %c240_i32_50 dim 1 : vector<8x256xf32>, i32 -> vector<8x256xf32>
    %93 = arith.maximumf %91, %92 : vector<8x256xf32>
    %94 = arith.truncf %93 : vector<8x256xf32> to vector<8x256xbf16>
    %c0_51 = arith.constant 0 : index
    %c0_52 = arith.constant 0 : index
    %95 = vector.load %arg27[%c0_51, %c0_52] : memref<256x64xbf16, #tpu.memory_space<vmem>>, vector<256x64xbf16>
    %cst_53 = arith.constant dense<0.000000e+00> : vector<8x64xf32>
    %96 = tpu.matmul %94, %95, %cst_53 {dimension_numbers = #tpu.dot_dimension_numbers<[1], [0], [0], [1], [0, 0, 1, 1], [], []>} : vector<8x256xbf16>, vector<256x64xbf16>, vector<8x64xf32> -> vector<8x64xf32>
    %cst_54 = arith.constant 0.000000e+00 : f32
    %97 = vector.broadcast %cst_54 : f32 to vector<8x9xf32>
    %98 = vector.extract_strided_slice %96 {offsets = [0, 0], sizes = [8, 55], strides = [1, 1]} : vector<8x64xf32> to vector<8x55xf32>
    %99 = tpu.concatenate %97, %98 in 1 : vector<8x9xf32>, vector<8x55xf32> -> vector<8x64xf32>
    %c0_55 = arith.constant 0 : index
    %c0_56 = arith.constant 0 : index
    %100 = vector.load %arg25[%c0_55, %c0_56] : memref<9x64xf32, #tpu.memory_space<vmem>>, vector<1x64xf32>
    %101 = vector.broadcast %100 : vector<1x64xf32> to vector<8x64xf32>
    %102 = arith.mulf %99, %101 : vector<8x64xf32>
    %cst_57 = arith.constant 0.000000e+00 : f32
    %103 = vector.broadcast %cst_57 : f32 to vector<8x8xf32>
    %104 = vector.extract_strided_slice %96 {offsets = [0, 0], sizes = [8, 56], strides = [1, 1]} : vector<8x64xf32> to vector<8x56xf32>
    %105 = tpu.concatenate %103, %104 in 1 : vector<8x8xf32>, vector<8x56xf32> -> vector<8x64xf32>
    %c1_58 = arith.constant 1 : index
    %c0_59 = arith.constant 0 : index
    %106 = vector.load %arg25[%c1_58, %c0_59] : memref<9x64xf32, #tpu.memory_space<vmem>>, vector<1x64xf32>
    %107 = vector.broadcast %106 : vector<1x64xf32> to vector<8x64xf32>
    %108 = arith.mulf %105, %107 : vector<8x64xf32>
    %cst_60 = arith.constant 0.000000e+00 : f32
    %109 = vector.broadcast %cst_60 : f32 to vector<8x7xf32>
    %110 = vector.extract_strided_slice %96 {offsets = [0, 0], sizes = [8, 57], strides = [1, 1]} : vector<8x64xf32> to vector<8x57xf32>
    %111 = tpu.concatenate %109, %110 in 1 : vector<8x7xf32>, vector<8x57xf32> -> vector<8x64xf32>
    %c2_61 = arith.constant 2 : index
    %c0_62 = arith.constant 0 : index
    %112 = vector.load %arg25[%c2_61, %c0_62] : memref<9x64xf32, #tpu.memory_space<vmem>>, vector<1x64xf32>
    %113 = vector.broadcast %112 : vector<1x64xf32> to vector<8x64xf32>
    %114 = arith.mulf %111, %113 : vector<8x64xf32>
    %cst_63 = arith.constant 0.000000e+00 : f32
    %115 = vector.broadcast %cst_63 : f32 to vector<8x1xf32>
    %116 = vector.extract_strided_slice %96 {offsets = [0, 0], sizes = [8, 63], strides = [1, 1]} : vector<8x64xf32> to vector<8x63xf32>
    %117 = tpu.concatenate %115, %116 in 1 : vector<8x1xf32>, vector<8x63xf32> -> vector<8x64xf32>
    %c3_64 = arith.constant 3 : index
    %c0_65 = arith.constant 0 : index
    %118 = vector.load %arg25[%c3_64, %c0_65] : memref<9x64xf32, #tpu.memory_space<vmem>>, vector<1x64xf32>
    %119 = vector.broadcast %118 : vector<1x64xf32> to vector<8x64xf32>
    %120 = arith.mulf %117, %119 : vector<8x64xf32>
    %c4_66 = arith.constant 4 : index
    %c0_67 = arith.constant 0 : index
    %121 = vector.load %arg25[%c4_66, %c0_67] : memref<9x64xf32, #tpu.memory_space<vmem>>, vector<1x64xf32>
    %122 = vector.broadcast %121 : vector<1x64xf32> to vector<8x64xf32>
    %123 = arith.mulf %96, %122 : vector<8x64xf32>
    %cst_68 = arith.constant 0.000000e+00 : f32
    %124 = vector.broadcast %cst_68 : f32 to vector<8x1xf32>
    %125 = vector.extract_strided_slice %96 {offsets = [0, 1], sizes = [8, 63], strides = [1, 1]} : vector<8x64xf32> to vector<8x63xf32>
    %126 = tpu.concatenate %125, %124 in 1 : vector<8x63xf32>, vector<8x1xf32> -> vector<8x64xf32>
    %c5_69 = arith.constant 5 : index
    %c0_70 = arith.constant 0 : index
    %127 = vector.load %arg25[%c5_69, %c0_70] : memref<9x64xf32, #tpu.memory_space<vmem>>, vector<1x64xf32>
    %128 = vector.broadcast %127 : vector<1x64xf32> to vector<8x64xf32>
    %129 = arith.mulf %126, %128 : vector<8x64xf32>
    %cst_71 = arith.constant 0.000000e+00 : f32
    %130 = vector.broadcast %cst_71 : f32 to vector<8x7xf32>
    %131 = vector.extract_strided_slice %96 {offsets = [0, 7], sizes = [8, 57], strides = [1, 1]} : vector<8x64xf32> to vector<8x57xf32>
    %132 = tpu.concatenate %131, %130 in 1 : vector<8x57xf32>, vector<8x7xf32> -> vector<8x64xf32>
    %c6_72 = arith.constant 6 : index
    %c0_73 = arith.constant 0 : index
    %133 = vector.load %arg25[%c6_72, %c0_73] : memref<9x64xf32, #tpu.memory_space<vmem>>, vector<1x64xf32>
    %134 = vector.broadcast %133 : vector<1x64xf32> to vector<8x64xf32>
    %135 = arith.mulf %132, %134 : vector<8x64xf32>
    %cst_74 = arith.constant 0.000000e+00 : f32
    %136 = vector.broadcast %cst_74 : f32 to vector<8x8xf32>
    %137 = vector.extract_strided_slice %96 {offsets = [0, 8], sizes = [8, 56], strides = [1, 1]} : vector<8x64xf32> to vector<8x56xf32>
    %138 = tpu.concatenate %137, %136 in 1 : vector<8x56xf32>, vector<8x8xf32> -> vector<8x64xf32>
    %c7_75 = arith.constant 7 : index
    %c0_76 = arith.constant 0 : index
    %139 = vector.load %arg25[%c7_75, %c0_76] : memref<9x64xf32, #tpu.memory_space<vmem>>, vector<1x64xf32>
    %140 = vector.broadcast %139 : vector<1x64xf32> to vector<8x64xf32>
    %141 = arith.mulf %138, %140 : vector<8x64xf32>
    %cst_77 = arith.constant 0.000000e+00 : f32
    %142 = vector.broadcast %cst_77 : f32 to vector<8x9xf32>
    %143 = vector.extract_strided_slice %96 {offsets = [0, 9], sizes = [8, 55], strides = [1, 1]} : vector<8x64xf32> to vector<8x55xf32>
    %144 = tpu.concatenate %143, %142 in 1 : vector<8x55xf32>, vector<8x9xf32> -> vector<8x64xf32>
    %c8_78 = arith.constant 8 : index
    %c0_79 = arith.constant 0 : index
    %145 = vector.load %arg25[%c8_78, %c0_79] : memref<9x64xf32, #tpu.memory_space<vmem>>, vector<1x64xf32>
    %146 = vector.broadcast %145 : vector<1x64xf32> to vector<8x64xf32>
    %147 = arith.mulf %144, %146 : vector<8x64xf32>
    %148 = tpu.concatenate %102, %108, %114, %120, %123, %129, %135, %141, %147 in 0 : vector<8x64xf32>, vector<8x64xf32>, vector<8x64xf32>, vector<8x64xf32>, vector<8x64xf32>, vector<8x64xf32>, vector<8x64xf32>, vector<8x64xf32>, vector<8x64xf32> -> vector<72x64xf32>
    %149 = arith.truncf %148 : vector<72x64xf32> to vector<72x64xbf16>
    %c0_80 = arith.constant 0 : index
    %c0_81 = arith.constant 0 : index
    %150 = vector.load %arg6[%c0_80, %c0_81] : memref<16x72xbf16, #tpu.memory_space<vmem>>, vector<16x72xbf16>
    %cst_82 = arith.constant dense<0.000000e+00> : vector<16x64xf32>
    %151 = tpu.matmul %150, %149, %cst_82 {dimension_numbers = #tpu.dot_dimension_numbers<[1], [0], [0], [1], [0, 0, 1, 1], [], []>} : vector<16x72xbf16>, vector<72x64xbf16>, vector<16x64xf32> -> vector<16x64xf32>
    %c0_83 = arith.constant 0 : index
    %c0_84 = arith.constant 0 : index
    %152 = vector.load %arg7[%c0_83, %c0_84] : memref<16x1xf32, #tpu.memory_space<vmem>>, vector<16x1xf32>
    %153 = vector.broadcast %152 : vector<16x1xf32> to vector<16x64xf32>
    %154 = arith.addf %151, %153 : vector<16x64xf32>
    %cst_85 = arith.constant 0.000000e+00 : f32
    %155 = vector.broadcast %cst_85 : f32 to vector<16x64xf32>
    %156 = arith.maximumf %154, %155 : vector<16x64xf32>
    %cst_86 = arith.constant 0.000000e+00 : f32
    %157 = vector.broadcast %cst_86 : f32 to vector<16x9xf32>
    %158 = vector.extract_strided_slice %156 {offsets = [0, 0], sizes = [16, 55], strides = [1, 1]} : vector<16x64xf32> to vector<16x55xf32>
    %159 = tpu.concatenate %157, %158 in 1 : vector<16x9xf32>, vector<16x55xf32> -> vector<16x64xf32>
    %c0_87 = arith.constant 0 : index
    %c0_88 = arith.constant 0 : index
    %160 = vector.load %arg25[%c0_87, %c0_88] : memref<9x64xf32, #tpu.memory_space<vmem>>, vector<1x64xf32>
    %161 = vector.broadcast %160 : vector<1x64xf32> to vector<16x64xf32>
    %162 = arith.mulf %159, %161 : vector<16x64xf32>
    %cst_89 = arith.constant 0.000000e+00 : f32
    %163 = vector.broadcast %cst_89 : f32 to vector<16x8xf32>
    %164 = vector.extract_strided_slice %156 {offsets = [0, 0], sizes = [16, 56], strides = [1, 1]} : vector<16x64xf32> to vector<16x56xf32>
    %165 = tpu.concatenate %163, %164 in 1 : vector<16x8xf32>, vector<16x56xf32> -> vector<16x64xf32>
    %c1_90 = arith.constant 1 : index
    %c0_91 = arith.constant 0 : index
    %166 = vector.load %arg25[%c1_90, %c0_91] : memref<9x64xf32, #tpu.memory_space<vmem>>, vector<1x64xf32>
    %167 = vector.broadcast %166 : vector<1x64xf32> to vector<16x64xf32>
    %168 = arith.mulf %165, %167 : vector<16x64xf32>
    %cst_92 = arith.constant 0.000000e+00 : f32
    %169 = vector.broadcast %cst_92 : f32 to vector<16x7xf32>
    %170 = vector.extract_strided_slice %156 {offsets = [0, 0], sizes = [16, 57], strides = [1, 1]} : vector<16x64xf32> to vector<16x57xf32>
    %171 = tpu.concatenate %169, %170 in 1 : vector<16x7xf32>, vector<16x57xf32> -> vector<16x64xf32>
    %c2_93 = arith.constant 2 : index
    %c0_94 = arith.constant 0 : index
    %172 = vector.load %arg25[%c2_93, %c0_94] : memref<9x64xf32, #tpu.memory_space<vmem>>, vector<1x64xf32>
    %173 = vector.broadcast %172 : vector<1x64xf32> to vector<16x64xf32>
    %174 = arith.mulf %171, %173 : vector<16x64xf32>
    %cst_95 = arith.constant 0.000000e+00 : f32
    %175 = vector.broadcast %cst_95 : f32 to vector<16x1xf32>
    %176 = vector.extract_strided_slice %156 {offsets = [0, 0], sizes = [16, 63], strides = [1, 1]} : vector<16x64xf32> to vector<16x63xf32>
    %177 = tpu.concatenate %175, %176 in 1 : vector<16x1xf32>, vector<16x63xf32> -> vector<16x64xf32>
    %c3_96 = arith.constant 3 : index
    %c0_97 = arith.constant 0 : index
    %178 = vector.load %arg25[%c3_96, %c0_97] : memref<9x64xf32, #tpu.memory_space<vmem>>, vector<1x64xf32>
    %179 = vector.broadcast %178 : vector<1x64xf32> to vector<16x64xf32>
    %180 = arith.mulf %177, %179 : vector<16x64xf32>
    %c4_98 = arith.constant 4 : index
    %c0_99 = arith.constant 0 : index
    %181 = vector.load %arg25[%c4_98, %c0_99] : memref<9x64xf32, #tpu.memory_space<vmem>>, vector<1x64xf32>
    %182 = vector.broadcast %181 : vector<1x64xf32> to vector<16x64xf32>
    %183 = arith.mulf %156, %182 : vector<16x64xf32>
    %cst_100 = arith.constant 0.000000e+00 : f32
    %184 = vector.broadcast %cst_100 : f32 to vector<16x1xf32>
    %185 = vector.extract_strided_slice %156 {offsets = [0, 1], sizes = [16, 63], strides = [1, 1]} : vector<16x64xf32> to vector<16x63xf32>
    %186 = tpu.concatenate %185, %184 in 1 : vector<16x63xf32>, vector<16x1xf32> -> vector<16x64xf32>
    %c5_101 = arith.constant 5 : index
    %c0_102 = arith.constant 0 : index
    %187 = vector.load %arg25[%c5_101, %c0_102] : memref<9x64xf32, #tpu.memory_space<vmem>>, vector<1x64xf32>
    %188 = vector.broadcast %187 : vector<1x64xf32> to vector<16x64xf32>
    %189 = arith.mulf %186, %188 : vector<16x64xf32>
    %cst_103 = arith.constant 0.000000e+00 : f32
    %190 = vector.broadcast %cst_103 : f32 to vector<16x7xf32>
    %191 = vector.extract_strided_slice %156 {offsets = [0, 7], sizes = [16, 57], strides = [1, 1]} : vector<16x64xf32> to vector<16x57xf32>
    %192 = tpu.concatenate %191, %190 in 1 : vector<16x57xf32>, vector<16x7xf32> -> vector<16x64xf32>
    %c6_104 = arith.constant 6 : index
    %c0_105 = arith.constant 0 : index
    %193 = vector.load %arg25[%c6_104, %c0_105] : memref<9x64xf32, #tpu.memory_space<vmem>>, vector<1x64xf32>
    %194 = vector.broadcast %193 : vector<1x64xf32> to vector<16x64xf32>
    %195 = arith.mulf %192, %194 : vector<16x64xf32>
    %cst_106 = arith.constant 0.000000e+00 : f32
    %196 = vector.broadcast %cst_106 : f32 to vector<16x8xf32>
    %197 = vector.extract_strided_slice %156 {offsets = [0, 8], sizes = [16, 56], strides = [1, 1]} : vector<16x64xf32> to vector<16x56xf32>
    %198 = tpu.concatenate %197, %196 in 1 : vector<16x56xf32>, vector<16x8xf32> -> vector<16x64xf32>
    %c7_107 = arith.constant 7 : index
    %c0_108 = arith.constant 0 : index
    %199 = vector.load %arg25[%c7_107, %c0_108] : memref<9x64xf32, #tpu.memory_space<vmem>>, vector<1x64xf32>
    %200 = vector.broadcast %199 : vector<1x64xf32> to vector<16x64xf32>
    %201 = arith.mulf %198, %200 : vector<16x64xf32>
    %cst_109 = arith.constant 0.000000e+00 : f32
    %202 = vector.broadcast %cst_109 : f32 to vector<16x9xf32>
    %203 = vector.extract_strided_slice %156 {offsets = [0, 9], sizes = [16, 55], strides = [1, 1]} : vector<16x64xf32> to vector<16x55xf32>
    %204 = tpu.concatenate %203, %202 in 1 : vector<16x55xf32>, vector<16x9xf32> -> vector<16x64xf32>
    %c8_110 = arith.constant 8 : index
    %c0_111 = arith.constant 0 : index
    %205 = vector.load %arg25[%c8_110, %c0_111] : memref<9x64xf32, #tpu.memory_space<vmem>>, vector<1x64xf32>
    %206 = vector.broadcast %205 : vector<1x64xf32> to vector<16x64xf32>
    %207 = arith.mulf %204, %206 : vector<16x64xf32>
    %208 = tpu.concatenate %162, %168, %174, %180, %183, %189, %195, %201, %207 in 0 : vector<16x64xf32>, vector<16x64xf32>, vector<16x64xf32>, vector<16x64xf32>, vector<16x64xf32>, vector<16x64xf32>, vector<16x64xf32>, vector<16x64xf32>, vector<16x64xf32> -> vector<144x64xf32>
    %209 = arith.truncf %208 : vector<144x64xf32> to vector<144x64xbf16>
    %c0_112 = arith.constant 0 : index
    %c0_113 = arith.constant 0 : index
    %210 = vector.load %arg8[%c0_112, %c0_113] : memref<16x144xbf16, #tpu.memory_space<vmem>>, vector<16x144xbf16>
    %cst_114 = arith.constant dense<0.000000e+00> : vector<16x64xf32>
    %211 = tpu.matmul %210, %209, %cst_114 {dimension_numbers = #tpu.dot_dimension_numbers<[1], [0], [0], [1], [0, 0, 1, 1], [], []>} : vector<16x144xbf16>, vector<144x64xbf16>, vector<16x64xf32> -> vector<16x64xf32>
    %c0_115 = arith.constant 0 : index
    %c0_116 = arith.constant 0 : index
    %212 = vector.load %arg9[%c0_115, %c0_116] : memref<16x1xf32, #tpu.memory_space<vmem>>, vector<16x1xf32>
    %213 = vector.broadcast %212 : vector<16x1xf32> to vector<16x64xf32>
    %214 = arith.addf %211, %213 : vector<16x64xf32>
    %cst_117 = arith.constant 0.000000e+00 : f32
    %215 = vector.broadcast %cst_117 : f32 to vector<16x64xf32>
    %216 = arith.maximumf %214, %215 : vector<16x64xf32>
    %cst_118 = arith.constant 0.000000e+00 : f32
    %217 = vector.broadcast %cst_118 : f32 to vector<16x1xf32>
    %218 = vector.extract_strided_slice %216 {offsets = [0, 1], sizes = [16, 63], strides = [1, 1]} : vector<16x64xf32> to vector<16x63xf32>
    %219 = tpu.concatenate %218, %217 in 1 : vector<16x63xf32>, vector<16x1xf32> -> vector<16x64xf32>
    %220 = arith.maximumf %216, %219 : vector<16x64xf32>
    %cst_119 = arith.constant 0.000000e+00 : f32
    %221 = vector.broadcast %cst_119 : f32 to vector<16x8xf32>
    %222 = vector.extract_strided_slice %220 {offsets = [0, 8], sizes = [16, 56], strides = [1, 1]} : vector<16x64xf32> to vector<16x56xf32>
    %223 = tpu.concatenate %222, %221 in 1 : vector<16x56xf32>, vector<16x8xf32> -> vector<16x64xf32>
    %224 = arith.maximumf %220, %223 : vector<16x64xf32>
    %225 = arith.truncf %224 : vector<16x64xf32> to vector<16x64xbf16>
    %c0_120 = arith.constant 0 : index
    %c0_121 = arith.constant 0 : index
    %226 = vector.load %arg28[%c0_120, %c0_121] : memref<64x16xbf16, #tpu.memory_space<vmem>>, vector<64x16xbf16>
    %cst_122 = arith.constant dense<0.000000e+00> : vector<16x16xf32>
    %227 = tpu.matmul %225, %226, %cst_122 {dimension_numbers = #tpu.dot_dimension_numbers<[1], [0], [0], [1], [0, 0, 1, 1], [], []>} : vector<16x64xbf16>, vector<64x16xbf16>, vector<16x16xf32> -> vector<16x16xf32>
    %cst_123 = arith.constant 0.000000e+00 : f32
    %228 = vector.broadcast %cst_123 : f32 to vector<16x5xf32>
    %229 = vector.extract_strided_slice %227 {offsets = [0, 0], sizes = [16, 11], strides = [1, 1]} : vector<16x16xf32> to vector<16x11xf32>
    %230 = tpu.concatenate %228, %229 in 1 : vector<16x5xf32>, vector<16x11xf32> -> vector<16x16xf32>
    %c0_124 = arith.constant 0 : index
    %c0_125 = arith.constant 0 : index
    %231 = vector.load %arg26[%c0_124, %c0_125] : memref<9x16xf32, #tpu.memory_space<vmem>>, vector<1x16xf32>
    %232 = vector.broadcast %231 : vector<1x16xf32> to vector<16x16xf32>
    %233 = arith.mulf %230, %232 : vector<16x16xf32>
    %cst_126 = arith.constant 0.000000e+00 : f32
    %234 = vector.broadcast %cst_126 : f32 to vector<16x4xf32>
    %235 = vector.extract_strided_slice %227 {offsets = [0, 0], sizes = [16, 12], strides = [1, 1]} : vector<16x16xf32> to vector<16x12xf32>
    %236 = tpu.concatenate %234, %235 in 1 : vector<16x4xf32>, vector<16x12xf32> -> vector<16x16xf32>
    %c1_127 = arith.constant 1 : index
    %c0_128 = arith.constant 0 : index
    %237 = vector.load %arg26[%c1_127, %c0_128] : memref<9x16xf32, #tpu.memory_space<vmem>>, vector<1x16xf32>
    %238 = vector.broadcast %237 : vector<1x16xf32> to vector<16x16xf32>
    %239 = arith.mulf %236, %238 : vector<16x16xf32>
    %cst_129 = arith.constant 0.000000e+00 : f32
    %240 = vector.broadcast %cst_129 : f32 to vector<16x3xf32>
    %241 = vector.extract_strided_slice %227 {offsets = [0, 0], sizes = [16, 13], strides = [1, 1]} : vector<16x16xf32> to vector<16x13xf32>
    %242 = tpu.concatenate %240, %241 in 1 : vector<16x3xf32>, vector<16x13xf32> -> vector<16x16xf32>
    %c2_130 = arith.constant 2 : index
    %c0_131 = arith.constant 0 : index
    %243 = vector.load %arg26[%c2_130, %c0_131] : memref<9x16xf32, #tpu.memory_space<vmem>>, vector<1x16xf32>
    %244 = vector.broadcast %243 : vector<1x16xf32> to vector<16x16xf32>
    %245 = arith.mulf %242, %244 : vector<16x16xf32>
    %cst_132 = arith.constant 0.000000e+00 : f32
    %246 = vector.broadcast %cst_132 : f32 to vector<16x1xf32>
    %247 = vector.extract_strided_slice %227 {offsets = [0, 0], sizes = [16, 15], strides = [1, 1]} : vector<16x16xf32> to vector<16x15xf32>
    %248 = tpu.concatenate %246, %247 in 1 : vector<16x1xf32>, vector<16x15xf32> -> vector<16x16xf32>
    %c3_133 = arith.constant 3 : index
    %c0_134 = arith.constant 0 : index
    %249 = vector.load %arg26[%c3_133, %c0_134] : memref<9x16xf32, #tpu.memory_space<vmem>>, vector<1x16xf32>
    %250 = vector.broadcast %249 : vector<1x16xf32> to vector<16x16xf32>
    %251 = arith.mulf %248, %250 : vector<16x16xf32>
    %c4_135 = arith.constant 4 : index
    %c0_136 = arith.constant 0 : index
    %252 = vector.load %arg26[%c4_135, %c0_136] : memref<9x16xf32, #tpu.memory_space<vmem>>, vector<1x16xf32>
    %253 = vector.broadcast %252 : vector<1x16xf32> to vector<16x16xf32>
    %254 = arith.mulf %227, %253 : vector<16x16xf32>
    %cst_137 = arith.constant 0.000000e+00 : f32
    %255 = vector.broadcast %cst_137 : f32 to vector<16x1xf32>
    %256 = vector.extract_strided_slice %227 {offsets = [0, 1], sizes = [16, 15], strides = [1, 1]} : vector<16x16xf32> to vector<16x15xf32>
    %257 = tpu.concatenate %256, %255 in 1 : vector<16x15xf32>, vector<16x1xf32> -> vector<16x16xf32>
    %c5_138 = arith.constant 5 : index
    %c0_139 = arith.constant 0 : index
    %258 = vector.load %arg26[%c5_138, %c0_139] : memref<9x16xf32, #tpu.memory_space<vmem>>, vector<1x16xf32>
    %259 = vector.broadcast %258 : vector<1x16xf32> to vector<16x16xf32>
    %260 = arith.mulf %257, %259 : vector<16x16xf32>
    %cst_140 = arith.constant 0.000000e+00 : f32
    %261 = vector.broadcast %cst_140 : f32 to vector<16x3xf32>
    %262 = vector.extract_strided_slice %227 {offsets = [0, 3], sizes = [16, 13], strides = [1, 1]} : vector<16x16xf32> to vector<16x13xf32>
    %263 = tpu.concatenate %262, %261 in 1 : vector<16x13xf32>, vector<16x3xf32> -> vector<16x16xf32>
    %c6_141 = arith.constant 6 : index
    %c0_142 = arith.constant 0 : index
    %264 = vector.load %arg26[%c6_141, %c0_142] : memref<9x16xf32, #tpu.memory_space<vmem>>, vector<1x16xf32>
    %265 = vector.broadcast %264 : vector<1x16xf32> to vector<16x16xf32>
    %266 = arith.mulf %263, %265 : vector<16x16xf32>
    %cst_143 = arith.constant 0.000000e+00 : f32
    %267 = vector.broadcast %cst_143 : f32 to vector<16x4xf32>
    %268 = vector.extract_strided_slice %227 {offsets = [0, 4], sizes = [16, 12], strides = [1, 1]} : vector<16x16xf32> to vector<16x12xf32>
    %269 = tpu.concatenate %268, %267 in 1 : vector<16x12xf32>, vector<16x4xf32> -> vector<16x16xf32>
    %c7_144 = arith.constant 7 : index
    %c0_145 = arith.constant 0 : index
    %270 = vector.load %arg26[%c7_144, %c0_145] : memref<9x16xf32, #tpu.memory_space<vmem>>, vector<1x16xf32>
    %271 = vector.broadcast %270 : vector<1x16xf32> to vector<16x16xf32>
    %272 = arith.mulf %269, %271 : vector<16x16xf32>
    %cst_146 = arith.constant 0.000000e+00 : f32
    %273 = vector.broadcast %cst_146 : f32 to vector<16x5xf32>
    %274 = vector.extract_strided_slice %227 {offsets = [0, 5], sizes = [16, 11], strides = [1, 1]} : vector<16x16xf32> to vector<16x11xf32>
    %275 = tpu.concatenate %274, %273 in 1 : vector<16x11xf32>, vector<16x5xf32> -> vector<16x16xf32>
    %c8_147 = arith.constant 8 : index
    %c0_148 = arith.constant 0 : index
    %276 = vector.load %arg26[%c8_147, %c0_148] : memref<9x16xf32, #tpu.memory_space<vmem>>, vector<1x16xf32>
    %277 = vector.broadcast %276 : vector<1x16xf32> to vector<16x16xf32>
    %278 = arith.mulf %275, %277 : vector<16x16xf32>
    %279 = tpu.concatenate %233, %239, %245, %251, %254, %260, %266, %272, %278 in 0 : vector<16x16xf32>, vector<16x16xf32>, vector<16x16xf32>, vector<16x16xf32>, vector<16x16xf32>, vector<16x16xf32>, vector<16x16xf32>, vector<16x16xf32>, vector<16x16xf32> -> vector<144x16xf32>
    %280 = arith.truncf %279 : vector<144x16xf32> to vector<144x16xbf16>
    %c0_149 = arith.constant 0 : index
    %c0_150 = arith.constant 0 : index
    %281 = vector.load %arg10[%c0_149, %c0_150] : memref<32x144xbf16, #tpu.memory_space<vmem>>, vector<32x144xbf16>
    %cst_151 = arith.constant dense<0.000000e+00> : vector<32x16xf32>
    %282 = tpu.matmul %281, %280, %cst_151 {dimension_numbers = #tpu.dot_dimension_numbers<[1], [0], [0], [1], [0, 0, 1, 1], [], []>} : vector<32x144xbf16>, vector<144x16xbf16>, vector<32x16xf32> -> vector<32x16xf32>
    %c0_152 = arith.constant 0 : index
    %c0_153 = arith.constant 0 : index
    %283 = vector.load %arg11[%c0_152, %c0_153] : memref<32x1xf32, #tpu.memory_space<vmem>>, vector<32x1xf32>
    %284 = vector.broadcast %283 : vector<32x1xf32> to vector<32x16xf32>
    %285 = arith.addf %282, %284 : vector<32x16xf32>
    %cst_154 = arith.constant 0.000000e+00 : f32
    %286 = vector.broadcast %cst_154 : f32 to vector<32x16xf32>
    %287 = arith.maximumf %285, %286 : vector<32x16xf32>
    %cst_155 = arith.constant 0.000000e+00 : f32
    %288 = vector.broadcast %cst_155 : f32 to vector<32x5xf32>
    %289 = vector.extract_strided_slice %287 {offsets = [0, 0], sizes = [32, 11], strides = [1, 1]} : vector<32x16xf32> to vector<32x11xf32>
    %290 = tpu.concatenate %288, %289 in 1 : vector<32x5xf32>, vector<32x11xf32> -> vector<32x16xf32>
    %c0_156 = arith.constant 0 : index
    %c0_157 = arith.constant 0 : index
    %291 = vector.load %arg26[%c0_156, %c0_157] : memref<9x16xf32, #tpu.memory_space<vmem>>, vector<1x16xf32>
    %292 = vector.broadcast %291 : vector<1x16xf32> to vector<32x16xf32>
    %293 = arith.mulf %290, %292 : vector<32x16xf32>
    %cst_158 = arith.constant 0.000000e+00 : f32
    %294 = vector.broadcast %cst_158 : f32 to vector<32x4xf32>
    %295 = vector.extract_strided_slice %287 {offsets = [0, 0], sizes = [32, 12], strides = [1, 1]} : vector<32x16xf32> to vector<32x12xf32>
    %296 = tpu.concatenate %294, %295 in 1 : vector<32x4xf32>, vector<32x12xf32> -> vector<32x16xf32>
    %c1_159 = arith.constant 1 : index
    %c0_160 = arith.constant 0 : index
    %297 = vector.load %arg26[%c1_159, %c0_160] : memref<9x16xf32, #tpu.memory_space<vmem>>, vector<1x16xf32>
    %298 = vector.broadcast %297 : vector<1x16xf32> to vector<32x16xf32>
    %299 = arith.mulf %296, %298 : vector<32x16xf32>
    %cst_161 = arith.constant 0.000000e+00 : f32
    %300 = vector.broadcast %cst_161 : f32 to vector<32x3xf32>
    %301 = vector.extract_strided_slice %287 {offsets = [0, 0], sizes = [32, 13], strides = [1, 1]} : vector<32x16xf32> to vector<32x13xf32>
    %302 = tpu.concatenate %300, %301 in 1 : vector<32x3xf32>, vector<32x13xf32> -> vector<32x16xf32>
    %c2_162 = arith.constant 2 : index
    %c0_163 = arith.constant 0 : index
    %303 = vector.load %arg26[%c2_162, %c0_163] : memref<9x16xf32, #tpu.memory_space<vmem>>, vector<1x16xf32>
    %304 = vector.broadcast %303 : vector<1x16xf32> to vector<32x16xf32>
    %305 = arith.mulf %302, %304 : vector<32x16xf32>
    %cst_164 = arith.constant 0.000000e+00 : f32
    %306 = vector.broadcast %cst_164 : f32 to vector<32x1xf32>
    %307 = vector.extract_strided_slice %287 {offsets = [0, 0], sizes = [32, 15], strides = [1, 1]} : vector<32x16xf32> to vector<32x15xf32>
    %308 = tpu.concatenate %306, %307 in 1 : vector<32x1xf32>, vector<32x15xf32> -> vector<32x16xf32>
    %c3_165 = arith.constant 3 : index
    %c0_166 = arith.constant 0 : index
    %309 = vector.load %arg26[%c3_165, %c0_166] : memref<9x16xf32, #tpu.memory_space<vmem>>, vector<1x16xf32>
    %310 = vector.broadcast %309 : vector<1x16xf32> to vector<32x16xf32>
    %311 = arith.mulf %308, %310 : vector<32x16xf32>
    %c4_167 = arith.constant 4 : index
    %c0_168 = arith.constant 0 : index
    %312 = vector.load %arg26[%c4_167, %c0_168] : memref<9x16xf32, #tpu.memory_space<vmem>>, vector<1x16xf32>
    %313 = vector.broadcast %312 : vector<1x16xf32> to vector<32x16xf32>
    %314 = arith.mulf %287, %313 : vector<32x16xf32>
    %cst_169 = arith.constant 0.000000e+00 : f32
    %315 = vector.broadcast %cst_169 : f32 to vector<32x1xf32>
    %316 = vector.extract_strided_slice %287 {offsets = [0, 1], sizes = [32, 15], strides = [1, 1]} : vector<32x16xf32> to vector<32x15xf32>
    %317 = tpu.concatenate %316, %315 in 1 : vector<32x15xf32>, vector<32x1xf32> -> vector<32x16xf32>
    %c5_170 = arith.constant 5 : index
    %c0_171 = arith.constant 0 : index
    %318 = vector.load %arg26[%c5_170, %c0_171] : memref<9x16xf32, #tpu.memory_space<vmem>>, vector<1x16xf32>
    %319 = vector.broadcast %318 : vector<1x16xf32> to vector<32x16xf32>
    %320 = arith.mulf %317, %319 : vector<32x16xf32>
    %cst_172 = arith.constant 0.000000e+00 : f32
    %321 = vector.broadcast %cst_172 : f32 to vector<32x3xf32>
    %322 = vector.extract_strided_slice %287 {offsets = [0, 3], sizes = [32, 13], strides = [1, 1]} : vector<32x16xf32> to vector<32x13xf32>
    %323 = tpu.concatenate %322, %321 in 1 : vector<32x13xf32>, vector<32x3xf32> -> vector<32x16xf32>
    %c6_173 = arith.constant 6 : index
    %c0_174 = arith.constant 0 : index
    %324 = vector.load %arg26[%c6_173, %c0_174] : memref<9x16xf32, #tpu.memory_space<vmem>>, vector<1x16xf32>
    %325 = vector.broadcast %324 : vector<1x16xf32> to vector<32x16xf32>
    %326 = arith.mulf %323, %325 : vector<32x16xf32>
    %cst_175 = arith.constant 0.000000e+00 : f32
    %327 = vector.broadcast %cst_175 : f32 to vector<32x4xf32>
    %328 = vector.extract_strided_slice %287 {offsets = [0, 4], sizes = [32, 12], strides = [1, 1]} : vector<32x16xf32> to vector<32x12xf32>
    %329 = tpu.concatenate %328, %327 in 1 : vector<32x12xf32>, vector<32x4xf32> -> vector<32x16xf32>
    %c7_176 = arith.constant 7 : index
    %c0_177 = arith.constant 0 : index
    %330 = vector.load %arg26[%c7_176, %c0_177] : memref<9x16xf32, #tpu.memory_space<vmem>>, vector<1x16xf32>
    %331 = vector.broadcast %330 : vector<1x16xf32> to vector<32x16xf32>
    %332 = arith.mulf %329, %331 : vector<32x16xf32>
    %cst_178 = arith.constant 0.000000e+00 : f32
    %333 = vector.broadcast %cst_178 : f32 to vector<32x5xf32>
    %334 = vector.extract_strided_slice %287 {offsets = [0, 5], sizes = [32, 11], strides = [1, 1]} : vector<32x16xf32> to vector<32x11xf32>
    %335 = tpu.concatenate %334, %333 in 1 : vector<32x11xf32>, vector<32x5xf32> -> vector<32x16xf32>
    %c8_179 = arith.constant 8 : index
    %c0_180 = arith.constant 0 : index
    %336 = vector.load %arg26[%c8_179, %c0_180] : memref<9x16xf32, #tpu.memory_space<vmem>>, vector<1x16xf32>
    %337 = vector.broadcast %336 : vector<1x16xf32> to vector<32x16xf32>
    %338 = arith.mulf %335, %337 : vector<32x16xf32>
    %339 = tpu.concatenate %293, %299, %305, %311, %314, %320, %326, %332, %338 in 0 : vector<32x16xf32>, vector<32x16xf32>, vector<32x16xf32>, vector<32x16xf32>, vector<32x16xf32>, vector<32x16xf32>, vector<32x16xf32>, vector<32x16xf32>, vector<32x16xf32> -> vector<288x16xf32>
    %340 = arith.truncf %339 : vector<288x16xf32> to vector<288x16xbf16>
    %c0_181 = arith.constant 0 : index
    %c0_182 = arith.constant 0 : index
    %341 = vector.load %arg12[%c0_181, %c0_182] : memref<32x288xbf16, #tpu.memory_space<vmem>>, vector<32x288xbf16>
    %cst_183 = arith.constant dense<0.000000e+00> : vector<32x16xf32>
    %342 = tpu.matmul %341, %340, %cst_183 {dimension_numbers = #tpu.dot_dimension_numbers<[1], [0], [0], [1], [0, 0, 1, 1], [], []>} : vector<32x288xbf16>, vector<288x16xbf16>, vector<32x16xf32> -> vector<32x16xf32>
    %c0_184 = arith.constant 0 : index
    %c0_185 = arith.constant 0 : index
    %343 = vector.load %arg13[%c0_184, %c0_185] : memref<32x1xf32, #tpu.memory_space<vmem>>, vector<32x1xf32>
    %344 = vector.broadcast %343 : vector<32x1xf32> to vector<32x16xf32>
    %345 = arith.addf %342, %344 : vector<32x16xf32>
    %cst_186 = arith.constant 0.000000e+00 : f32
    %346 = vector.broadcast %cst_186 : f32 to vector<32x16xf32>
    %347 = arith.maximumf %345, %346 : vector<32x16xf32>
    %348 = arith.truncf %347 : vector<32x16xf32> to vector<32x16xbf16>
    %c0_187 = arith.constant 0 : index
    %c0_188 = arith.constant 0 : index
    %349 = vector.load %arg30[%c0_187, %c0_188] : memref<16x64xbf16, #tpu.memory_space<vmem>>, vector<16x64xbf16>
    %cst_189 = arith.constant dense<0.000000e+00> : vector<32x64xf32>
    %350 = tpu.matmul %348, %349, %cst_189 {dimension_numbers = #tpu.dot_dimension_numbers<[1], [0], [0], [1], [0, 0, 1, 1], [], []>} : vector<32x16xbf16>, vector<16x64xbf16>, vector<32x64xf32> -> vector<32x64xf32>
    %351 = tpu.concatenate %216, %350 in 0 : vector<16x64xf32>, vector<32x64xf32> -> vector<48x64xf32>
    %cst_190 = arith.constant 0.000000e+00 : f32
    %352 = vector.broadcast %cst_190 : f32 to vector<48x9xf32>
    %353 = vector.extract_strided_slice %351 {offsets = [0, 0], sizes = [48, 55], strides = [1, 1]} : vector<48x64xf32> to vector<48x55xf32>
    %354 = tpu.concatenate %352, %353 in 1 : vector<48x9xf32>, vector<48x55xf32> -> vector<48x64xf32>
    %c0_191 = arith.constant 0 : index
    %c0_192 = arith.constant 0 : index
    %355 = vector.load %arg25[%c0_191, %c0_192] : memref<9x64xf32, #tpu.memory_space<vmem>>, vector<1x64xf32>
    %356 = vector.broadcast %355 : vector<1x64xf32> to vector<48x64xf32>
    %357 = arith.mulf %354, %356 : vector<48x64xf32>
    %cst_193 = arith.constant 0.000000e+00 : f32
    %358 = vector.broadcast %cst_193 : f32 to vector<48x8xf32>
    %359 = vector.extract_strided_slice %351 {offsets = [0, 0], sizes = [48, 56], strides = [1, 1]} : vector<48x64xf32> to vector<48x56xf32>
    %360 = tpu.concatenate %358, %359 in 1 : vector<48x8xf32>, vector<48x56xf32> -> vector<48x64xf32>
    %c1_194 = arith.constant 1 : index
    %c0_195 = arith.constant 0 : index
    %361 = vector.load %arg25[%c1_194, %c0_195] : memref<9x64xf32, #tpu.memory_space<vmem>>, vector<1x64xf32>
    %362 = vector.broadcast %361 : vector<1x64xf32> to vector<48x64xf32>
    %363 = arith.mulf %360, %362 : vector<48x64xf32>
    %cst_196 = arith.constant 0.000000e+00 : f32
    %364 = vector.broadcast %cst_196 : f32 to vector<48x7xf32>
    %365 = vector.extract_strided_slice %351 {offsets = [0, 0], sizes = [48, 57], strides = [1, 1]} : vector<48x64xf32> to vector<48x57xf32>
    %366 = tpu.concatenate %364, %365 in 1 : vector<48x7xf32>, vector<48x57xf32> -> vector<48x64xf32>
    %c2_197 = arith.constant 2 : index
    %c0_198 = arith.constant 0 : index
    %367 = vector.load %arg25[%c2_197, %c0_198] : memref<9x64xf32, #tpu.memory_space<vmem>>, vector<1x64xf32>
    %368 = vector.broadcast %367 : vector<1x64xf32> to vector<48x64xf32>
    %369 = arith.mulf %366, %368 : vector<48x64xf32>
    %cst_199 = arith.constant 0.000000e+00 : f32
    %370 = vector.broadcast %cst_199 : f32 to vector<48x1xf32>
    %371 = vector.extract_strided_slice %351 {offsets = [0, 0], sizes = [48, 63], strides = [1, 1]} : vector<48x64xf32> to vector<48x63xf32>
    %372 = tpu.concatenate %370, %371 in 1 : vector<48x1xf32>, vector<48x63xf32> -> vector<48x64xf32>
    %c3_200 = arith.constant 3 : index
    %c0_201 = arith.constant 0 : index
    %373 = vector.load %arg25[%c3_200, %c0_201] : memref<9x64xf32, #tpu.memory_space<vmem>>, vector<1x64xf32>
    %374 = vector.broadcast %373 : vector<1x64xf32> to vector<48x64xf32>
    %375 = arith.mulf %372, %374 : vector<48x64xf32>
    %c4_202 = arith.constant 4 : index
    %c0_203 = arith.constant 0 : index
    %376 = vector.load %arg25[%c4_202, %c0_203] : memref<9x64xf32, #tpu.memory_space<vmem>>, vector<1x64xf32>
    %377 = vector.broadcast %376 : vector<1x64xf32> to vector<48x64xf32>
    %378 = arith.mulf %351, %377 : vector<48x64xf32>
    %cst_204 = arith.constant 0.000000e+00 : f32
    %379 = vector.broadcast %cst_204 : f32 to vector<48x1xf32>
    %380 = vector.extract_strided_slice %351 {offsets = [0, 1], sizes = [48, 63], strides = [1, 1]} : vector<48x64xf32> to vector<48x63xf32>
    %381 = tpu.concatenate %380, %379 in 1 : vector<48x63xf32>, vector<48x1xf32> -> vector<48x64xf32>
    %c5_205 = arith.constant 5 : index
    %c0_206 = arith.constant 0 : index
    %382 = vector.load %arg25[%c5_205, %c0_206] : memref<9x64xf32, #tpu.memory_space<vmem>>, vector<1x64xf32>
    %383 = vector.broadcast %382 : vector<1x64xf32> to vector<48x64xf32>
    %384 = arith.mulf %381, %383 : vector<48x64xf32>
    %cst_207 = arith.constant 0.000000e+00 : f32
    %385 = vector.broadcast %cst_207 : f32 to vector<48x7xf32>
    %386 = vector.extract_strided_slice %351 {offsets = [0, 7], sizes = [48, 57], strides = [1, 1]} : vector<48x64xf32> to vector<48x57xf32>
    %387 = tpu.concatenate %386, %385 in 1 : vector<48x57xf32>, vector<48x7xf32> -> vector<48x64xf32>
    %c6_208 = arith.constant 6 : index
    %c0_209 = arith.constant 0 : index
    %388 = vector.load %arg25[%c6_208, %c0_209] : memref<9x64xf32, #tpu.memory_space<vmem>>, vector<1x64xf32>
    %389 = vector.broadcast %388 : vector<1x64xf32> to vector<48x64xf32>
    %390 = arith.mulf %387, %389 : vector<48x64xf32>
    %cst_210 = arith.constant 0.000000e+00 : f32
    %391 = vector.broadcast %cst_210 : f32 to vector<48x8xf32>
    %392 = vector.extract_strided_slice %351 {offsets = [0, 8], sizes = [48, 56], strides = [1, 1]} : vector<48x64xf32> to vector<48x56xf32>
    %393 = tpu.concatenate %392, %391 in 1 : vector<48x56xf32>, vector<48x8xf32> -> vector<48x64xf32>
    %c7_211 = arith.constant 7 : index
    %c0_212 = arith.constant 0 : index
    %394 = vector.load %arg25[%c7_211, %c0_212] : memref<9x64xf32, #tpu.memory_space<vmem>>, vector<1x64xf32>
    %395 = vector.broadcast %394 : vector<1x64xf32> to vector<48x64xf32>
    %396 = arith.mulf %393, %395 : vector<48x64xf32>
    %cst_213 = arith.constant 0.000000e+00 : f32
    %397 = vector.broadcast %cst_213 : f32 to vector<48x9xf32>
    %398 = vector.extract_strided_slice %351 {offsets = [0, 9], sizes = [48, 55], strides = [1, 1]} : vector<48x64xf32> to vector<48x55xf32>
    %399 = tpu.concatenate %398, %397 in 1 : vector<48x55xf32>, vector<48x9xf32> -> vector<48x64xf32>
    %c8_214 = arith.constant 8 : index
    %c0_215 = arith.constant 0 : index
    %400 = vector.load %arg25[%c8_214, %c0_215] : memref<9x64xf32, #tpu.memory_space<vmem>>, vector<1x64xf32>
    %401 = vector.broadcast %400 : vector<1x64xf32> to vector<48x64xf32>
    %402 = arith.mulf %399, %401 : vector<48x64xf32>
    %403 = tpu.concatenate %357, %363, %369, %375, %378, %384, %390, %396, %402 in 0 : vector<48x64xf32>, vector<48x64xf32>, vector<48x64xf32>, vector<48x64xf32>, vector<48x64xf32>, vector<48x64xf32>, vector<48x64xf32>, vector<48x64xf32>, vector<48x64xf32> -> vector<432x64xf32>
    %404 = arith.truncf %403 : vector<432x64xf32> to vector<432x64xbf16>
    %c0_216 = arith.constant 0 : index
    %c0_217 = arith.constant 0 : index
    %405 = vector.load %arg14[%c0_216, %c0_217] : memref<16x432xbf16, #tpu.memory_space<vmem>>, vector<16x432xbf16>
    %cst_218 = arith.constant dense<0.000000e+00> : vector<16x64xf32>
    %406 = tpu.matmul %405, %404, %cst_218 {dimension_numbers = #tpu.dot_dimension_numbers<[1], [0], [0], [1], [0, 0, 1, 1], [], []>} : vector<16x432xbf16>, vector<432x64xbf16>, vector<16x64xf32> -> vector<16x64xf32>
    %c0_219 = arith.constant 0 : index
    %c0_220 = arith.constant 0 : index
    %407 = vector.load %arg15[%c0_219, %c0_220] : memref<16x1xf32, #tpu.memory_space<vmem>>, vector<16x1xf32>
    %408 = vector.broadcast %407 : vector<16x1xf32> to vector<16x64xf32>
    %409 = arith.addf %406, %408 : vector<16x64xf32>
    %cst_221 = arith.constant 0.000000e+00 : f32
    %410 = vector.broadcast %cst_221 : f32 to vector<16x64xf32>
    %411 = arith.maximumf %409, %410 : vector<16x64xf32>
    %cst_222 = arith.constant 0.000000e+00 : f32
    %412 = vector.broadcast %cst_222 : f32 to vector<16x9xf32>
    %413 = vector.extract_strided_slice %411 {offsets = [0, 0], sizes = [16, 55], strides = [1, 1]} : vector<16x64xf32> to vector<16x55xf32>
    %414 = tpu.concatenate %412, %413 in 1 : vector<16x9xf32>, vector<16x55xf32> -> vector<16x64xf32>
    %c0_223 = arith.constant 0 : index
    %c0_224 = arith.constant 0 : index
    %415 = vector.load %arg25[%c0_223, %c0_224] : memref<9x64xf32, #tpu.memory_space<vmem>>, vector<1x64xf32>
    %416 = vector.broadcast %415 : vector<1x64xf32> to vector<16x64xf32>
    %417 = arith.mulf %414, %416 : vector<16x64xf32>
    %cst_225 = arith.constant 0.000000e+00 : f32
    %418 = vector.broadcast %cst_225 : f32 to vector<16x8xf32>
    %419 = vector.extract_strided_slice %411 {offsets = [0, 0], sizes = [16, 56], strides = [1, 1]} : vector<16x64xf32> to vector<16x56xf32>
    %420 = tpu.concatenate %418, %419 in 1 : vector<16x8xf32>, vector<16x56xf32> -> vector<16x64xf32>
    %c1_226 = arith.constant 1 : index
    %c0_227 = arith.constant 0 : index
    %421 = vector.load %arg25[%c1_226, %c0_227] : memref<9x64xf32, #tpu.memory_space<vmem>>, vector<1x64xf32>
    %422 = vector.broadcast %421 : vector<1x64xf32> to vector<16x64xf32>
    %423 = arith.mulf %420, %422 : vector<16x64xf32>
    %cst_228 = arith.constant 0.000000e+00 : f32
    %424 = vector.broadcast %cst_228 : f32 to vector<16x7xf32>
    %425 = vector.extract_strided_slice %411 {offsets = [0, 0], sizes = [16, 57], strides = [1, 1]} : vector<16x64xf32> to vector<16x57xf32>
    %426 = tpu.concatenate %424, %425 in 1 : vector<16x7xf32>, vector<16x57xf32> -> vector<16x64xf32>
    %c2_229 = arith.constant 2 : index
    %c0_230 = arith.constant 0 : index
    %427 = vector.load %arg25[%c2_229, %c0_230] : memref<9x64xf32, #tpu.memory_space<vmem>>, vector<1x64xf32>
    %428 = vector.broadcast %427 : vector<1x64xf32> to vector<16x64xf32>
    %429 = arith.mulf %426, %428 : vector<16x64xf32>
    %cst_231 = arith.constant 0.000000e+00 : f32
    %430 = vector.broadcast %cst_231 : f32 to vector<16x1xf32>
    %431 = vector.extract_strided_slice %411 {offsets = [0, 0], sizes = [16, 63], strides = [1, 1]} : vector<16x64xf32> to vector<16x63xf32>
    %432 = tpu.concatenate %430, %431 in 1 : vector<16x1xf32>, vector<16x63xf32> -> vector<16x64xf32>
    %c3_232 = arith.constant 3 : index
    %c0_233 = arith.constant 0 : index
    %433 = vector.load %arg25[%c3_232, %c0_233] : memref<9x64xf32, #tpu.memory_space<vmem>>, vector<1x64xf32>
    %434 = vector.broadcast %433 : vector<1x64xf32> to vector<16x64xf32>
    %435 = arith.mulf %432, %434 : vector<16x64xf32>
    %c4_234 = arith.constant 4 : index
    %c0_235 = arith.constant 0 : index
    %436 = vector.load %arg25[%c4_234, %c0_235] : memref<9x64xf32, #tpu.memory_space<vmem>>, vector<1x64xf32>
    %437 = vector.broadcast %436 : vector<1x64xf32> to vector<16x64xf32>
    %438 = arith.mulf %411, %437 : vector<16x64xf32>
    %cst_236 = arith.constant 0.000000e+00 : f32
    %439 = vector.broadcast %cst_236 : f32 to vector<16x1xf32>
    %440 = vector.extract_strided_slice %411 {offsets = [0, 1], sizes = [16, 63], strides = [1, 1]} : vector<16x64xf32> to vector<16x63xf32>
    %441 = tpu.concatenate %440, %439 in 1 : vector<16x63xf32>, vector<16x1xf32> -> vector<16x64xf32>
    %c5_237 = arith.constant 5 : index
    %c0_238 = arith.constant 0 : index
    %442 = vector.load %arg25[%c5_237, %c0_238] : memref<9x64xf32, #tpu.memory_space<vmem>>, vector<1x64xf32>
    %443 = vector.broadcast %442 : vector<1x64xf32> to vector<16x64xf32>
    %444 = arith.mulf %441, %443 : vector<16x64xf32>
    %cst_239 = arith.constant 0.000000e+00 : f32
    %445 = vector.broadcast %cst_239 : f32 to vector<16x7xf32>
    %446 = vector.extract_strided_slice %411 {offsets = [0, 7], sizes = [16, 57], strides = [1, 1]} : vector<16x64xf32> to vector<16x57xf32>
    %447 = tpu.concatenate %446, %445 in 1 : vector<16x57xf32>, vector<16x7xf32> -> vector<16x64xf32>
    %c6_240 = arith.constant 6 : index
    %c0_241 = arith.constant 0 : index
    %448 = vector.load %arg25[%c6_240, %c0_241] : memref<9x64xf32, #tpu.memory_space<vmem>>, vector<1x64xf32>
    %449 = vector.broadcast %448 : vector<1x64xf32> to vector<16x64xf32>
    %450 = arith.mulf %447, %449 : vector<16x64xf32>
    %cst_242 = arith.constant 0.000000e+00 : f32
    %451 = vector.broadcast %cst_242 : f32 to vector<16x8xf32>
    %452 = vector.extract_strided_slice %411 {offsets = [0, 8], sizes = [16, 56], strides = [1, 1]} : vector<16x64xf32> to vector<16x56xf32>
    %453 = tpu.concatenate %452, %451 in 1 : vector<16x56xf32>, vector<16x8xf32> -> vector<16x64xf32>
    %c7_243 = arith.constant 7 : index
    %c0_244 = arith.constant 0 : index
    %454 = vector.load %arg25[%c7_243, %c0_244] : memref<9x64xf32, #tpu.memory_space<vmem>>, vector<1x64xf32>
    %455 = vector.broadcast %454 : vector<1x64xf32> to vector<16x64xf32>
    %456 = arith.mulf %453, %455 : vector<16x64xf32>
    %cst_245 = arith.constant 0.000000e+00 : f32
    %457 = vector.broadcast %cst_245 : f32 to vector<16x9xf32>
    %458 = vector.extract_strided_slice %411 {offsets = [0, 9], sizes = [16, 55], strides = [1, 1]} : vector<16x64xf32> to vector<16x55xf32>
    %459 = tpu.concatenate %458, %457 in 1 : vector<16x55xf32>, vector<16x9xf32> -> vector<16x64xf32>
    %c8_246 = arith.constant 8 : index
    %c0_247 = arith.constant 0 : index
    %460 = vector.load %arg25[%c8_246, %c0_247] : memref<9x64xf32, #tpu.memory_space<vmem>>, vector<1x64xf32>
    %461 = vector.broadcast %460 : vector<1x64xf32> to vector<16x64xf32>
    %462 = arith.mulf %459, %461 : vector<16x64xf32>
    %463 = tpu.concatenate %417, %423, %429, %435, %438, %444, %450, %456, %462 in 0 : vector<16x64xf32>, vector<16x64xf32>, vector<16x64xf32>, vector<16x64xf32>, vector<16x64xf32>, vector<16x64xf32>, vector<16x64xf32>, vector<16x64xf32>, vector<16x64xf32> -> vector<144x64xf32>
    %464 = arith.truncf %463 : vector<144x64xf32> to vector<144x64xbf16>
    %c0_248 = arith.constant 0 : index
    %c0_249 = arith.constant 0 : index
    %465 = vector.load %arg16[%c0_248, %c0_249] : memref<16x144xbf16, #tpu.memory_space<vmem>>, vector<16x144xbf16>
    %cst_250 = arith.constant dense<0.000000e+00> : vector<16x64xf32>
    %466 = tpu.matmul %465, %464, %cst_250 {dimension_numbers = #tpu.dot_dimension_numbers<[1], [0], [0], [1], [0, 0, 1, 1], [], []>} : vector<16x144xbf16>, vector<144x64xbf16>, vector<16x64xf32> -> vector<16x64xf32>
    %c0_251 = arith.constant 0 : index
    %c0_252 = arith.constant 0 : index
    %467 = vector.load %arg17[%c0_251, %c0_252] : memref<16x1xf32, #tpu.memory_space<vmem>>, vector<16x1xf32>
    %468 = vector.broadcast %467 : vector<16x1xf32> to vector<16x64xf32>
    %469 = arith.addf %466, %468 : vector<16x64xf32>
    %cst_253 = arith.constant 0.000000e+00 : f32
    %470 = vector.broadcast %cst_253 : f32 to vector<16x64xf32>
    %471 = arith.maximumf %469, %470 : vector<16x64xf32>
    %472 = arith.truncf %471 : vector<16x64xf32> to vector<16x64xbf16>
    %c0_254 = arith.constant 0 : index
    %c0_255 = arith.constant 0 : index
    %473 = vector.load %arg29[%c0_254, %c0_255] : memref<64x256xbf16, #tpu.memory_space<vmem>>, vector<64x256xbf16>
    %cst_256 = arith.constant dense<0.000000e+00> : vector<16x256xf32>
    %474 = tpu.matmul %472, %473, %cst_256 {dimension_numbers = #tpu.dot_dimension_numbers<[1], [0], [0], [1], [0, 0, 1, 1], [], []>} : vector<16x64xbf16>, vector<64x256xbf16>, vector<16x256xf32> -> vector<16x256xf32>
    %475 = tpu.concatenate %89, %474 in 0 : vector<8x256xf32>, vector<16x256xf32> -> vector<24x256xf32>
    %c17_i32_257 = arith.constant 17 : i32
    %476 = tpu.dynamic_rotate %475 by %c17_i32_257 dim 1 : vector<24x256xf32>, i32 -> vector<24x256xf32>
    %c0_258 = arith.constant 0 : index
    %c0_259 = arith.constant 0 : index
    %477 = vector.load %arg24[%c0_258, %c0_259] : memref<9x256xf32, #tpu.memory_space<vmem>>, vector<1x256xf32>
    %478 = vector.broadcast %477 : vector<1x256xf32> to vector<24x256xf32>
    %479 = arith.mulf %476, %478 : vector<24x256xf32>
    %c16_i32_260 = arith.constant 16 : i32
    %480 = tpu.dynamic_rotate %475 by %c16_i32_260 dim 1 : vector<24x256xf32>, i32 -> vector<24x256xf32>
    %c1_261 = arith.constant 1 : index
    %c0_262 = arith.constant 0 : index
    %481 = vector.load %arg24[%c1_261, %c0_262] : memref<9x256xf32, #tpu.memory_space<vmem>>, vector<1x256xf32>
    %482 = vector.broadcast %481 : vector<1x256xf32> to vector<24x256xf32>
    %483 = arith.mulf %480, %482 : vector<24x256xf32>
    %c15_i32_263 = arith.constant 15 : i32
    %484 = tpu.dynamic_rotate %475 by %c15_i32_263 dim 1 : vector<24x256xf32>, i32 -> vector<24x256xf32>
    %c2_264 = arith.constant 2 : index
    %c0_265 = arith.constant 0 : index
    %485 = vector.load %arg24[%c2_264, %c0_265] : memref<9x256xf32, #tpu.memory_space<vmem>>, vector<1x256xf32>
    %486 = vector.broadcast %485 : vector<1x256xf32> to vector<24x256xf32>
    %487 = arith.mulf %484, %486 : vector<24x256xf32>
    %c1_i32_266 = arith.constant 1 : i32
    %488 = tpu.dynamic_rotate %475 by %c1_i32_266 dim 1 : vector<24x256xf32>, i32 -> vector<24x256xf32>
    %c3_267 = arith.constant 3 : index
    %c0_268 = arith.constant 0 : index
    %489 = vector.load %arg24[%c3_267, %c0_268] : memref<9x256xf32, #tpu.memory_space<vmem>>, vector<1x256xf32>
    %490 = vector.broadcast %489 : vector<1x256xf32> to vector<24x256xf32>
    %491 = arith.mulf %488, %490 : vector<24x256xf32>
    %c4_269 = arith.constant 4 : index
    %c0_270 = arith.constant 0 : index
    %492 = vector.load %arg24[%c4_269, %c0_270] : memref<9x256xf32, #tpu.memory_space<vmem>>, vector<1x256xf32>
    %493 = vector.broadcast %492 : vector<1x256xf32> to vector<24x256xf32>
    %494 = arith.mulf %475, %493 : vector<24x256xf32>
    %c255_i32_271 = arith.constant 255 : i32
    %495 = tpu.dynamic_rotate %475 by %c255_i32_271 dim 1 : vector<24x256xf32>, i32 -> vector<24x256xf32>
    %c5_272 = arith.constant 5 : index
    %c0_273 = arith.constant 0 : index
    %496 = vector.load %arg24[%c5_272, %c0_273] : memref<9x256xf32, #tpu.memory_space<vmem>>, vector<1x256xf32>
    %497 = vector.broadcast %496 : vector<1x256xf32> to vector<24x256xf32>
    %498 = arith.mulf %495, %497 : vector<24x256xf32>
    %c241_i32_274 = arith.constant 241 : i32
    %499 = tpu.dynamic_rotate %475 by %c241_i32_274 dim 1 : vector<24x256xf32>, i32 -> vector<24x256xf32>
    %c6_275 = arith.constant 6 : index
    %c0_276 = arith.constant 0 : index
    %500 = vector.load %arg24[%c6_275, %c0_276] : memref<9x256xf32, #tpu.memory_space<vmem>>, vector<1x256xf32>
    %501 = vector.broadcast %500 : vector<1x256xf32> to vector<24x256xf32>
    %502 = arith.mulf %499, %501 : vector<24x256xf32>
    %c240_i32_277 = arith.constant 240 : i32
    %503 = tpu.dynamic_rotate %475 by %c240_i32_277 dim 1 : vector<24x256xf32>, i32 -> vector<24x256xf32>
    %c7_278 = arith.constant 7 : index
    %c0_279 = arith.constant 0 : index
    %504 = vector.load %arg24[%c7_278, %c0_279] : memref<9x256xf32, #tpu.memory_space<vmem>>, vector<1x256xf32>
    %505 = vector.broadcast %504 : vector<1x256xf32> to vector<24x256xf32>
    %506 = arith.mulf %503, %505 : vector<24x256xf32>
    %c239_i32_280 = arith.constant 239 : i32
    %507 = tpu.dynamic_rotate %475 by %c239_i32_280 dim 1 : vector<24x256xf32>, i32 -> vector<24x256xf32>
    %c8_281 = arith.constant 8 : index
    %c0_282 = arith.constant 0 : index
    %508 = vector.load %arg24[%c8_281, %c0_282] : memref<9x256xf32, #tpu.memory_space<vmem>>, vector<1x256xf32>
    %509 = vector.broadcast %508 : vector<1x256xf32> to vector<24x256xf32>
    %510 = arith.mulf %507, %509 : vector<24x256xf32>
    %511 = tpu.concatenate %479, %483, %487, %491, %494, %498, %502, %506, %510 in 0 : vector<24x256xf32>, vector<24x256xf32>, vector<24x256xf32>, vector<24x256xf32>, vector<24x256xf32>, vector<24x256xf32>, vector<24x256xf32>, vector<24x256xf32>, vector<24x256xf32> -> vector<216x256xf32>
    %512 = arith.truncf %511 : vector<216x256xf32> to vector<216x256xbf16>
    %c0_283 = arith.constant 0 : index
    %c0_284 = arith.constant 0 : index
    %513 = vector.load %arg18[%c0_283, %c0_284] : memref<8x216xbf16, #tpu.memory_space<vmem>>, vector<8x216xbf16>
    %cst_285 = arith.constant dense<0.000000e+00> : vector<8x256xf32>
    %514 = tpu.matmul %513, %512, %cst_285 {dimension_numbers = #tpu.dot_dimension_numbers<[1], [0], [0], [1], [0, 0, 1, 1], [], []>} : vector<8x216xbf16>, vector<216x256xbf16>, vector<8x256xf32> -> vector<8x256xf32>
    %c0_286 = arith.constant 0 : index
    %c0_287 = arith.constant 0 : index
    %515 = vector.load %arg19[%c0_286, %c0_287] : memref<8x1xf32, #tpu.memory_space<vmem>>, vector<8x1xf32>
    %516 = vector.broadcast %515 : vector<8x1xf32> to vector<8x256xf32>
    %517 = arith.addf %514, %516 : vector<8x256xf32>
    %cst_288 = arith.constant 0.000000e+00 : f32
    %518 = vector.broadcast %cst_288 : f32 to vector<8x256xf32>
    %519 = arith.maximumf %517, %518 : vector<8x256xf32>
    %c17_i32_289 = arith.constant 17 : i32
    %520 = tpu.dynamic_rotate %519 by %c17_i32_289 dim 1 : vector<8x256xf32>, i32 -> vector<8x256xf32>
    %c0_290 = arith.constant 0 : index
    %c0_291 = arith.constant 0 : index
    %521 = vector.load %arg24[%c0_290, %c0_291] : memref<9x256xf32, #tpu.memory_space<vmem>>, vector<1x256xf32>
    %522 = vector.broadcast %521 : vector<1x256xf32> to vector<8x256xf32>
    %523 = arith.mulf %520, %522 : vector<8x256xf32>
    %c16_i32_292 = arith.constant 16 : i32
    %524 = tpu.dynamic_rotate %519 by %c16_i32_292 dim 1 : vector<8x256xf32>, i32 -> vector<8x256xf32>
    %c1_293 = arith.constant 1 : index
    %c0_294 = arith.constant 0 : index
    %525 = vector.load %arg24[%c1_293, %c0_294] : memref<9x256xf32, #tpu.memory_space<vmem>>, vector<1x256xf32>
    %526 = vector.broadcast %525 : vector<1x256xf32> to vector<8x256xf32>
    %527 = arith.mulf %524, %526 : vector<8x256xf32>
    %c15_i32_295 = arith.constant 15 : i32
    %528 = tpu.dynamic_rotate %519 by %c15_i32_295 dim 1 : vector<8x256xf32>, i32 -> vector<8x256xf32>
    %c2_296 = arith.constant 2 : index
    %c0_297 = arith.constant 0 : index
    %529 = vector.load %arg24[%c2_296, %c0_297] : memref<9x256xf32, #tpu.memory_space<vmem>>, vector<1x256xf32>
    %530 = vector.broadcast %529 : vector<1x256xf32> to vector<8x256xf32>
    %531 = arith.mulf %528, %530 : vector<8x256xf32>
    %c1_i32_298 = arith.constant 1 : i32
    %532 = tpu.dynamic_rotate %519 by %c1_i32_298 dim 1 : vector<8x256xf32>, i32 -> vector<8x256xf32>
    %c3_299 = arith.constant 3 : index
    %c0_300 = arith.constant 0 : index
    %533 = vector.load %arg24[%c3_299, %c0_300] : memref<9x256xf32, #tpu.memory_space<vmem>>, vector<1x256xf32>
    %534 = vector.broadcast %533 : vector<1x256xf32> to vector<8x256xf32>
    %535 = arith.mulf %532, %534 : vector<8x256xf32>
    %c4_301 = arith.constant 4 : index
    %c0_302 = arith.constant 0 : index
    %536 = vector.load %arg24[%c4_301, %c0_302] : memref<9x256xf32, #tpu.memory_space<vmem>>, vector<1x256xf32>
    %537 = vector.broadcast %536 : vector<1x256xf32> to vector<8x256xf32>
    %538 = arith.mulf %519, %537 : vector<8x256xf32>
    %c255_i32_303 = arith.constant 255 : i32
    %539 = tpu.dynamic_rotate %519 by %c255_i32_303 dim 1 : vector<8x256xf32>, i32 -> vector<8x256xf32>
    %c5_304 = arith.constant 5 : index
    %c0_305 = arith.constant 0 : index
    %540 = vector.load %arg24[%c5_304, %c0_305] : memref<9x256xf32, #tpu.memory_space<vmem>>, vector<1x256xf32>
    %541 = vector.broadcast %540 : vector<1x256xf32> to vector<8x256xf32>
    %542 = arith.mulf %539, %541 : vector<8x256xf32>
    %c241_i32_306 = arith.constant 241 : i32
    %543 = tpu.dynamic_rotate %519 by %c241_i32_306 dim 1 : vector<8x256xf32>, i32 -> vector<8x256xf32>
    %c6_307 = arith.constant 6 : index
    %c0_308 = arith.constant 0 : index
    %544 = vector.load %arg24[%c6_307, %c0_308] : memref<9x256xf32, #tpu.memory_space<vmem>>, vector<1x256xf32>
    %545 = vector.broadcast %544 : vector<1x256xf32> to vector<8x256xf32>
    %546 = arith.mulf %543, %545 : vector<8x256xf32>
    %c240_i32_309 = arith.constant 240 : i32
    %547 = tpu.dynamic_rotate %519 by %c240_i32_309 dim 1 : vector<8x256xf32>, i32 -> vector<8x256xf32>
    %c7_310 = arith.constant 7 : index
    %c0_311 = arith.constant 0 : index
    %548 = vector.load %arg24[%c7_310, %c0_311] : memref<9x256xf32, #tpu.memory_space<vmem>>, vector<1x256xf32>
    %549 = vector.broadcast %548 : vector<1x256xf32> to vector<8x256xf32>
    %550 = arith.mulf %547, %549 : vector<8x256xf32>
    %c239_i32_312 = arith.constant 239 : i32
    %551 = tpu.dynamic_rotate %519 by %c239_i32_312 dim 1 : vector<8x256xf32>, i32 -> vector<8x256xf32>
    %c8_313 = arith.constant 8 : index
    %c0_314 = arith.constant 0 : index
    %552 = vector.load %arg24[%c8_313, %c0_314] : memref<9x256xf32, #tpu.memory_space<vmem>>, vector<1x256xf32>
    %553 = vector.broadcast %552 : vector<1x256xf32> to vector<8x256xf32>
    %554 = arith.mulf %551, %553 : vector<8x256xf32>
    %555 = tpu.concatenate %523, %527, %531, %535, %538, %542, %546, %550, %554 in 0 : vector<8x256xf32>, vector<8x256xf32>, vector<8x256xf32>, vector<8x256xf32>, vector<8x256xf32>, vector<8x256xf32>, vector<8x256xf32>, vector<8x256xf32>, vector<8x256xf32> -> vector<72x256xf32>
    %556 = arith.truncf %555 : vector<72x256xf32> to vector<72x256xbf16>
    %c0_315 = arith.constant 0 : index
    %c0_316 = arith.constant 0 : index
    %557 = vector.load %arg20[%c0_315, %c0_316] : memref<8x72xbf16, #tpu.memory_space<vmem>>, vector<8x72xbf16>
    %cst_317 = arith.constant dense<0.000000e+00> : vector<8x256xf32>
    %558 = tpu.matmul %557, %556, %cst_317 {dimension_numbers = #tpu.dot_dimension_numbers<[1], [0], [0], [1], [0, 0, 1, 1], [], []>} : vector<8x72xbf16>, vector<72x256xbf16>, vector<8x256xf32> -> vector<8x256xf32>
    %c0_318 = arith.constant 0 : index
    %c0_319 = arith.constant 0 : index
    %559 = vector.load %arg21[%c0_318, %c0_319] : memref<8x1xf32, #tpu.memory_space<vmem>>, vector<8x1xf32>
    %560 = vector.broadcast %559 : vector<8x1xf32> to vector<8x256xf32>
    %561 = arith.addf %558, %560 : vector<8x256xf32>
    %cst_320 = arith.constant 0.000000e+00 : f32
    %562 = vector.broadcast %cst_320 : f32 to vector<8x256xf32>
    %563 = arith.maximumf %561, %562 : vector<8x256xf32>
    %c17_i32_321 = arith.constant 17 : i32
    %564 = tpu.dynamic_rotate %563 by %c17_i32_321 dim 1 : vector<8x256xf32>, i32 -> vector<8x256xf32>
    %c0_322 = arith.constant 0 : index
    %c0_323 = arith.constant 0 : index
    %565 = vector.load %arg24[%c0_322, %c0_323] : memref<9x256xf32, #tpu.memory_space<vmem>>, vector<1x256xf32>
    %566 = vector.broadcast %565 : vector<1x256xf32> to vector<8x256xf32>
    %567 = arith.mulf %564, %566 : vector<8x256xf32>
    %c16_i32_324 = arith.constant 16 : i32
    %568 = tpu.dynamic_rotate %563 by %c16_i32_324 dim 1 : vector<8x256xf32>, i32 -> vector<8x256xf32>
    %c1_325 = arith.constant 1 : index
    %c0_326 = arith.constant 0 : index
    %569 = vector.load %arg24[%c1_325, %c0_326] : memref<9x256xf32, #tpu.memory_space<vmem>>, vector<1x256xf32>
    %570 = vector.broadcast %569 : vector<1x256xf32> to vector<8x256xf32>
    %571 = arith.mulf %568, %570 : vector<8x256xf32>
    %c15_i32_327 = arith.constant 15 : i32
    %572 = tpu.dynamic_rotate %563 by %c15_i32_327 dim 1 : vector<8x256xf32>, i32 -> vector<8x256xf32>
    %c2_328 = arith.constant 2 : index
    %c0_329 = arith.constant 0 : index
    %573 = vector.load %arg24[%c2_328, %c0_329] : memref<9x256xf32, #tpu.memory_space<vmem>>, vector<1x256xf32>
    %574 = vector.broadcast %573 : vector<1x256xf32> to vector<8x256xf32>
    %575 = arith.mulf %572, %574 : vector<8x256xf32>
    %c1_i32_330 = arith.constant 1 : i32
    %576 = tpu.dynamic_rotate %563 by %c1_i32_330 dim 1 : vector<8x256xf32>, i32 -> vector<8x256xf32>
    %c3_331 = arith.constant 3 : index
    %c0_332 = arith.constant 0 : index
    %577 = vector.load %arg24[%c3_331, %c0_332] : memref<9x256xf32, #tpu.memory_space<vmem>>, vector<1x256xf32>
    %578 = vector.broadcast %577 : vector<1x256xf32> to vector<8x256xf32>
    %579 = arith.mulf %576, %578 : vector<8x256xf32>
    %c4_333 = arith.constant 4 : index
    %c0_334 = arith.constant 0 : index
    %580 = vector.load %arg24[%c4_333, %c0_334] : memref<9x256xf32, #tpu.memory_space<vmem>>, vector<1x256xf32>
    %581 = vector.broadcast %580 : vector<1x256xf32> to vector<8x256xf32>
    %582 = arith.mulf %563, %581 : vector<8x256xf32>
    %c255_i32_335 = arith.constant 255 : i32
    %583 = tpu.dynamic_rotate %563 by %c255_i32_335 dim 1 : vector<8x256xf32>, i32 -> vector<8x256xf32>
    %c5_336 = arith.constant 5 : index
    %c0_337 = arith.constant 0 : index
    %584 = vector.load %arg24[%c5_336, %c0_337] : memref<9x256xf32, #tpu.memory_space<vmem>>, vector<1x256xf32>
    %585 = vector.broadcast %584 : vector<1x256xf32> to vector<8x256xf32>
    %586 = arith.mulf %583, %585 : vector<8x256xf32>
    %c241_i32_338 = arith.constant 241 : i32
    %587 = tpu.dynamic_rotate %563 by %c241_i32_338 dim 1 : vector<8x256xf32>, i32 -> vector<8x256xf32>
    %c6_339 = arith.constant 6 : index
    %c0_340 = arith.constant 0 : index
    %588 = vector.load %arg24[%c6_339, %c0_340] : memref<9x256xf32, #tpu.memory_space<vmem>>, vector<1x256xf32>
    %589 = vector.broadcast %588 : vector<1x256xf32> to vector<8x256xf32>
    %590 = arith.mulf %587, %589 : vector<8x256xf32>
    %c240_i32_341 = arith.constant 240 : i32
    %591 = tpu.dynamic_rotate %563 by %c240_i32_341 dim 1 : vector<8x256xf32>, i32 -> vector<8x256xf32>
    %c7_342 = arith.constant 7 : index
    %c0_343 = arith.constant 0 : index
    %592 = vector.load %arg24[%c7_342, %c0_343] : memref<9x256xf32, #tpu.memory_space<vmem>>, vector<1x256xf32>
    %593 = vector.broadcast %592 : vector<1x256xf32> to vector<8x256xf32>
    %594 = arith.mulf %591, %593 : vector<8x256xf32>
    %c239_i32_344 = arith.constant 239 : i32
    %595 = tpu.dynamic_rotate %563 by %c239_i32_344 dim 1 : vector<8x256xf32>, i32 -> vector<8x256xf32>
    %c8_345 = arith.constant 8 : index
    %c0_346 = arith.constant 0 : index
    %596 = vector.load %arg24[%c8_345, %c0_346] : memref<9x256xf32, #tpu.memory_space<vmem>>, vector<1x256xf32>
    %597 = vector.broadcast %596 : vector<1x256xf32> to vector<8x256xf32>
    %598 = arith.mulf %595, %597 : vector<8x256xf32>
    %599 = tpu.concatenate %567, %571, %575, %579, %582, %586, %590, %594, %598 in 0 : vector<8x256xf32>, vector<8x256xf32>, vector<8x256xf32>, vector<8x256xf32>, vector<8x256xf32>, vector<8x256xf32>, vector<8x256xf32>, vector<8x256xf32>, vector<8x256xf32> -> vector<72x256xf32>
    %600 = arith.truncf %599 : vector<72x256xf32> to vector<72x256xbf16>
    %c0_347 = arith.constant 0 : index
    %c0_348 = arith.constant 0 : index
    %601 = vector.load %arg22[%c0_347, %c0_348] : memref<2x72xbf16, #tpu.memory_space<vmem>>, vector<2x72xbf16>
    %cst_349 = arith.constant dense<0.000000e+00> : vector<2x256xf32>
    %602 = tpu.matmul %601, %600, %cst_349 {dimension_numbers = #tpu.dot_dimension_numbers<[1], [0], [0], [1], [0, 0, 1, 1], [], []>} : vector<2x72xbf16>, vector<72x256xbf16>, vector<2x256xf32> -> vector<2x256xf32>
    %c0_350 = arith.constant 0 : index
    %c0_351 = arith.constant 0 : index
    %603 = vector.load %arg23[%c0_350, %c0_351] : memref<2x1xf32, #tpu.memory_space<vmem>>, vector<2x1xf32>
    %604 = vector.broadcast %603 : vector<2x1xf32> to vector<2x256xf32>
    %605 = arith.addf %602, %604 : vector<2x256xf32>
    %cst_352 = arith.constant dense<0xFF800000> : vector<256xf32>
    %606 = vector.multi_reduction <maximumf>, %605, %cst_352 [0] : vector<2x256xf32> to vector<256xf32>
    %607 = vector.shape_cast %606 : vector<256xf32> to vector<1x256xf32>
    %608 = vector.broadcast %607 : vector<1x256xf32> to vector<2x256xf32>
    %609 = arith.subf %605, %608 : vector<2x256xf32>
    %610 = math.exp %609 : vector<2x256xf32>
    %cst_353 = arith.constant dense<0.000000e+00> : vector<256xf32>
    %611 = vector.multi_reduction <add>, %610, %cst_353 [0] : vector<2x256xf32> to vector<256xf32>
    %612 = vector.shape_cast %611 : vector<256xf32> to vector<1x256xf32>
    %613 = tpu.reciprocal %612 {approx = true} : vector<1x256xf32> -> vector<1x256xf32>
    %614 = vector.broadcast %613 : vector<1x256xf32> to vector<2x256xf32>
    %615 = arith.mulf %610, %614 : vector<2x256xf32>
    %c0_354 = arith.constant 0 : index
    %c0_355 = arith.constant 0 : index
    %c0_356 = arith.constant 0 : index
    %616 = vector.load %arg31[%c0_354, %c0_355, %c0_356] : memref<1x2x256xf32, #tpu.memory_space<vmem>>, vector<1x2x256xf32>
    %617 = vector.shape_cast %616 : vector<1x2x256xf32> to vector<2x256xf32>
    %618 = vector.shape_cast %615 : vector<2x256xf32> to vector<1x2x256xf32>
    tpu.vector_store %arg31[%c0_354, %c0_355, %c0_356], %618 {strides = array<i32>} : memref<1x2x256xf32, #tpu.memory_space<vmem>>, vector<1x2x256xf32>,
    return
  }
  func.func @transform_0(%arg0: i32) -> (i32, i32, i32) {
    %c0_i32 = arith.constant 0 : i32
    %c0_i32_0 = arith.constant 0 : i32
    %c0_i32_1 = arith.constant 0 : i32
    return %arg0, %c0_i32, %c0_i32_0 : i32, i32, i32
  }
  func.func @transform_1(%arg0: i32) -> (i32, i32) {
    %c0_i32 = arith.constant 0 : i32
    %c0_i32_0 = arith.constant 0 : i32
    %c0_i32_1 = arith.constant 0 : i32
    return %c0_i32, %c0_i32_0 : i32, i32
  }
  func.func @transform_2(%arg0: i32) -> (i32, i32) {
    %c0_i32 = arith.constant 0 : i32
    %c0_i32_0 = arith.constant 0 : i32
    %c0_i32_1 = arith.constant 0 : i32
    return %c0_i32, %c0_i32_0 : i32, i32
  }
  func.func @transform_3(%arg0: i32) -> (i32, i32) {
    %c0_i32 = arith.constant 0 : i32
    %c0_i32_0 = arith.constant 0 : i32
    %c0_i32_1 = arith.constant 0 : i32
    return %c0_i32, %c0_i32_0 : i32, i32
  }
  func.func @transform_4(%arg0: i32) -> (i32, i32) {
    %c0_i32 = arith.constant 0 : i32
    %c0_i32_0 = arith.constant 0 : i32
    %c0_i32_1 = arith.constant 0 : i32
    return %c0_i32, %c0_i32_0 : i32, i32
  }
  func.func @transform_5(%arg0: i32) -> (i32, i32) {
    %c0_i32 = arith.constant 0 : i32
    %c0_i32_0 = arith.constant 0 : i32
    %c0_i32_1 = arith.constant 0 : i32
    return %c0_i32, %c0_i32_0 : i32, i32
  }
  func.func @transform_6(%arg0: i32) -> (i32, i32) {
    %c0_i32 = arith.constant 0 : i32
    %c0_i32_0 = arith.constant 0 : i32
    %c0_i32_1 = arith.constant 0 : i32
    return %c0_i32, %c0_i32_0 : i32, i32
  }
  func.func @transform_7(%arg0: i32) -> (i32, i32) {
    %c0_i32 = arith.constant 0 : i32
    %c0_i32_0 = arith.constant 0 : i32
    %c0_i32_1 = arith.constant 0 : i32
    return %c0_i32, %c0_i32_0 : i32, i32
  }
  func.func @transform_8(%arg0: i32) -> (i32, i32) {
    %c0_i32 = arith.constant 0 : i32
    %c0_i32_0 = arith.constant 0 : i32
    %c0_i32_1 = arith.constant 0 : i32
    return %c0_i32, %c0_i32_0 : i32, i32
  }
  func.func @transform_9(%arg0: i32) -> (i32, i32) {
    %c0_i32 = arith.constant 0 : i32
    %c0_i32_0 = arith.constant 0 : i32
    %c0_i32_1 = arith.constant 0 : i32
    return %c0_i32, %c0_i32_0 : i32, i32
  }
  func.func @transform_10(%arg0: i32) -> (i32, i32) {
    %c0_i32 = arith.constant 0 : i32
    %c0_i32_0 = arith.constant 0 : i32
    %c0_i32_1 = arith.constant 0 : i32
    return %c0_i32, %c0_i32_0 : i32, i32
  }
  func.func @transform_11(%arg0: i32) -> (i32, i32) {
    %c0_i32 = arith.constant 0 : i32
    %c0_i32_0 = arith.constant 0 : i32
    %c0_i32_1 = arith.constant 0 : i32
    return %c0_i32, %c0_i32_0 : i32, i32
  }
  func.func @transform_12(%arg0: i32) -> (i32, i32) {
    %c0_i32 = arith.constant 0 : i32
    %c0_i32_0 = arith.constant 0 : i32
    %c0_i32_1 = arith.constant 0 : i32
    return %c0_i32, %c0_i32_0 : i32, i32
  }
  func.func @transform_13(%arg0: i32) -> (i32, i32) {
    %c0_i32 = arith.constant 0 : i32
    %c0_i32_0 = arith.constant 0 : i32
    %c0_i32_1 = arith.constant 0 : i32
    return %c0_i32, %c0_i32_0 : i32, i32
  }
  func.func @transform_14(%arg0: i32) -> (i32, i32) {
    %c0_i32 = arith.constant 0 : i32
    %c0_i32_0 = arith.constant 0 : i32
    %c0_i32_1 = arith.constant 0 : i32
    return %c0_i32, %c0_i32_0 : i32, i32
  }
  func.func @transform_15(%arg0: i32) -> (i32, i32) {
    %c0_i32 = arith.constant 0 : i32
    %c0_i32_0 = arith.constant 0 : i32
    %c0_i32_1 = arith.constant 0 : i32
    return %c0_i32, %c0_i32_0 : i32, i32
  }
  func.func @transform_16(%arg0: i32) -> (i32, i32) {
    %c0_i32 = arith.constant 0 : i32
    %c0_i32_0 = arith.constant 0 : i32
    %c0_i32_1 = arith.constant 0 : i32
    return %c0_i32, %c0_i32_0 : i32, i32
  }
  func.func @transform_17(%arg0: i32) -> (i32, i32) {
    %c0_i32 = arith.constant 0 : i32
    %c0_i32_0 = arith.constant 0 : i32
    %c0_i32_1 = arith.constant 0 : i32
    return %c0_i32, %c0_i32_0 : i32, i32
  }
  func.func @transform_18(%arg0: i32) -> (i32, i32) {
    %c0_i32 = arith.constant 0 : i32
    %c0_i32_0 = arith.constant 0 : i32
    %c0_i32_1 = arith.constant 0 : i32
    return %c0_i32, %c0_i32_0 : i32, i32
  }
  func.func @transform_19(%arg0: i32) -> (i32, i32) {
    %c0_i32 = arith.constant 0 : i32
    %c0_i32_0 = arith.constant 0 : i32
    %c0_i32_1 = arith.constant 0 : i32
    return %c0_i32, %c0_i32_0 : i32, i32
  }
  func.func @transform_20(%arg0: i32) -> (i32, i32) {
    %c0_i32 = arith.constant 0 : i32
    %c0_i32_0 = arith.constant 0 : i32
    %c0_i32_1 = arith.constant 0 : i32
    return %c0_i32, %c0_i32_0 : i32, i32
  }
  func.func @transform_21(%arg0: i32) -> (i32, i32) {
    %c0_i32 = arith.constant 0 : i32
    %c0_i32_0 = arith.constant 0 : i32
    %c0_i32_1 = arith.constant 0 : i32
    return %c0_i32, %c0_i32_0 : i32, i32
  }
  func.func @transform_22(%arg0: i32) -> (i32, i32) {
    %c0_i32 = arith.constant 0 : i32
    %c0_i32_0 = arith.constant 0 : i32
    %c0_i32_1 = arith.constant 0 : i32
    return %c0_i32, %c0_i32_0 : i32, i32
  }
  func.func @transform_23(%arg0: i32) -> (i32, i32) {
    %c0_i32 = arith.constant 0 : i32
    %c0_i32_0 = arith.constant 0 : i32
    %c0_i32_1 = arith.constant 0 : i32
    return %c0_i32, %c0_i32_0 : i32, i32
  }
  func.func @transform_24(%arg0: i32) -> (i32, i32) {
    %c0_i32 = arith.constant 0 : i32
    %c0_i32_0 = arith.constant 0 : i32
    %c0_i32_1 = arith.constant 0 : i32
    return %c0_i32, %c0_i32_0 : i32, i32
  }
  func.func @transform_25(%arg0: i32) -> (i32, i32) {
    %c0_i32 = arith.constant 0 : i32
    %c0_i32_0 = arith.constant 0 : i32
    %c0_i32_1 = arith.constant 0 : i32
    return %c0_i32, %c0_i32_0 : i32, i32
  }
  func.func @transform_26(%arg0: i32) -> (i32, i32) {
    %c0_i32 = arith.constant 0 : i32
    %c0_i32_0 = arith.constant 0 : i32
    %c0_i32_1 = arith.constant 0 : i32
    return %c0_i32, %c0_i32_0 : i32, i32
  }
  func.func @transform_27(%arg0: i32) -> (i32, i32) {
    %c0_i32 = arith.constant 0 : i32
    %c0_i32_0 = arith.constant 0 : i32
    %c0_i32_1 = arith.constant 0 : i32
    return %c0_i32, %c0_i32_0 : i32, i32
  }
  func.func @transform_28(%arg0: i32) -> (i32, i32) {
    %c0_i32 = arith.constant 0 : i32
    %c0_i32_0 = arith.constant 0 : i32
    %c0_i32_1 = arith.constant 0 : i32
    return %c0_i32, %c0_i32_0 : i32, i32
  }
  func.func @transform_29(%arg0: i32) -> (i32, i32) {
    %c0_i32 = arith.constant 0 : i32
    %c0_i32_0 = arith.constant 0 : i32
    %c0_i32_1 = arith.constant 0 : i32
    return %c0_i32, %c0_i32_0 : i32, i32
  }
  func.func @transform_30(%arg0: i32) -> (i32, i32, i32) {
    %c0_i32 = arith.constant 0 : i32
    %c0_i32_0 = arith.constant 0 : i32
    %c0_i32_1 = arith.constant 0 : i32
    return %arg0, %c0_i32, %c0_i32_0 : i32, i32, i32
  }
}

</mosaic_0001>

<llo_original>
// kernel: tpu_custom_call.1
$region0: #{tpu_custom_call.1}
  #allocation0 [shape = 'u32[]', space=smem, size = 0x4, offset = 0x4, fixed_abs, tag = 'smem constant byte address 0x4 - core index']
  #allocation1 [shape = 'u32[144,128]{1,0:T(1,128)}', space=vmem, size = 0x12000, scoped, tag = 'internal scratch']
  %s0 = inlined_call_operand.smem [shape: u32[31], index: -1, kind: input, shape index: {}]
  %s1 = sld [smem:[%s0]]
  %s2 = scalar_lea.smem %s0, 1
  %s3 = sld [smem:[%s2]]
  %s4 = scalar_lea.smem %s0, 2
  %s5 = sld [smem:[%s4]]
  %s6 = scalar_lea.smem %s0, 3
  %s7 = sld [smem:[%s6]]
  %s8 = scalar_lea.smem %s0, 4
  %s9 = sld [smem:[%s8]]
  %s10 = scalar_lea.smem %s0, 5
  %s11 = sld [smem:[%s10]]
  %s12 = scalar_lea.smem %s0, 6
  %s13 = sld [smem:[%s12]]
  %s14 = scalar_lea.smem %s0, 7
  %s15 = sld [smem:[%s14]]
  %s16 = scalar_lea.smem %s0, 8
  %s17 = sld [smem:[%s16]]
  %s18 = scalar_lea.smem %s0, 9
  %s19 = sld [smem:[%s18]]
  %s20 = scalar_lea.smem %s0, 10
  %s21 = sld [smem:[%s20]]
  %s22 = scalar_lea.smem %s0, 11
  %s23 = sld [smem:[%s22]]
  %s24 = scalar_lea.smem %s0, 12
  %s25 = sld [smem:[%s24]]
  %s26 = scalar_lea.smem %s0, 13
  %s27 = sld [smem:[%s26]]
  %s28 = scalar_lea.smem %s0, 14
  %s29 = sld [smem:[%s28]]
  %s30 = scalar_lea.smem %s0, 15
  %s31 = sld [smem:[%s30]]
  %s32 = scalar_lea.smem %s0, 16
  %s33 = sld [smem:[%s32]]
  %s34 = scalar_lea.smem %s0, 17
  %s35 = sld [smem:[%s34]]
  %s36 = scalar_lea.smem %s0, 18
  %s37 = sld [smem:[%s36]]
  %s38 = scalar_lea.smem %s0, 19
  %s39 = sld [smem:[%s38]]
  %s40 = scalar_lea.smem %s0, 20
  %s41 = sld [smem:[%s40]]
  %s42 = scalar_lea.smem %s0, 21
  %s43 = sld [smem:[%s42]]
  %s44 = scalar_lea.smem %s0, 22
  %s45 = sld [smem:[%s44]]
  %s46 = scalar_lea.smem %s0, 23
  %s47 = sld [smem:[%s46]]
  %s48 = scalar_lea.smem %s0, 24
  %s49 = sld [smem:[%s48]]
  %s50 = scalar_lea.smem %s0, 25
  %s51 = sld [smem:[%s50]]
  %s52 = scalar_lea.smem %s0, 26
  %s53 = sld [smem:[%s52]]
  %s54 = scalar_lea.smem %s0, 27
  %s55 = sld [smem:[%s54]]
  %s56 = scalar_lea.smem %s0, 28
  %s57 = sld [smem:[%s56]]
  %s58 = scalar_lea.smem %s0, 29
  %s59 = sld [smem:[%s58]]
  %s60 = scalar_lea.smem %s0, 30
  %s61 = sld [smem:[%s60]]
  %s62 = sld [smem:[#allocation0]]
  $region157: #{tpu_custom_call.1} parent=0
    _
  %s64 = ssub.s32 1, %s62
  %s65 = scalar_select 0, %s64, %s62
  $region1: #{tpu_custom_call.1} parent=0
    #allocation2 [shape = 'u8[2048]{0}', space=vmem, size = 0x800, scoped, tag = 'input window, operand 3, single buffered']
    #allocation3 [shape = 's32[2]{0}', space=sflag, size = 0x8, scoped, tag = 'scoped memory for tpu_custom_call.1']
    #allocation4 [shape = 's32[2]{0}', space=sflag, size = 0x8, scoped, tag = 'scoped memory for tpu_custom_call.1']
    #allocation5 [shape = 'u8[4096]{0}', space=vmem, size = 0x1000, scoped, tag = 'output window, operand 0']
    %66 = vsyncpa [#allocation3], 0
    %67 = vsyncpa [#allocation4], 0
    %s68 = scalar_lea.sflag [#allocation4], 1
    %69 = vsyncpa %s68, 0
    loop: start=0, step=1, limit=4
    $region2: #{tpu_custom_call.1} parent=1 // loop_pre_header
      _
    $region3: #{tpu_custom_call.1} parent=1 // loop_header
      %s71 = sphi 0, %s75
      %p72 = scmp.ge.s32.totalorder %s71, 4
      %s81 = sphi 0, %s83
      %s84 = sphi 0, %s81
      %s85 = sphi 0, %s84
      %s101 = sphi 0, %s85
      %s105 = sphi 0, %s105
      %s107 = sphi 0, %s105
      %s108 = sphi 0, %s107
      %s122 = sphi 0, %s108
      %s126 = sphi 0, %s126
      %s128 = sphi 0, %s126
      %s129 = sphi 0, %s128
      %s143 = sphi 0, %s129
      %s147 = sphi 0, %s147
      %s149 = sphi 0, %s147
      %s150 = sphi 0, %s149
      %s164 = sphi 0, %s150
      %s168 = sphi 0, %s168
      %s170 = sphi 0, %s168
      %s171 = sphi 0, %s170
      %s185 = sphi 0, %s171
      %s189 = sphi 0, %s189
      %s191 = sphi 0, %s189
      %s192 = sphi 0, %s191
      %s206 = sphi 0, %s192
      %s210 = sphi 0, %s210
      %s212 = sphi 0, %s210
      %s213 = sphi 0, %s212
      %s227 = sphi 0, %s213
      %s231 = sphi 0, %s231
      %s233 = sphi 0, %s231
      %s234 = sphi 0, %s233
      %s248 = sphi 0, %s234
      %s252 = sphi 0, %s252
      %s254 = sphi 0, %s252
      %s255 = sphi 0, %s254
      %s269 = sphi 0, %s255
      %s273 = sphi 0, %s273
      %s275 = sphi 0, %s273
      %s276 = sphi 0, %s275
      %s290 = sphi 0, %s276
      %s294 = sphi 0, %s294
      %s296 = sphi 0, %s294
      %s297 = sphi 0, %s296
      %s311 = sphi 0, %s297
      %s315 = sphi 0, %s315
      %s317 = sphi 0, %s315
      %s318 = sphi 0, %s317
      %s332 = sphi 0, %s318
      %s336 = sphi 0, %s336
      %s338 = sphi 0, %s336
      %s339 = sphi 0, %s338
      %s353 = sphi 0, %s339
      %s357 = sphi 0, %s357
      %s359 = sphi 0, %s357
      %s360 = sphi 0, %s359
      %s374 = sphi 0, %s360
      %s378 = sphi 0, %s378
      %s380 = sphi 0, %s378
      %s381 = sphi 0, %s380
      %s395 = sphi 0, %s381
      %s399 = sphi 0, %s399
      %s401 = sphi 0, %s399
      %s402 = sphi 0, %s401
      %s416 = sphi 0, %s402
      %s420 = sphi 0, %s420
      %s422 = sphi 0, %s420
      %s423 = sphi 0, %s422
      %s437 = sphi 0, %s423
      %s441 = sphi 0, %s441
      %s443 = sphi 0, %s441
      %s444 = sphi 0, %s443
      %s458 = sphi 0, %s444
      %s462 = sphi 0, %s462
      %s464 = sphi 0, %s462
      %s465 = sphi 0, %s464
      %s479 = sphi 0, %s465
      %s483 = sphi 0, %s483
      %s485 = sphi 0, %s483
      %s486 = sphi 0, %s485
      %s500 = sphi 0, %s486
      %s504 = sphi 0, %s504
      %s506 = sphi 0, %s504
      %s507 = sphi 0, %s506
      %s521 = sphi 0, %s507
      %s525 = sphi 0, %s525
      %s527 = sphi 0, %s525
      %s528 = sphi 0, %s527
      %s542 = sphi 0, %s528
      %s546 = sphi 0, %s546
      %s548 = sphi 0, %s546
      %s549 = sphi 0, %s548
      %s563 = sphi 0, %s549
      %s567 = sphi 0, %s567
      %s569 = sphi 0, %s567
      %s570 = sphi 0, %s569
      %s584 = sphi 0, %s570
      %s588 = sphi 0, %s588
      %s590 = sphi 0, %s588
      %s591 = sphi 0, %s590
      %s605 = sphi 0, %s591
      %s609 = sphi 0, %s609
      %s611 = sphi 0, %s609
      %s612 = sphi 0, %s611
      %s626 = sphi 0, %s612
      %s630 = sphi 0, %s630
      %s632 = sphi 0, %s630
      %s633 = sphi 0, %s632
      %s647 = sphi 0, %s633
      %s651 = sphi 0, %s651
      %s653 = sphi 0, %s651
      %s654 = sphi 0, %s653
      %s668 = sphi 0, %s654
      %s672 = sphi 0, %s672
      %s674 = sphi 0, %s672
      %s675 = sphi 0, %s674
      %s689 = sphi 0, %s675
      %s693 = sphi 0, %s693
      %s695 = sphi 0, %s693
      %s696 = sphi 0, %s695
      %s710 = sphi 0, %s696
      %s716 = sphi 0, %s718
      %s719 = sphi 0, %s716
      %s720 = sphi 0, %s719
      %s736 = sphi 0, %s720
    $region4: #{tpu_custom_call.1} parent=1 // loop_header_branch
      %74 = sbr.rel (%p72) target = $region8
    $region5: #{tpu_custom_call.1} parent=1 // loop_body
      %s76 = ssub.s32 %s71, 1
      %s77 = ssub.s32 %s71, 2
      %s78 = sadd.s32 %s71, 1
      %s79 = ssub.s32 %s71, %s78
      %p80 = scmp.eq.s32.totalorder %s79, 0
      %s82 = sadd.s32 %s81, 1
      %s83 = scalar_select %p80, %s81, %s82
      %p86 = pneg %p80
      %p87 = scmp.eq.s32.totalorder %s71, 1
      %p88 = por %p86, %p87
      %p89 = scmp.ne.s32.totalorder %s81, %s84
      %p90 = scmp.eq.s32.totalorder %s71, 0
      %p91 = por %p89, %p90
      %p92 = scmp.ne.s32.totalorder %s81, %s84
      %p93 = scmp.eq.s32.totalorder %s76, 1
      %p94 = por %p92, %p93
      %p95 = scmp.ne.s32.totalorder %s84, %s85
      %p96 = scmp.eq.s32.totalorder %s76, 0
      %p97 = por %p95, %p96
      %p98 = scmp.ne.s32.totalorder %s84, %s85
      %p99 = scmp.eq.s32.totalorder %s77, 1
      %p100 = por %p98, %p99
      %p102 = scmp.ne.s32.totalorder %s85, %s101
      %p103 = scmp.eq.s32.totalorder %s77, 0
      %p104 = por %p102, %p103
      %s106 = sadd.s32 %s105, 1
      %p109 = scmp.eq.s32.totalorder %s71, 1
      %p110 = scmp.ne.s32.totalorder %s105, %s107
      %p111 = scmp.eq.s32.totalorder %s71, 0
      %p112 = por %p110, %p111
      %p113 = scmp.ne.s32.totalorder %s105, %s107
      %p114 = scmp.eq.s32.totalorder %s76, 1
      %p115 = por %p113, %p114
      %p116 = scmp.ne.s32.totalorder %s107, %s108
      %p117 = scmp.eq.s32.totalorder %s76, 0
      %p118 = por %p116, %p117
      %p119 = scmp.ne.s32.totalorder %s107, %s108
      %p120 = scmp.eq.s32.totalorder %s77, 1
      %p121 = por %p119, %p120
      %p123 = scmp.ne.s32.totalorder %s108, %s122
      %p124 = scmp.eq.s32.totalorder %s77, 0
      %p125 = por %p123, %p124
      %s127 = sadd.s32 %s126, 1
      %p130 = scmp.eq.s32.totalorder %s71, 1
      %p131 = scmp.ne.s32.totalorder %s126, %s128
      %p132 = scmp.eq.s32.totalorder %s71, 0
      %p133 = por %p131, %p132
      %p134 = scmp.ne.s32.totalorder %s126, %s128
      %p135 = scmp.eq.s32.totalorder %s76, 1
      %p136 = por %p134, %p135
      %p137 = scmp.ne.s32.totalorder %s128, %s129
      %p138 = scmp.eq.s32.totalorder %s76, 0
      %p139 = por %p137, %p138
      %p140 = scmp.ne.s32.totalorder %s128, %s129
      %p141 = scmp.eq.s32.totalorder %s77, 1
      %p142 = por %p140, %p141
      %p144 = scmp.ne.s32.totalorder %s129, %s143
      %p145 = scmp.eq.s32.totalorder %s77, 0
      %p146 = por %p144, %p145
      %s148 = sadd.s32 %s147, 1
      %p151 = scmp.eq.s32.totalorder %s71, 1
      %p152 = scmp.ne.s32.totalorder %s147, %s149
      %p153 = scmp.eq.s32.totalorder %s71, 0
      %p154 = por %p152, %p153
      %p155 = scmp.ne.s32.totalorder %s147, %s149
      %p156 = scmp.eq.s32.totalorder %s76, 1
      %p157 = por %p155, %p156
      %p158 = scmp.ne.s32.totalorder %s149, %s150
      %p159 = scmp.eq.s32.totalorder %s76, 0
      %p160 = por %p158, %p159
      %p161 = scmp.ne.s32.totalorder %s149, %s150
      %p162 = scmp.eq.s32.totalorder %s77, 1
      %p163 = por %p161, %p162
      %p165 = scmp.ne.s32.totalorder %s150, %s164
      %p166 = scmp.eq.s32.totalorder %s77, 0
      %p167 = por %p165, %p166
      %s169 = sadd.s32 %s168, 1
      %p172 = scmp.eq.s32.totalorder %s71, 1
      %p173 = scmp.ne.s32.totalorder %s168, %s170
      %p174 = scmp.eq.s32.totalorder %s71, 0
      %p175 = por %p173, %p174
      %p176 = scmp.ne.s32.totalorder %s168, %s170
      %p177 = scmp.eq.s32.totalorder %s76, 1
      %p178 = por %p176, %p177
      %p179 = scmp.ne.s32.totalorder %s170, %s171
      %p180 = scmp.eq.s32.totalorder %s76, 0
      %p181 = por %p179, %p180
      %p182 = scmp.ne.s32.totalorder %s170, %s171
      %p183 = scmp.eq.s32.totalorder %s77, 1
      %p184 = por %p182, %p183
      %p186 = scmp.ne.s32.totalorder %s171, %s185
      %p187 = scmp.eq.s32.totalorder %s77, 0
      %p188 = por %p186, %p187
      %s190 = sadd.s32 %s189, 1
      %p193 = scmp.eq.s32.totalorder %s71, 1
      %p194 = scmp.ne.s32.totalorder %s189, %s191
      %p195 = scmp.eq.s32.totalorder %s71, 0
      %p196 = por %p194, %p195
      %p197 = scmp.ne.s32.totalorder %s189, %s191
      %p198 = scmp.eq.s32.totalorder %s76, 1
      %p199 = por %p197, %p198
      %p200 = scmp.ne.s32.totalorder %s191, %s192
      %p201 = scmp.eq.s32.totalorder %s76, 0
      %p202 = por %p200, %p201
      %p203 = scmp.ne.s32.totalorder %s191, %s192
      %p204 = scmp.eq.s32.totalorder %s77, 1
      %p205 = por %p203, %p204
      %p207 = scmp.ne.s32.totalorder %s192, %s206
      %p208 = scmp.eq.s32.totalorder %s77, 0
      %p209 = por %p207, %p208
      %s211 = sadd.s32 %s210, 1
      %p214 = scmp.eq.s32.totalorder %s71, 1
      %p215 = scmp.ne.s32.totalorder %s210, %s212
      %p216 = scmp.eq.s32.totalorder %s71, 0
      %p217 = por %p215, %p216
      %p218 = scmp.ne.s32.totalorder %s210, %s212
      %p219 = scmp.eq.s32.totalorder %s76, 1
      %p220 = por %p218, %p219
      %p221 = scmp.ne.s32.totalorder %s212, %s213
      %p222 = scmp.eq.s32.totalorder %s76, 0
      %p223 = por %p221, %p222
      %p224 = scmp.ne.s32.totalorder %s212, %s213
      %p225 = scmp.eq.s32.totalorder %s77, 1
      %p226 = por %p224, %p225
      %p228 = scmp.ne.s32.totalorder %s213, %s227
      %p229 = scmp.eq.s32.totalorder %s77, 0
      %p230 = por %p228, %p229
      %s232 = sadd.s32 %s231, 1
      %p235 = scmp.eq.s32.totalorder %s71, 1
      %p236 = scmp.ne.s32.totalorder %s231, %s233
      %p237 = scmp.eq.s32.totalorder %s71, 0
      %p238 = por %p236, %p237
      %p239 = scmp.ne.s32.totalorder %s231, %s233
      %p240 = scmp.eq.s32.totalorder %s76, 1
      %p241 = por %p239, %p240
      %p242 = scmp.ne.s32.totalorder %s233, %s234
      %p243 = scmp.eq.s32.totalorder %s76, 0
      %p244 = por %p242, %p243
      %p245 = scmp.ne.s32.totalorder %s233, %s234
      %p246 = scmp.eq.s32.totalorder %s77, 1
      %p247 = por %p245, %p246
      %p249 = scmp.ne.s32.totalorder %s234, %s248
      %p250 = scmp.eq.s32.totalorder %s77, 0
      %p251 = por %p249, %p250
      %s253 = sadd.s32 %s252, 1
      %p256 = scmp.eq.s32.totalorder %s71, 1
      %p257 = scmp.ne.s32.totalorder %s252, %s254
      %p258 = scmp.eq.s32.totalorder %s71, 0
      %p259 = por %p257, %p258
      %p260 = scmp.ne.s32.totalorder %s252, %s254
      %p261 = scmp.eq.s32.totalorder %s76, 1
      %p262 = por %p260, %p261
      %p263 = scmp.ne.s32.totalorder %s254, %s255
      %p264 = scmp.eq.s32.totalorder %s76, 0
      %p265 = por %p263, %p264
      %p266 = scmp.ne.s32.totalorder %s254, %s255
      %p267 = scmp.eq.s32.totalorder %s77, 1
      %p268 = por %p266, %p267
      %p270 = scmp.ne.s32.totalorder %s255, %s269
      %p271 = scmp.eq.s32.totalorder %s77, 0
      %p272 = por %p270, %p271
      %s274 = sadd.s32 %s273, 1
      %p277 = scmp.eq.s32.totalorder %s71, 1
      %p278 = scmp.ne.s32.totalorder %s273, %s275
      %p279 = scmp.eq.s32.totalorder %s71, 0
      %p280 = por %p278, %p279
      %p281 = scmp.ne.s32.totalorder %s273, %s275
      %p282 = scmp.eq.s32.totalorder %s76, 1
      %p283 = por %p281, %p282
      %p284 = scmp.ne.s32.totalorder %s275, %s276
      %p285 = scmp.eq.s32.totalorder %s76, 0
      %p286 = por %p284, %p285
      %p287 = scmp.ne.s32.totalorder %s275, %s276
      %p288 = scmp.eq.s32.totalorder %s77, 1
      %p289 = por %p287, %p288
      %p291 = scmp.ne.s32.totalorder %s276, %s290
      %p292 = scmp.eq.s32.totalorder %s77, 0
      %p293 = por %p291, %p292
      %s295 = sadd.s32 %s294, 1
      %p298 = scmp.eq.s32.totalorder %s71, 1
      %p299 = scmp.ne.s32.totalorder %s294, %s296
      %p300 = scmp.eq.s32.totalorder %s71, 0
      %p301 = por %p299, %p300
      %p302 = scmp.ne.s32.totalorder %s294, %s296
      %p303 = scmp.eq.s32.totalorder %s76, 1
      %p304 = por %p302, %p303
      %p305 = scmp.ne.s32.totalorder %s296, %s297
      %p306 = scmp.eq.s32.totalorder %s76, 0
      %p307 = por %p305, %p306
      %p308 = scmp.ne.s32.totalorder %s296, %s297
      %p309 = scmp.eq.s32.totalorder %s77, 1
      %p310 = por %p308, %p309
      %p312 = scmp.ne.s32.totalorder %s297, %s311
      %p313 = scmp.eq.s32.totalorder %s77, 0
      %p314 = por %p312, %p313
      %s316 = sadd.s32 %s315, 1
      %p319 = scmp.eq.s32.totalorder %s71, 1
      %p320 = scmp.ne.s32.totalorder %s315, %s317
      %p321 = scmp.eq.s32.totalorder %s71, 0
      %p322 = por %p320, %p321
      %p323 = scmp.ne.s32.totalorder %s315, %s317
      %p324 = scmp.eq.s32.totalorder %s76, 1
      %p325 = por %p323, %p324
      %p326 = scmp.ne.s32.totalorder %s317, %s318
      %p327 = scmp.eq.s32.totalorder %s76, 0
      %p328 = por %p326, %p327
      %p329 = scmp.ne.s32.totalorder %s317, %s318
      %p330 = scmp.eq.s32.totalorder %s77, 1
      %p331 = por %p329, %p330
      %p333 = scmp.ne.s32.totalorder %s318, %s332
      %p334 = scmp.eq.s32.totalorder %s77, 0
      %p335 = por %p333, %p334
      %s337 = sadd.s32 %s336, 1
      %p340 = scmp.eq.s32.totalorder %s71, 1
      %p341 = scmp.ne.s32.totalorder %s336, %s338
      %p342 = scmp.eq.s32.totalorder %s71, 0
      %p343 = por %p341, %p342
      %p344 = scmp.ne.s32.totalorder %s336, %s338
      %p345 = scmp.eq.s32.totalorder %s76, 1
      %p346 = por %p344, %p345
      %p347 = scmp.ne.s32.totalorder %s338, %s339
      %p348 = scmp.eq.s32.totalorder %s76, 0
      %p349 = por %p347, %p348
      %p350 = scmp.ne.s32.totalorder %s338, %s339
      %p351 = scmp.eq.s32.totalorder %s77, 1
      %p352 = por %p350, %p351
      %p354 = scmp.ne.s32.totalorder %s339, %s353
      %p355 = scmp.eq.s32.totalorder %s77, 0
      %p356 = por %p354, %p355
      %s358 = sadd.s32 %s357, 1
      %p361 = scmp.eq.s32.totalorder %s71, 1
      %p362 = scmp.ne.s32.totalorder %s357, %s359
      %p363 = scmp.eq.s32.totalorder %s71, 0
      %p364 = por %p362, %p363
      %p365 = scmp.ne.s32.totalorder %s357, %s359
      %p366 = scmp.eq.s32.totalorder %s76, 1
      %p367 = por %p365, %p366
      %p368 = scmp.ne.s32.totalorder %s359, %s360
      %p369 = scmp.eq.s32.totalorder %s76, 0
      %p370 = por %p368, %p369
      %p371 = scmp.ne.s32.totalorder %s359, %s360
      %p372 = scmp.eq.s32.totalorder %s77, 1
      %p373 = por %p371, %p372
      %p375 = scmp.ne.s32.totalorder %s360, %s374
      %p376 = scmp.eq.s32.totalorder %s77, 0
      %p377 = por %p375, %p376
      %s379 = sadd.s32 %s378, 1
      %p382 = scmp.eq.s32.totalorder %s71, 1
      %p383 = scmp.ne.s32.totalorder %s378, %s380
      %p384 = scmp.eq.s32.totalorder %s71, 0
      %p385 = por %p383, %p384
      %p386 = scmp.ne.s32.totalorder %s378, %s380
      %p387 = scmp.eq.s32.totalorder %s76, 1
      %p388 = por %p386, %p387
      %p389 = scmp.ne.s32.totalorder %s380, %s381
      %p390 = scmp.eq.s32.totalorder %s76, 0
      %p391 = por %p389, %p390
      %p392 = scmp.ne.s32.totalorder %s380, %s381
      %p393 = scmp.eq.s32.totalorder %s77, 1
      %p394 = por %p392, %p393
      %p396 = scmp.ne.s32.totalorder %s381, %s395
      %p397 = scmp.eq.s32.totalorder %s77, 0
      %p398 = por %p396, %p397
      %s400 = sadd.s32 %s399, 1
      %p403 = scmp.eq.s32.totalorder %s71, 1
      %p404 = scmp.ne.s32.totalorder %s399, %s401
      %p405 = scmp.eq.s32.totalorder %s71, 0
      %p406 = por %p404, %p405
      %p407 = scmp.ne.s32.totalorder %s399, %s401
      %p408 = scmp.eq.s32.totalorder %s76, 1
      %p409 = por %p407, %p408
      %p410 = scmp.ne.s32.totalorder %s401, %s402
      %p411 = scmp.eq.s32.totalorder %s76, 0
      %p412 = por %p410, %p411
      %p413 = scmp.ne.s32.totalorder %s401, %s402
      %p414 = scmp.eq.s32.totalorder %s77, 1
      %p415 = por %p413, %p414
      %p417 = scmp.ne.s32.totalorder %s402, %s416
      %p418 = scmp.eq.s32.totalorder %s77, 0
      %p419 = por %p417, %p418
      %s421 = sadd.s32 %s420, 1
      %p424 = scmp.eq.s32.totalorder %s71, 1
      %p425 = scmp.ne.s32.totalorder %s420, %s422
      %p426 = scmp.eq.s32.totalorder %s71, 0
      %p427 = por %p425, %p426
      %p428 = scmp.ne.s32.totalorder %s420, %s422
      %p429 = scmp.eq.s32.totalorder %s76, 1
      %p430 = por %p428, %p429
      %p431 = scmp.ne.s32.totalorder %s422, %s423
      %p432 = scmp.eq.s32.totalorder %s76, 0
      %p433 = por %p431, %p432
      %p434 = scmp.ne.s32.totalorder %s422, %s423
      %p435 = scmp.eq.s32.totalorder %s77, 1
      %p436 = por %p434, %p435
      %p438 = scmp.ne.s32.totalorder %s423, %s437
      %p439 = scmp.eq.s32.totalorder %s77, 0
      %p440 = por %p438, %p439
      %s442 = sadd.s32 %s441, 1
      %p445 = scmp.eq.s32.totalorder %s71, 1
      %p446 = scmp.ne.s32.totalorder %s441, %s443
      %p447 = scmp.eq.s32.totalorder %s71, 0
      %p448 = por %p446, %p447
      %p449 = scmp.ne.s32.totalorder %s441, %s443
      %p450 = scmp.eq.s32.totalorder %s76, 1
      %p451 = por %p449, %p450
      %p452 = scmp.ne.s32.totalorder %s443, %s444
      %p453 = scmp.eq.s32.totalorder %s76, 0
      %p454 = por %p452, %p453
      %p455 = scmp.ne.s32.totalorder %s443, %s444
      %p456 = scmp.eq.s32.totalorder %s77, 1
      %p457 = por %p455, %p456
      %p459 = scmp.ne.s32.totalorder %s444, %s458
      %p460 = scmp.eq.s32.totalorder %s77, 0
      %p461 = por %p459, %p460
      %s463 = sadd.s32 %s462, 1
      %p466 = scmp.eq.s32.totalorder %s71, 1
      %p467 = scmp.ne.s32.totalorder %s462, %s464
      %p468 = scmp.eq.s32.totalorder %s71, 0
      %p469 = por %p467, %p468
      %p470 = scmp.ne.s32.totalorder %s462, %s464
      %p471 = scmp.eq.s32.totalorder %s76, 1
      %p472 = por %p470, %p471
      %p473 = scmp.ne.s32.totalorder %s464, %s465
      %p474 = scmp.eq.s32.totalorder %s76, 0
      %p475 = por %p473, %p474
      %p476 = scmp.ne.s32.totalorder %s464, %s465
      %p477 = scmp.eq.s32.totalorder %s77, 1
      %p478 = por %p476, %p477
      %p480 = scmp.ne.s32.totalorder %s465, %s479
      %p481 = scmp.eq.s32.totalorder %s77, 0
      %p482 = por %p480, %p481
      %s484 = sadd.s32 %s483, 1
      %p487 = scmp.eq.s32.totalorder %s71, 1
      %p488 = scmp.ne.s32.totalorder %s483, %s485
      %p489 = scmp.eq.s32.totalorder %s71, 0
      %p490 = por %p488, %p489
      %p491 = scmp.ne.s32.totalorder %s483, %s485
      %p492 = scmp.eq.s32.totalorder %s76, 1
      %p493 = por %p491, %p492
      %p494 = scmp.ne.s32.totalorder %s485, %s486
      %p495 = scmp.eq.s32.totalorder %s76, 0
      %p496 = por %p494, %p495
      %p497 = scmp.ne.s32.totalorder %s485, %s486
      %p498 = scmp.eq.s32.totalorder %s77, 1
      %p499 = por %p497, %p498
      %p501 = scmp.ne.s32.totalorder %s486, %s500
      %p502 = scmp.eq.s32.totalorder %s77, 0
      %p503 = por %p501, %p502
      %s505 = sadd.s32 %s504, 1
      %p508 = scmp.eq.s32.totalorder %s71, 1
      %p509 = scmp.ne.s32.totalorder %s504, %s506
      %p510 = scmp.eq.s32.totalorder %s71, 0
      %p511 = por %p509, %p510
      %p512 = scmp.ne.s32.totalorder %s504, %s506
      %p513 = scmp.eq.s32.totalorder %s76, 1
      %p514 = por %p512, %p513
      %p515 = scmp.ne.s32.totalorder %s506, %s507
      %p516 = scmp.eq.s32.totalorder %s76, 0
      %p517 = por %p515, %p516
      %p518 = scmp.ne.s32.totalorder %s506, %s507
      %p519 = scmp.eq.s32.totalorder %s77, 1
      %p520 = por %p518, %p519
      %p522 = scmp.ne.s32.totalorder %s507, %s521
      %p523 = scmp.eq.s32.totalorder %s77, 0
      %p524 = por %p522, %p523
      %s526 = sadd.s32 %s525, 1
      %p529 = scmp.eq.s32.totalorder %s71, 1
      %p530 = scmp.ne.s32.totalorder %s525, %s527
      %p531 = scmp.eq.s32.totalorder %s71, 0
      %p532 = por %p530, %p531
      %p533 = scmp.ne.s32.totalorder %s525, %s527
      %p534 = scmp.eq.s32.totalorder %s76, 1
      %p535 = por %p533, %p534
      %p536 = scmp.ne.s32.totalorder %s527, %s528
      %p537 = scmp.eq.s32.totalorder %s76, 0
      %p538 = por %p536, %p537
      %p539 = scmp.ne.s32.totalorder %s527, %s528
      %p540 = scmp.eq.s32.totalorder %s77, 1
      %p541 = por %p539, %p540
      %p543 = scmp.ne.s32.totalorder %s528, %s542
      %p544 = scmp.eq.s32.totalorder %s77, 0
      %p545 = por %p543, %p544
      %s547 = sadd.s32 %s546, 1
      %p550 = scmp.eq.s32.totalorder %s71, 1
      %p551 = scmp.ne.s32.totalorder %s546, %s548
      %p552 = scmp.eq.s32.totalorder %s71, 0
      %p553 = por %p551, %p552
      %p554 = scmp.ne.s32.totalorder %s546, %s548
      %p555 = scmp.eq.s32.totalorder %s76, 1
      %p556 = por %p554, %p555
      %p557 = scmp.ne.s32.totalorder %s548, %s549
      %p558 = scmp.eq.s32.totalorder %s76, 0
      %p559 = por %p557, %p558
      %p560 = scmp.ne.s32.totalorder %s548, %s549
      %p561 = scmp.eq.s32.totalorder %s77, 1
      %p562 = por %p560, %p561
      %p564 = scmp.ne.s32.totalorder %s549, %s563
      %p565 = scmp.eq.s32.totalorder %s77, 0
      %p566 = por %p564, %p565
      %s568 = sadd.s32 %s567, 1
      %p571 = scmp.eq.s32.totalorder %s71, 1
      %p572 = scmp.ne.s32.totalorder %s567, %s569
      %p573 = scmp.eq.s32.totalorder %s71, 0
      %p574 = por %p572, %p573
      %p575 = scmp.ne.s32.totalorder %s567, %s569
      %p576 = scmp.eq.s32.totalorder %s76, 1
      %p577 = por %p575, %p576
      %p578 = scmp.ne.s32.totalorder %s569, %s570
      %p579 = scmp.eq.s32.totalorder %s76, 0
      %p580 = por %p578, %p579
      %p581 = scmp.ne.s32.totalorder %s569, %s570
      %p582 = scmp.eq.s32.totalorder %s77, 1
      %p583 = por %p581, %p582
      %p585 = scmp.ne.s32.totalorder %s570, %s584
      %p586 = scmp.eq.s32.totalorder %s77, 0
      %p587 = por %p585, %p586
      %s589 = sadd.s32 %s588, 1
      %p592 = scmp.eq.s32.totalorder %s71, 1
      %p593 = scmp.ne.s32.totalorder %s588, %s590
      %p594 = scmp.eq.s32.totalorder %s71, 0
      %p595 = por %p593, %p594
      %p596 = scmp.ne.s32.totalorder %s588, %s590
      %p597 = scmp.eq.s32.totalorder %s76, 1
      %p598 = por %p596, %p597
      %p599 = scmp.ne.s32.totalorder %s590, %s591
      %p600 = scmp.eq.s32.totalorder %s76, 0
      %p601 = por %p599, %p600
      %p602 = scmp.ne.s32.totalorder %s590, %s591
      %p603 = scmp.eq.s32.totalorder %s77, 1
      %p604 = por %p602, %p603
      %p606 = scmp.ne.s32.totalorder %s591, %s605
      %p607 = scmp.eq.s32.totalorder %s77, 0
      %p608 = por %p606, %p607
      %s610 = sadd.s32 %s609, 1
      %p613 = scmp.eq.s32.totalorder %s71, 1
      %p614 = scmp.ne.s32.totalorder %s609, %s611
      %p615 = scmp.eq.s32.totalorder %s71, 0
      %p616 = por %p614, %p615
      %p617 = scmp.ne.s32.totalorder %s609, %s611
      %p618 = scmp.eq.s32.totalorder %s76, 1
      %p619 = por %p617, %p618
      %p620 = scmp.ne.s32.totalorder %s611, %s612
      %p621 = scmp.eq.s32.totalorder %s76, 0
      %p622 = por %p620, %p621
      %p623 = scmp.ne.s32.totalorder %s611, %s612
      %p624 = scmp.eq.s32.totalorder %s77, 1
      %p625 = por %p623, %p624
      %p627 = scmp.ne.s32.totalorder %s612, %s626
      %p628 = scmp.eq.s32.totalorder %s77, 0
      %p629 = por %p627, %p628
      %s631 = sadd.s32 %s630, 1
      %p634 = scmp.eq.s32.totalorder %s71, 1
      %p635 = scmp.ne.s32.totalorder %s630, %s632
      %p636 = scmp.eq.s32.totalorder %s71, 0
      %p637 = por %p635, %p636
      %p638 = scmp.ne.s32.totalorder %s630, %s632
      %p639 = scmp.eq.s32.totalorder %s76, 1
      %p640 = por %p638, %p639
      %p641 = scmp.ne.s32.totalorder %s632, %s633
      %p642 = scmp.eq.s32.totalorder %s76, 0
      %p643 = por %p641, %p642
      %p644 = scmp.ne.s32.totalorder %s632, %s633
      %p645 = scmp.eq.s32.totalorder %s77, 1
      %p646 = por %p644, %p645
      %p648 = scmp.ne.s32.totalorder %s633, %s647
      %p649 = scmp.eq.s32.totalorder %s77, 0
      %p650 = por %p648, %p649
      %s652 = sadd.s32 %s651, 1
      %p655 = scmp.eq.s32.totalorder %s71, 1
      %p656 = scmp.ne.s32.totalorder %s651, %s653
      %p657 = scmp.eq.s32.totalorder %s71, 0
      %p658 = por %p656, %p657
      %p659 = scmp.ne.s32.totalorder %s651, %s653
      %p660 = scmp.eq.s32.totalorder %s76, 1
      %p661 = por %p659, %p660
      %p662 = scmp.ne.s32.totalorder %s653, %s654
      %p663 = scmp.eq.s32.totalorder %s76, 0
      %p664 = por %p662, %p663
      %p665 = scmp.ne.s32.totalorder %s653, %s654
      %p666 = scmp.eq.s32.totalorder %s77, 1
      %p667 = por %p665, %p666
      %p669 = scmp.ne.s32.totalorder %s654, %s668
      %p670 = scmp.eq.s32.totalorder %s77, 0
      %p671 = por %p669, %p670
      %s673 = sadd.s32 %s672, 1
      %p676 = scmp.eq.s32.totalorder %s71, 1
      %p677 = scmp.ne.s32.totalorder %s672, %s674
      %p678 = scmp.eq.s32.totalorder %s71, 0
      %p679 = por %p677, %p678
      %p680 = scmp.ne.s32.totalorder %s672, %s674
      %p681 = scmp.eq.s32.totalorder %s76, 1
      %p682 = por %p680, %p681
      %p683 = scmp.ne.s32.totalorder %s674, %s675
      %p684 = scmp.eq.s32.totalorder %s76, 0
      %p685 = por %p683, %p684
      %p686 = scmp.ne.s32.totalorder %s674, %s675
      %p687 = scmp.eq.s32.totalorder %s77, 1
      %p688 = por %p686, %p687
      %p690 = scmp.ne.s32.totalorder %s675, %s689
      %p691 = scmp.eq.s32.totalorder %s77, 0
      %p692 = por %p690, %p691
      %s694 = sadd.s32 %s693, 1
      %p697 = scmp.eq.s32.totalorder %s71, 1
      %p698 = scmp.ne.s32.totalorder %s693, %s695
      %p699 = scmp.eq.s32.totalorder %s71, 0
      %p700 = por %p698, %p699
      %p701 = scmp.ne.s32.totalorder %s693, %s695
      %p702 = scmp.eq.s32.totalorder %s76, 1
      %p703 = por %p701, %p702
      %p704 = scmp.ne.s32.totalorder %s695, %s696
      %p705 = scmp.eq.s32.totalorder %s76, 0
      %p706 = por %p704, %p705
      %p707 = scmp.ne.s32.totalorder %s695, %s696
      %p708 = scmp.eq.s32.totalorder %s77, 1
      %p709 = por %p707, %p708
      %p711 = scmp.ne.s32.totalorder %s696, %s710
      %p712 = scmp.eq.s32.totalorder %s77, 0
      %p713 = por %p711, %p712
      %s714 = ssub.s32 %s71, %s78
      %p715 = scmp.eq.s32.totalorder %s714, 0
      %s717 = sadd.s32 %s716, 1
      %s718 = scalar_select %p715, %s716, %s717
      %p721 = pneg %p715
      %p722 = scmp.eq.s32.totalorder %s71, 1
      %p723 = por %p721, %p722
      %p724 = scmp.ne.s32.totalorder %s716, %s719
      %p725 = scmp.eq.s32.totalorder %s71, 0
      %p726 = por %p724, %p725
      %p727 = scmp.ne.s32.totalorder %s716, %s719
      %p728 = scmp.eq.s32.totalorder %s76, 1
      %p729 = por %p727, %p728
      %p730 = scmp.ne.s32.totalorder %s719, %s720
      %p731 = scmp.eq.s32.totalorder %s76, 0
      %p732 = por %p730, %p731
      %p733 = scmp.ne.s32.totalorder %s719, %s720
      %p734 = scmp.eq.s32.totalorder %s77, 1
      %p735 = por %p733, %p734
      %p737 = scmp.ne.s32.totalorder %s720, %s736
      %p738 = scmp.eq.s32.totalorder %s77, 0
      %p739 = por %p737, %p738
      %p740 = scmp.le.s32.totalorder 1, %s71
      %p741 = scmp.lt.s32.totalorder %s71, 3
      %p742 = pnand %p740, %p741
      %p743 = pneg %p742
      // Predicated region
      $region9: #{tpu_custom_call.1} parent=5 // pred_check
        _
      $region10: #{tpu_custom_call.1} parent=5 // pred_check_branch
        %745 = sbr.rel (%p742) target = $region12
      $region11: #{tpu_custom_call.1} parent=5 // pred_region
        %s746 = ssub.s32 %s71, 1
        // Predicated region
        $region13: #{tpu_custom_call.1} parent=11 // pred_check
          %p747 = pneg %p118
        $region14: #{tpu_custom_call.1} parent=11 // pred_check_branch
          %749 = sbr.rel (%p747) target = $region16
        $region15: #{tpu_custom_call.1} parent=11 // pred_region
          _
        $region16: #{tpu_custom_call.1} parent=11 // pred_fallthru
          _
        // Predicated region
        $region17: #{tpu_custom_call.1} parent=11 // pred_check
          %p750 = pneg %p139
        $region18: #{tpu_custom_call.1} parent=11 // pred_check_branch
          %752 = sbr.rel (%p750) target = $region20
        $region19: #{tpu_custom_call.1} parent=11 // pred_region
          _
        $region20: #{tpu_custom_call.1} parent=11 // pred_fallthru
          _
        // Predicated region
        $region21: #{tpu_custom_call.1} parent=11 // pred_check
          %p753 = pneg %p160
        $region22: #{tpu_custom_call.1} parent=11 // pred_check_branch
          %755 = sbr.rel (%p753) target = $region24
        $region23: #{tpu_custom_call.1} parent=11 // pred_region
          %s757 = ssub.s32 64, 64
          %758 = vsyncadd [#allocation3], %s757
          %s760 = sshll.u32 [#allocation2], 4
          %s761 = int_to_ptr.vmem [resolvable:$true] %s760
          %763 = dma.hbm_to_vmem [thread:$0]  %s7, 64, %s761, [#allocation3]
        $region24: #{tpu_custom_call.1} parent=11 // pred_fallthru
          _
        // Predicated region
        $region25: #{tpu_custom_call.1} parent=11 // pred_check
          %p764 = pneg %p181
        $region26: #{tpu_custom_call.1} parent=11 // pred_check_branch
          %766 = sbr.rel (%p764) target = $region28
        $region27: #{tpu_custom_call.1} parent=11 // pred_region
          _
        $region28: #{tpu_custom_call.1} parent=11 // pred_fallthru
          _
        // Predicated region
        $region29: #{tpu_custom_call.1} parent=11 // pred_check
          %p767 = pneg %p202
        $region30: #{tpu_custom_call.1} parent=11 // pred_check_branch
          %769 = sbr.rel (%p767) target = $region32
        $region31: #{tpu_custom_call.1} parent=11 // pred_region
          _
        $region32: #{tpu_custom_call.1} parent=11 // pred_fallthru
          _
        // Predicated region
        $region33: #{tpu_custom_call.1} parent=11 // pred_check
          %p770 = pneg %p223
        $region34: #{tpu_custom_call.1} parent=11 // pred_check_branch
          %772 = sbr.rel (%p770) target = $region36
        $region35: #{tpu_custom_call.1} parent=11 // pred_region
          _
        $region36: #{tpu_custom_call.1} parent=11 // pred_fallthru
          _
        // Predicated region
        $region37: #{tpu_custom_call.1} parent=11 // pred_check
          %p773 = pneg %p244
        $region38: #{tpu_custom_call.1} parent=11 // pred_check_branch
          %775 = sbr.rel (%p773) target = $region40
        $region39: #{tpu_custom_call.1} parent=11 // pred_region
          _
        $region40: #{tpu_custom_call.1} parent=11 // pred_fallthru
          _
        // Predicated region
        $region41: #{tpu_custom_call.1} parent=11 // pred_check
          %p776 = pneg %p265
        $region42: #{tpu_custom_call.1} parent=11 // pred_check_branch
          %778 = sbr.rel (%p776) target = $region44
        $region43: #{tpu_custom_call.1} parent=11 // pred_region
          _
        $region44: #{tpu_custom_call.1} parent=11 // pred_fallthru
          _
        // Predicated region
        $region45: #{tpu_custom_call.1} parent=11 // pred_check
          %p779 = pneg %p286
        $region46: #{tpu_custom_call.1} parent=11 // pred_check_branch
          %781 = sbr.rel (%p779) target = $region48
        $region47: #{tpu_custom_call.1} parent=11 // pred_region
          _
        $region48: #{tpu_custom_call.1} parent=11 // pred_fallthru
          _
        // Predicated region
        $region49: #{tpu_custom_call.1} parent=11 // pred_check
          %p782 = pneg %p307
        $region50: #{tpu_custom_call.1} parent=11 // pred_check_branch
          %784 = sbr.rel (%p782) target = $region52
        $region51: #{tpu_custom_call.1} parent=11 // pred_region
          _
        $region52: #{tpu_custom_call.1} parent=11 // pred_fallthru
          _
        // Predicated region
        $region53: #{tpu_custom_call.1} parent=11 // pred_check
          %p785 = pneg %p328
        $region54: #{tpu_custom_call.1} parent=11 // pred_check_branch
          %787 = sbr.rel (%p785) target = $region56
        $region55: #{tpu_custom_call.1} parent=11 // pred_region
          _
        $region56: #{tpu_custom_call.1} parent=11 // pred_fallthru
          _
        // Predicated region
        $region57: #{tpu_custom_call.1} parent=11 // pred_check
          %p788 = pneg %p349
        $region58: #{tpu_custom_call.1} parent=11 // pred_check_branch
          %790 = sbr.rel (%p788) target = $region60
        $region59: #{tpu_custom_call.1} parent=11 // pred_region
          _
        $region60: #{tpu_custom_call.1} parent=11 // pred_fallthru
          _
        // Predicated region
        $region61: #{tpu_custom_call.1} parent=11 // pred_check
          %p791 = pneg %p370
        $region62: #{tpu_custom_call.1} parent=11 // pred_check_branch
          %793 = sbr.rel (%p791) target = $region64
        $region63: #{tpu_custom_call.1} parent=11 // pred_region
          _
        $region64: #{tpu_custom_call.1} parent=11 // pred_fallthru
          _
        // Predicated region
        $region65: #{tpu_custom_call.1} parent=11 // pred_check
          %p794 = pneg %p391
        $region66: #{tpu_custom_call.1} parent=11 // pred_check_branch
          %796 = sbr.rel (%p794) target = $region68
        $region67: #{tpu_custom_call.1} parent=11 // pred_region
          _
        $region68: #{tpu_custom_call.1} parent=11 // pred_fallthru
          _
        // Predicated region
        $region69: #{tpu_custom_call.1} parent=11 // pred_check
          %p797 = pneg %p412
        $region70: #{tpu_custom_call.1} parent=11 // pred_check_branch
          %799 = sbr.rel (%p797) target = $region72
        $region71: #{tpu_custom_call.1} parent=11 // pred_region
          _
        $region72: #{tpu_custom_call.1} parent=11 // pred_fallthru
          _
        // Predicated region
        $region73: #{tpu_custom_call.1} parent=11 // pred_check
          %p800 = pneg %p433
        $region74: #{tpu_custom_call.1} parent=11 // pred_check_branch
          %802 = sbr.rel (%p800) target = $region76
        $region75: #{tpu_custom_call.1} parent=11 // pred_region
          _
        $region76: #{tpu_custom_call.1} parent=11 // pred_fallthru
          _
        // Predicated region
        $region77: #{tpu_custom_call.1} parent=11 // pred_check
          %p803 = pneg %p454
        $region78: #{tpu_custom_call.1} parent=11 // pred_check_branch
          %805 = sbr.rel (%p803) target = $region80
        $region79: #{tpu_custom_call.1} parent=11 // pred_region
          _
        $region80: #{tpu_custom_call.1} parent=11 // pred_fallthru
          _
        // Predicated region
        $region81: #{tpu_custom_call.1} parent=11 // pred_check
          %p806 = pneg %p475
        $region82: #{tpu_custom_call.1} parent=11 // pred_check_branch
          %808 = sbr.rel (%p806) target = $region84
        $region83: #{tpu_custom_call.1} parent=11 // pred_region
          _
        $region84: #{tpu_custom_call.1} parent=11 // pred_fallthru
          _
        // Predicated region
        $region85: #{tpu_custom_call.1} parent=11 // pred_check
          %p809 = pneg %p496
        $region86: #{tpu_custom_call.1} parent=11 // pred_check_branch
          %811 = sbr.rel (%p809) target = $region88
        $region87: #{tpu_custom_call.1} parent=11 // pred_region
          _
        $region88: #{tpu_custom_call.1} parent=11 // pred_fallthru
          _
        // Predicated region
        $region89: #{tpu_custom_call.1} parent=11 // pred_check
          %p812 = pneg %p517
        $region90: #{tpu_custom_call.1} parent=11 // pred_check_branch
          %814 = sbr.rel (%p812) target = $region92
        $region91: #{tpu_custom_call.1} parent=11 // pred_region
          _
        $region92: #{tpu_custom_call.1} parent=11 // pred_fallthru
          _
        // Predicated region
        $region93: #{tpu_custom_call.1} parent=11 // pred_check
          %p815 = pneg %p538
        $region94: #{tpu_custom_call.1} parent=11 // pred_check_branch
          %817 = sbr.rel (%p815) target = $region96
        $region95: #{tpu_custom_call.1} parent=11 // pred_region
          _
        $region96: #{tpu_custom_call.1} parent=11 // pred_fallthru
          _
        // Predicated region
        $region97: #{tpu_custom_call.1} parent=11 // pred_check
          %p818 = pneg %p559
        $region98: #{tpu_custom_call.1} parent=11 // pred_check_branch
          %820 = sbr.rel (%p818) target = $region100
        $region99: #{tpu_custom_call.1} parent=11 // pred_region
          _
        $region100: #{tpu_custom_call.1} parent=11 // pred_fallthru
          _
        // Predicated region
        $region101: #{tpu_custom_call.1} parent=11 // pred_check
          %p821 = pneg %p580
        $region102: #{tpu_custom_call.1} parent=11 // pred_check_branch
          %823 = sbr.rel (%p821) target = $region104
        $region103: #{tpu_custom_call.1} parent=11 // pred_region
          _
        $region104: #{tpu_custom_call.1} parent=11 // pred_fallthru
          _
        // Predicated region
        $region105: #{tpu_custom_call.1} parent=11 // pred_check
          %p824 = pneg %p601
        $region106: #{tpu_custom_call.1} parent=11 // pred_check_branch
          %826 = sbr.rel (%p824) target = $region108
        $region107: #{tpu_custom_call.1} parent=11 // pred_region
          _
        $region108: #{tpu_custom_call.1} parent=11 // pred_fallthru
          _
        // Predicated region
        $region109: #{tpu_custom_call.1} parent=11 // pred_check
          %p827 = pneg %p622
        $region110: #{tpu_custom_call.1} parent=11 // pred_check_branch
          %829 = sbr.rel (%p827) target = $region112
        $region111: #{tpu_custom_call.1} parent=11 // pred_region
          _
        $region112: #{tpu_custom_call.1} parent=11 // pred_fallthru
          _
        // Predicated region
        $region113: #{tpu_custom_call.1} parent=11 // pred_check
          %p830 = pneg %p643
        $region114: #{tpu_custom_call.1} parent=11 // pred_check_branch
          %832 = sbr.rel (%p830) target = $region116
        $region115: #{tpu_custom_call.1} parent=11 // pred_region
          _
        $region116: #{tpu_custom_call.1} parent=11 // pred_fallthru
          _
        // Predicated region
        $region117: #{tpu_custom_call.1} parent=11 // pred_check
          %p833 = pneg %p664
        $region118: #{tpu_custom_call.1} parent=11 // pred_check_branch
          %835 = sbr.rel (%p833) target = $region120
        $region119: #{tpu_custom_call.1} parent=11 // pred_region
          _
        $region120: #{tpu_custom_call.1} parent=11 // pred_fallthru
          _
        // Predicated region
        $region121: #{tpu_custom_call.1} parent=11 // pred_check
          %p836 = pneg %p685
        $region122: #{tpu_custom_call.1} parent=11 // pred_check_branch
          %838 = sbr.rel (%p836) target = $region124
        $region123: #{tpu_custom_call.1} parent=11 // pred_region
          _
        $region124: #{tpu_custom_call.1} parent=11 // pred_fallthru
          _
        // Predicated region
        $region125: #{tpu_custom_call.1} parent=11 // pred_check
          %p839 = pneg %p706
        $region126: #{tpu_custom_call.1} parent=11 // pred_check_branch
          %841 = sbr.rel (%p839) target = $region128
        $region127: #{tpu_custom_call.1} parent=11 // pred_region
          _
        $region128: #{tpu_custom_call.1} parent=11 // pred_fallthru
          _
      $region12: #{tpu_custom_call.1} parent=5 // pred_fallthru
        _
      %p842 = scmp.lt.s32.totalorder %s71, 2
      // Predicated region
      $region129: #{tpu_custom_call.1} parent=5 // pred_check
        %p843 = pneg %p842
      $region130: #{tpu_custom_call.1} parent=5 // pred_check_branch
        %845 = sbr.rel (%p843) target = $region132
      $region131: #{tpu_custom_call.1} parent=5 // pred_region
        // Predicated region
        $region133: #{tpu_custom_call.1} parent=131 // pred_check
          %p846 = pneg %p91
        $region134: #{tpu_custom_call.1} parent=131 // pred_check_branch
          %848 = sbr.rel (%p846) target = $region136
        $region135: #{tpu_custom_call.1} parent=131 // pred_region
          %p849 = scmp.lt.s32.totalorder %s71, 1
          %s850 = scalar_select %p849, %s71, 1
          %s851 = smul.addr %s850, 2
          %s852 = smul.addr %s851, 8
          %s853 = scalar_lea.vmem %s1, %s852
        $region136: #{tpu_custom_call.1} parent=131 // pred_fallthru
          _
      $region132: #{tpu_custom_call.1} parent=5 // pred_fallthru
        _
      %p854 = scmp.le.s32.totalorder 1, %s71
      %p855 = scmp.lt.s32.totalorder %s71, 3
      %p856 = pnand %p854, %p855
      %p857 = pneg %p856
      // Predicated region
      $region137: #{tpu_custom_call.1} parent=5 // pred_check
        _
      $region138: #{tpu_custom_call.1} parent=5 // pred_check_branch
        %859 = sbr.rel (%p856) target = $region140
      $region139: #{tpu_custom_call.1} parent=5 // pred_region
        %s860 = ssub.s32 %s71, 1
        // Predicated region
        $region141: #{tpu_custom_call.1} parent=139 // pred_check
          %p861 = pneg %p160
        $region142: #{tpu_custom_call.1} parent=139 // pred_check_branch
          %863 = sbr.rel (%p861) target = $region144
        $region143: #{tpu_custom_call.1} parent=139 // pred_region
          %864 = dma.done [#allocation3], 64
        $region144: #{tpu_custom_call.1} parent=139 // pred_fallthru
          _
        %p865 = scmp.lt.s32.totalorder %s76, 1
        %s866 = scalar_select %p865, %s76, 1
        %s867 = smul.addr %s866, 2
        %s868 = smul.addr %s867, 8
        %s869 = scalar_lea.vmem %s1, %s868
        %p870 = pneg %p97
        %p871 = pneg %p94
        %p872 = pneg %p118
        %p873 = pneg %p115
        %p874 = pneg %p139
        %p875 = pneg %p136
        %p876 = pneg %p160
        %p877 = pneg %p157
        %p878 = pneg %p181
        %p879 = pneg %p178
        %p880 = pneg %p202
        %p881 = pneg %p199
        %p882 = pneg %p223
        %p883 = pneg %p220
        %p884 = pneg %p244
        %p885 = pneg %p241
        %p886 = pneg %p265
        %p887 = pneg %p262
        %p888 = pneg %p286
        %p889 = pneg %p283
        %p890 = pneg %p307
        %p891 = pneg %p304
        %p892 = pneg %p328
        %p893 = pneg %p325
        %p894 = pneg %p349
        %p895 = pneg %p346
        %p896 = pneg %p370
        %p897 = pneg %p367
        %p898 = pneg %p391
        %p899 = pneg %p388
        %p900 = pneg %p412
        %p901 = pneg %p409
        %p902 = pneg %p433
        %p903 = pneg %p430
        %p904 = pneg %p454
        %p905 = pneg %p451
        %p906 = pneg %p475
        %p907 = pneg %p472
        %p908 = pneg %p496
        %p909 = pneg %p493
        %p910 = pneg %p517
        %p911 = pneg %p514
        %p912 = pneg %p538
        %p913 = pneg %p535
        %p914 = pneg %p559
        %p915 = pneg %p556
        %p916 = pneg %p580
        %p917 = pneg %p577
        %p918 = pneg %p601
        %p919 = pneg %p598
        %p920 = pneg %p622
        %p921 = pneg %p619
        %p922 = pneg %p643
        %p923 = pneg %p640
        %p924 = pneg %p664
        %p925 = pneg %p661
        %p926 = pneg %p685
        %p927 = pneg %p682
        %p928 = pneg %p706
        %p929 = pneg %p703
        %p930 = pneg %p732
        %p931 = pneg %p729
        %s932 = sand.u32 %s719, 1
        %s933 = scalar_lea.sflag [#allocation4], %s932
        %s934 = sand.u32 %s719, 1
        %s935 = smul.addr %s934, 4
        %s936 = scalar_lea.vmem [#allocation5], %s935
        %p937 = scmp.lt.s32.totalorder %s76, 1
        %s938 = scalar_select %p937, %s76, 1
        %s939 = smul.addr %s938, 2
        %s940 = smul.addr %s939, 8
        %s941 = scalar_lea.vmem %s1, %s940
        %v943 = vld [vmem:[%s941] sm:$0xff]
        %v944 = vld [vmem:[%s941 + $0x8] sm:$0xff]
        %945 = vrot.lane.b32.xlu0 %v943, 17
        %v946 = vpop.permute.xlu0 %945
        %947 = vrot.lane.b32.xlu0 %v944, 17
        %v948 = vpop.permute.xlu0 %947
        %v949 = vlaneseq
        %v950 = vand.u32 %v949, 127
        %vm951 = vcmp.lt.s32.totalorder %v950, 17
        %v952 = vsel %vm951, %v946, %v948
        %v953 = vsel %vm951, %v948, %v946
        %v954 = vld [vmem:[%s47] ss:$8 sm:$0x3]
        %v956 = vlaneseq
        %v957 = vshrl.u32 %v956, 7
        %v958 = vsub.s32 0, %v957
        %v959 = vrot.slane %v954, %v958
        %v960 = vlaneseq
        %v961 = vshrl.u32 %v960, 7
        %v962 = vsub.s32 1, %v961
        %v963 = vrot.slane %v954, %v962
        %v966 = vmul.f32 %v953, %v959
        %v967 = vmul.f32 %v952, %v963
        %968 = vrot.lane.b32.xlu0 %v943, 16
        %v969 = vpop.permute.xlu0 %968
        %970 = vrot.lane.b32.xlu0 %v944, 16
        %v971 = vpop.permute.xlu0 %970
        %vm972 = vcmp.lt.s32.totalorder %v950, 16
        %v973 = vsel %vm972, %v969, %v971
        %v974 = vsel %vm972, %v971, %v969
        %s975 = scalar_lea.vmem %s47, 1
        %v976 = vld [vmem:[%s975] ss:$8 sm:$0x3]
        %v978 = vlaneseq
        %v979 = vshrl.u32 %v978, 7
        %v980 = vsub.s32 0, %v979
        %v981 = vrot.slane %v976, %v980
        %v982 = vlaneseq
        %v983 = vshrl.u32 %v982, 7
        %v984 = vsub.s32 1, %v983
        %v985 = vrot.slane %v976, %v984
        %v988 = vmul.f32 %v974, %v981
        %v989 = vmul.f32 %v973, %v985
        %990 = vrot.lane.b32.xlu0 %v943, 15
        %v991 = vpop.permute.xlu0 %990
        %992 = vrot.lane.b32.xlu0 %v944, 15
        %v993 = vpop.permute.xlu0 %992
        %vm994 = vcmp.lt.s32.totalorder %v950, 15
        %v995 = vsel %vm994, %v991, %v993
        %v996 = vsel %vm994, %v993, %v991
        %s997 = scalar_lea.vmem %s47, 2
        %v998 = vld [vmem:[%s997] ss:$8 sm:$0x3]
        %v1000 = vlaneseq
        %v1001 = vshrl.u32 %v1000, 7
        %v1002 = vsub.s32 0, %v1001
        %v1003 = vrot.slane %v998, %v1002
        %v1004 = vlaneseq
        %v1005 = vshrl.u32 %v1004, 7
        %v1006 = vsub.s32 1, %v1005
        %v1007 = vrot.slane %v998, %v1006
        %v1010 = vmul.f32 %v996, %v1003
        %v1011 = vmul.f32 %v995, %v1007
        %1012 = vrot.lane.b32.xlu0 %v943, 1
        %v1013 = vpop.permute.xlu0 %1012
        %1014 = vrot.lane.b32.xlu0 %v944, 1
        %v1015 = vpop.permute.xlu0 %1014
        %vm1016 = vcmp.lt.s32.totalorder %v950, 1
        %v1017 = vsel %vm1016, %v1013, %v1015
        %v1018 = vsel %vm1016, %v1015, %v1013
        %s1019 = scalar_lea.vmem %s47, 3
        %v1020 = vld [vmem:[%s1019] ss:$8 sm:$0x3]
        %v1022 = vlaneseq
        %v1023 = vshrl.u32 %v1022, 7
        %v1024 = vsub.s32 0, %v1023
        %v1025 = vrot.slane %v1020, %v1024
        %v1026 = vlaneseq
        %v1027 = vshrl.u32 %v1026, 7
        %v1028 = vsub.s32 1, %v1027
        %v1029 = vrot.slane %v1020, %v1028
        %v1032 = vmul.f32 %v1018, %v1025
        %v1033 = vmul.f32 %v1017, %v1029
        %s1034 = scalar_lea.vmem %s47, 4
        %v1035 = vld [vmem:[%s1034] ss:$8 sm:$0x3]
        %v1037 = vlaneseq
        %v1038 = vshrl.u32 %v1037, 7
        %v1039 = vsub.s32 0, %v1038
        %v1040 = vrot.slane %v1035, %v1039
        %v1041 = vlaneseq
        %v1042 = vshrl.u32 %v1041, 7
        %v1043 = vsub.s32 1, %v1042
        %v1044 = vrot.slane %v1035, %v1043
        %v1047 = vmul.f32 %v943, %v1040
        %v1048 = vmul.f32 %v944, %v1044
        %1049 = vrot.lane.b32.xlu0 %v943, 127
        %v1050 = vpop.permute.xlu0 %1049
        %1051 = vrot.lane.b32.xlu0 %v944, 127
        %v1052 = vpop.permute.xlu0 %1051
        %vm1053 = vcmp.lt.s32.totalorder %v950, 127
        %v1054 = vsel %vm1053, %v1050, %v1052
        %v1055 = vsel %vm1053, %v1052, %v1050
        %s1056 = scalar_lea.vmem %s47, 5
        %v1057 = vld [vmem:[%s1056] ss:$8 sm:$0x3]
        %v1059 = vlaneseq
        %v1060 = vshrl.u32 %v1059, 7
        %v1061 = vsub.s32 0, %v1060
        %v1062 = vrot.slane %v1057, %v1061
        %v1063 = vlaneseq
        %v1064 = vshrl.u32 %v1063, 7
        %v1065 = vsub.s32 1, %v1064
        %v1066 = vrot.slane %v1057, %v1065
        %v1069 = vmul.f32 %v1054, %v1062
        %v1070 = vmul.f32 %v1055, %v1066
        %1071 = vrot.lane.b32.xlu0 %v943, 113
        %v1072 = vpop.permute.xlu0 %1071
        %1073 = vrot.lane.b32.xlu0 %v944, 113
        %v1074 = vpop.permute.xlu0 %1073
        %vm1075 = vcmp.lt.s32.totalorder %v950, 113
        %v1076 = vsel %vm1075, %v1072, %v1074
        %v1077 = vsel %vm1075, %v1074, %v1072
        %s1078 = scalar_lea.vmem %s47, 6
        %v1079 = vld [vmem:[%s1078] ss:$8 sm:$0x3]
        %v1081 = vlaneseq
        %v1082 = vshrl.u32 %v1081, 7
        %v1083 = vsub.s32 0, %v1082
        %v1084 = vrot.slane %v1079, %v1083
        %v1085 = vlaneseq
        %v1086 = vshrl.u32 %v1085, 7
        %v1087 = vsub.s32 1, %v1086
        %v1088 = vrot.slane %v1079, %v1087
        %v1091 = vmul.f32 %v1076, %v1084
        %v1092 = vmul.f32 %v1077, %v1088
        %1093 = vrot.lane.b32.xlu0 %v943, 112
        %v1094 = vpop.permute.xlu0 %1093
        %1095 = vrot.lane.b32.xlu0 %v944, 112
        %v1096 = vpop.permute.xlu0 %1095
        %vm1097 = vcmp.lt.s32.totalorder %v950, 112
        %v1098 = vsel %vm1097, %v1094, %v1096
        %v1099 = vsel %vm1097, %v1096, %v1094
        %s1100 = scalar_lea.vmem %s47, 7
        %v1101 = vld [vmem:[%s1100] ss:$8 sm:$0x3]
        %v1103 = vlaneseq
        %v1104 = vshrl.u32 %v1103, 7
        %v1105 = vsub.s32 0, %v1104
        %v1106 = vrot.slane %v1101, %v1105
        %v1107 = vlaneseq
        %v1108 = vshrl.u32 %v1107, 7
        %v1109 = vsub.s32 1, %v1108
        %v1110 = vrot.slane %v1101, %v1109
        %v1113 = vmul.f32 %v1098, %v1106
        %v1114 = vmul.f32 %v1099, %v1110
        %1115 = vrot.lane.b32.xlu0 %v943, 111
        %v1116 = vpop.permute.xlu0 %1115
        %1117 = vrot.lane.b32.xlu0 %v944, 111
        %v1118 = vpop.permute.xlu0 %1117
        %vm1119 = vcmp.lt.s32.totalorder %v950, 111
        %v1120 = vsel %vm1119, %v1116, %v1118
        %v1121 = vsel %vm1119, %v1118, %v1116
        %s1122 = scalar_lea.vmem %s47, 16
        %v1123 = vld [vmem:[%s1122] ss:$8 sm:$0x3]
        %v1125 = vlaneseq
        %v1126 = vshrl.u32 %v1125, 7
        %v1127 = vsub.s32 0, %v1126
        %v1128 = vrot.slane %v1123, %v1127
        %v1129 = vlaneseq
        %v1130 = vshrl.u32 %v1129, 7
        %v1131 = vsub.s32 1, %v1130
        %v1132 = vrot.slane %v1123, %v1131
        %v1135 = vmul.f32 %v1120, %v1128
        %v1136 = vmul.f32 %v1121, %v1132
        %v1137 = vpack.c.bf16 %v988, %v966
        %v1138 = vpack.c.bf16 %v989, %v967
        %v1139 = vpack.c.bf16 %v1032, %v1010
        %v1140 = vpack.c.bf16 %v1033, %v1011
        %v1141 = vpack.c.bf16 %v1069, %v1047
        %v1142 = vpack.c.bf16 %v1070, %v1048
        %v1143 = vpack.c.bf16 %v1113, %v1091
        %v1144 = vpack.c.bf16 %v1114, %v1092
        %v1145 = vpack.c.bf16 %v1135, %v1135
        %v1146 = vpack.c.bf16 %v1136, %v1136
        %v1147 = vld [vmem:[%s3] sm:$0xf]
        %v1148 = vld [vmem:[%s5] sm:$0xff]
        %1150 = vset.pattern.permute.xlu0 0
        %1151 = vperm.xlu0 %1150, %v1148
        %v1152 = vpop.permute.xlu0 %1151
        %vm1154 = vcmask 588800
        %v1156 = vsel %vm1154, %v1147, 0
        %vm1158 = vcmask 1043456
        %v1160 = vsel %vm1158, %v1145, 0
        %v1163 = vsel %vm1158, %v1146, 0
        %1165 = vmatprep.subr.bf16.mxu0 0
        %1166 = vmatpush1.bf16.msra.mxu0 0
        %1167 = vmatprep.subr.bf16.mxu0 0
        %1168 = vmatpush1.bf16.msra.mxu0 0
        %1169 = vmatprep.subr.bf16.mxu0 0
        %1170 = vmatpush1.bf16.msra.mxu0 0
        %1171 = vmatprep.subr.bf16.mxu0 %v1163
        %1172 = vmatpush1.bf16.msra.mxu0 %v1160
        %1173 = vmatprep.subr.bf16.mxu0 %v1144
        %1174 = vmatpush1.bf16.msra.mxu0 %v1143
        %1175 = vmatprep.subr.bf16.mxu0 %v1142
        %1176 = vmatpush1.bf16.msra.mxu0 %v1141
        %1177 = vmatprep.subr.bf16.mxu0 %v1140
        %1178 = vmatpush1.bf16.msra.mxu0 %v1139
        %1179 = vmatprep.subr.bf16.mxu0 %v1138
        %1180 = vmatpush1.bf16.msra.mxu0 %v1137
        %1181 = vmatprep.subr.bf16.mxu0 0
        %1182 = vmatpush2.bf16.msra.mxu0 0
        %1183 = vmatprep.subr.bf16.mxu0 0
        %1184 = vmatpush2.bf16.msra.mxu0 0
        %1185 = vmatprep.subr.bf16.mxu0 0
        %1186 = vmatpush2.bf16.msra.mxu0 0
        %1187 = vmatprep.subr.bf16.mxu0 0
        %1188 = vmatpush2.bf16.msra.mxu0 0
        %1189 = vmatprep.subr.bf16.mxu0 0
        %1190 = vmatpush2.bf16.msra.mxu0 0
        %1191 = vmatprep.subr.bf16.mxu0 0
        %1192 = vmatpush2.bf16.msra.mxu0 0
        %1193 = vmatprep.subr.bf16.mxu0 0
        %1194 = vmatpush2.bf16.msra.mxu0 0
        %1195 = vmatprep.subr.bf16.mxu0 0
        %1196 = vmatpush2.bf16.msra.mxu0 0
        %1197 = vmatprep.mubr.bf16.mxu0 0
        %1198 = vmatmul.mubr.bf16.gmra.mxu0 %v1156
        %v1199 = vpop.f32.mrf.mxu0
        %v1200 = vadd.f32 %v1152, %v1199
        %v1201 = vpop.f32.mrf.mxu0
        %v1202 = vadd.f32 %v1152, %v1201
        %v1203 = vpop.f32.mrf.mxu0
        %v1204 = vpop.f32.mrf.mxu0
        %1205 = vdwg.mxu0
        %v1206 = vmax.f32 %v1200, 0.0
        %v1207 = vmax.f32 %v1202, 0.0
        %1208 = vrot.lane.b32.xlu0 %v1206, 17
        %v1209 = vpop.permute.xlu0 %1208
        %1210 = vrot.lane.b32.xlu0 %v1207, 17
        %v1211 = vpop.permute.xlu0 %1210
        %v1212 = vsel %vm951, %v1209, %v1211
        %v1213 = vsel %vm951, %v1211, %v1209
        %v1214 = vmul.f32 %v1213, %v959
        %v1215 = vmul.f32 %v1212, %v963
        %1216 = vrot.lane.b32.xlu0 %v1206, 16
        %v1217 = vpop.permute.xlu0 %1216
        %1218 = vrot.lane.b32.xlu0 %v1207, 16
        %v1219 = vpop.permute.xlu0 %1218
        %v1220 = vsel %vm972, %v1217, %v1219
        %v1221 = vsel %vm972, %v1219, %v1217
        %v1222 = vmul.f32 %v1221, %v981
        %v1223 = vmul.f32 %v1220, %v985
        %1224 = vrot.lane.b32.xlu0 %v1206, 15
        %v1225 = vpop.permute.xlu0 %1224
        %1226 = vrot.lane.b32.xlu0 %v1207, 15
        %v1227 = vpop.permute.xlu0 %1226
        %v1228 = vsel %vm994, %v1225, %v1227
        %v1229 = vsel %vm994, %v1227, %v1225
        %v1230 = vmul.f32 %v1229, %v1003
        %v1231 = vmul.f32 %v1228, %v1007
        %1232 = vrot.lane.b32.xlu0 %v1206, 1
        %v1233 = vpop.permute.xlu0 %1232
        %1234 = vrot.lane.b32.xlu0 %v1207, 1
        %v1235 = vpop.permute.xlu0 %1234
        %v1236 = vsel %vm1016, %v1233, %v1235
        %v1237 = vsel %vm1016, %v1235, %v1233
        %v1238 = vmul.f32 %v1237, %v1025
        %v1239 = vmul.f32 %v1236, %v1029
        %v1240 = vmul.f32 %v1206, %v1040
        %v1241 = vmul.f32 %v1207, %v1044
        %1242 = vrot.lane.b32.xlu0 %v1206, 127
        %v1243 = vpop.permute.xlu0 %1242
        %1244 = vrot.lane.b32.xlu0 %v1207, 127
        %v1245 = vpop.permute.xlu0 %1244
        %v1246 = vsel %vm1053, %v1243, %v1245
        %v1247 = vsel %vm1053, %v1245, %v1243
        %v1248 = vmul.f32 %v1246, %v1062
        %v1249 = vmul.f32 %v1247, %v1066
        %1250 = vrot.lane.b32.xlu0 %v1206, 113
        %v1251 = vpop.permute.xlu0 %1250
        %1252 = vrot.lane.b32.xlu0 %v1207, 113
        %v1253 = vpop.permute.xlu0 %1252
        %v1254 = vsel %vm1075, %v1251, %v1253
        %v1255 = vsel %vm1075, %v1253, %v1251
        %v1256 = vmul.f32 %v1254, %v1084
        %v1257 = vmul.f32 %v1255, %v1088
        %1258 = vrot.lane.b32.xlu0 %v1206, 112
        %v1259 = vpop.permute.xlu0 %1258
        %1260 = vrot.lane.b32.xlu0 %v1207, 112
        %v1261 = vpop.permute.xlu0 %1260
        %v1262 = vsel %vm1097, %v1259, %v1261
        %v1263 = vsel %vm1097, %v1261, %v1259
        %v1264 = vmul.f32 %v1262, %v1106
        %v1265 = vmul.f32 %v1263, %v1110
        %1266 = vrot.lane.b32.xlu0 %v1206, 111
        %v1267 = vpop.permute.xlu0 %1266
        %1268 = vrot.lane.b32.xlu0 %v1207, 111
        %v1269 = vpop.permute.xlu0 %1268
        %v1270 = vsel %vm1119, %v1267, %v1269
        %v1271 = vsel %vm1119, %v1269, %v1267
        %v1272 = vmul.f32 %v1270, %v1128
        %v1273 = vmul.f32 %v1271, %v1132
        %v1274 = vpack.c.bf16 %v1222, %v1214
        %v1275 = vpack.c.bf16 %v1223, %v1215
        %v1276 = vpack.c.bf16 %v1238, %v1230
        %v1277 = vpack.c.bf16 %v1239, %v1231
        %v1278 = vpack.c.bf16 %v1248, %v1240
        %v1279 = vpack.c.bf16 %v1249, %v1241
        %v1280 = vpack.c.bf16 %v1264, %v1256
        %v1281 = vpack.c.bf16 %v1265, %v1257
        %v1282 = vpack.c.bf16 %v1272, %v1272
        %v1283 = vpack.c.bf16 %v1273, %v1273
        %v1284 = vld [vmem:[#allocation2] sm:$0xf]
        %v1285 = vld [vmem:[%s9] sm:$0xff]
        %1287 = vset.pattern.permute.xlu0 0
        %1288 = vperm.xlu0 %1287, %v1285
        %v1289 = vpop.permute.xlu0 %1288
        %v1292 = vsel %vm1154, %v1284, 0
        %v1295 = vsel %vm1158, %v1282, 0
        %v1298 = vsel %vm1158, %v1283, 0
        %1300 = vmatprep.subr.bf16.mxu0 0
        %1301 = vmatpush1.bf16.msra.mxu0 0
        %1302 = vmatprep.subr.bf16.mxu0 0
        %1303 = vmatpush1.bf16.msra.mxu0 0
        %1304 = vmatprep.subr.bf16.mxu0 0
        %1305 = vmatpush1.bf16.msra.mxu0 0
        %1306 = vmatprep.subr.bf16.mxu0 %v1298
        %1307 = vmatpush1.bf16.msra.mxu0 %v1295
        %1308 = vmatprep.subr.bf16.mxu0 %v1281
        %1309 = vmatpush1.bf16.msra.mxu0 %v1280
        %1310 = vmatprep.subr.bf16.mxu0 %v1279
        %1311 = vmatpush1.bf16.msra.mxu0 %v1278
        %1312 = vmatprep.subr.bf16.mxu0 %v1277
        %1313 = vmatpush1.bf16.msra.mxu0 %v1276
        %1314 = vmatprep.subr.bf16.mxu0 %v1275
        %1315 = vmatpush1.bf16.msra.mxu0 %v1274
        %1316 = vmatprep.subr.bf16.mxu0 0
        %1317 = vmatpush2.bf16.msra.mxu0 0
        %1318 = vmatprep.subr.bf16.mxu0 0
        %1319 = vmatpush2.bf16.msra.mxu0 0
        %1320 = vmatprep.subr.bf16.mxu0 0
        %1321 = vmatpush2.bf16.msra.mxu0 0
        %1322 = vmatprep.subr.bf16.mxu0 0
        %1323 = vmatpush2.bf16.msra.mxu0 0
        %1324 = vmatprep.subr.bf16.mxu0 0
        %1325 = vmatpush2.bf16.msra.mxu0 0
        %1326 = vmatprep.subr.bf16.mxu0 0
        %1327 = vmatpush2.bf16.msra.mxu0 0
        %1328 = vmatprep.subr.bf16.mxu0 0
        %1329 = vmatpush2.bf16.msra.mxu0 0
        %1330 = vmatprep.subr.bf16.mxu0 0
        %1331 = vmatpush2.bf16.msra.mxu0 0
        %1332 = vmatprep.mubr.bf16.mxu0 0
        %1333 = vmatmul.mubr.bf16.gmra.mxu0 %v1292
        %v1334 = vpop.f32.mrf.mxu0
        %v1335 = vadd.f32 %v1289, %v1334
        %v1336 = vpop.f32.mrf.mxu0
        %v1337 = vadd.f32 %v1289, %v1336
        %v1338 = vpop.f32.mrf.mxu0
        %v1339 = vpop.f32.mrf.mxu0
        %1340 = vdwg.mxu0
        %v1341 = vmax.f32 %v1335, 0.0
        %v1342 = vmax.f32 %v1337, 0.0
        %1343 = vrot.lane.b32.xlu0 %v1341, 127
        %v1344 = vpop.permute.xlu0 %1343
        %1345 = vrot.lane.b32.xlu0 %v1342, 127
        %v1346 = vpop.permute.xlu0 %1345
        %v1347 = vsel %vm1053, %v1344, %v1346
        %v1348 = vsel %vm1053, %v1346, %v1344
        %v1349 = vmax.f32 %v1341, %v1347
        %v1350 = vmax.f32 %v1342, %v1348
        %1351 = vrot.lane.b32.xlu0 %v1349, 112
        %v1352 = vpop.permute.xlu0 %1351
        %1353 = vrot.lane.b32.xlu0 %v1350, 112
        %v1354 = vpop.permute.xlu0 %1353
        %v1355 = vsel %vm1097, %v1352, %v1354
        %v1356 = vsel %vm1097, %v1354, %v1352
        %v1357 = vmax.f32 %v1349, %v1355
        %v1358 = vmax.f32 %v1350, %v1356
        %v1359 = vpack.c.bf16 %v1357, %v1357
        %v1360 = vpack.c.bf16 %v1358, %v1358
        %v1361 = vld [vmem:[%s53] sm:$0xf]
        %v1362 = vld [vmem:[%s53 + $0x4] sm:$0xf]
        %v1363 = vld [vmem:[%s53 + $0x8] sm:$0xf]
        %v1364 = vld [vmem:[%s53 + $0xc] sm:$0xf]
        %v1365 = vld [vmem:[%s53 + $0x10] sm:$0xf]
        %v1366 = vld [vmem:[%s53 + $0x14] sm:$0xf]
        %v1367 = vld [vmem:[%s53 + $0x18] sm:$0xf]
        %v1368 = vld [vmem:[%s53 + $0x1c] sm:$0xf]
        %v1369 = vld [vmem:[%s53 + $0x20] sm:$0xf]
        %v1370 = vld [vmem:[%s53 + $0x24] sm:$0xf]
        %v1371 = vld [vmem:[%s53 + $0x28] sm:$0xf]
        %v1372 = vld [vmem:[%s53 + $0x2c] sm:$0xf]
        %v1373 = vld [vmem:[%s53 + $0x30] sm:$0xf]
        %v1374 = vld [vmem:[%s53 + $0x34] sm:$0xf]
        %v1375 = vld [vmem:[%s53 + $0x38] sm:$0xf]
        %v1376 = vld [vmem:[%s53 + $0x3c] sm:$0xf]
        %v1377 = vld [vmem:[%s53 + $0x40] sm:$0xf]
        %v1378 = vld [vmem:[%s53 + $0x44] sm:$0xf]
        %v1379 = vld [vmem:[%s53 + $0x48] sm:$0xf]
        %v1380 = vld [vmem:[%s53 + $0x4c] sm:$0xf]
        %v1381 = vld [vmem:[%s53 + $0x50] sm:$0xf]
        %v1382 = vld [vmem:[%s53 + $0x54] sm:$0xf]
        %v1383 = vld [vmem:[%s53 + $0x58] sm:$0xf]
        %v1384 = vld [vmem:[%s53 + $0x5c] sm:$0xf]
        %v1385 = vld [vmem:[%s53 + $0x60] sm:$0xf]
        %v1386 = vld [vmem:[%s53 + $0x64] sm:$0xf]
        %v1387 = vld [vmem:[%s53 + $0x68] sm:$0xf]
        %v1388 = vld [vmem:[%s53 + $0x6c] sm:$0xf]
        %v1389 = vld [vmem:[%s53 + $0x70] sm:$0xf]
        %v1390 = vld [vmem:[%s53 + $0x74] sm:$0xf]
        %v1391 = vld [vmem:[%s53 + $0x78] sm:$0xf]
        %v1392 = vld [vmem:[%s53 + $0x7c] sm:$0xf]
        %v1425 = vunpack.c.l.b16 %v1361
        %v1426 = vunpack.c.l.b16 %v1362
        %v1427 = vunpack.c.l.b16 %v1363
        %v1428 = vunpack.c.l.b16 %v1364
        %v1429 = vunpack.c.l.b16 %v1365
        %v1430 = vunpack.c.l.b16 %v1366
        %v1431 = vunpack.c.l.b16 %v1367
        %v1432 = vunpack.c.l.b16 %v1368
        %v1433 = vunpack.c.l.b16 %v1369
        %v1434 = vunpack.c.l.b16 %v1370
        %v1435 = vunpack.c.l.b16 %v1371
        %v1436 = vunpack.c.l.b16 %v1372
        %v1437 = vunpack.c.l.b16 %v1373
        %v1438 = vunpack.c.l.b16 %v1374
        %v1439 = vunpack.c.l.b16 %v1375
        %v1440 = vunpack.c.l.b16 %v1376
        %v1441 = vunpack.c.l.b16 %v1377
        %v1442 = vunpack.c.l.b16 %v1378
        %v1443 = vunpack.c.l.b16 %v1379
        %v1444 = vunpack.c.l.b16 %v1380
        %v1445 = vunpack.c.l.b16 %v1381
        %v1446 = vunpack.c.l.b16 %v1382
        %v1447 = vunpack.c.l.b16 %v1383
        %v1448 = vunpack.c.l.b16 %v1384
        %v1449 = vunpack.c.l.b16 %v1385
        %v1450 = vunpack.c.l.b16 %v1386
        %v1451 = vunpack.c.l.b16 %v1387
        %v1452 = vunpack.c.l.b16 %v1388
        %v1453 = vunpack.c.l.b16 %v1389
        %v1454 = vunpack.c.l.b16 %v1390
        %v1455 = vunpack.c.l.b16 %v1391
        %v1456 = vunpack.c.l.b16 %v1392
        %v1457 = vpack.c.b16 %v1426, %v1425
        %v1458 = vpack.c.b16 %v1428, %v1427
        %v1459 = vpack.c.b16 %v1430, %v1429
        %v1460 = vpack.c.b16 %v1432, %v1431
        %v1461 = vpack.c.b16 %v1434, %v1433
        %v1462 = vpack.c.b16 %v1436, %v1435
        %v1463 = vpack.c.b16 %v1438, %v1437
        %v1464 = vpack.c.b16 %v1440, %v1439
        %v1465 = vpack.c.b16 %v1442, %v1441
        %v1466 = vpack.c.b16 %v1444, %v1443
        %v1467 = vpack.c.b16 %v1446, %v1445
        %v1468 = vpack.c.b16 %v1448, %v1447
        %v1469 = vpack.c.b16 %v1450, %v1449
        %v1470 = vpack.c.b16 %v1452, %v1451
        %v1471 = vpack.c.b16 %v1454, %v1453
        %v1472 = vpack.c.b16 %v1456, %v1455
        %1489 = vmatprep.subr.bf16.mxu0 0
        %1490 = vmatpush1.bf16.msra.mxu0 %v1464
        %1491 = vmatprep.subr.bf16.mxu0 0
        %1492 = vmatpush1.bf16.msra.mxu0 %v1463
        %1493 = vmatprep.subr.bf16.mxu0 0
        %1494 = vmatpush1.bf16.msra.mxu0 %v1462
        %1495 = vmatprep.subr.bf16.mxu0 0
        %1496 = vmatpush1.bf16.msra.mxu0 %v1461
        %1497 = vmatprep.subr.bf16.mxu0 0
        %1498 = vmatpush1.bf16.msra.mxu0 %v1460
        %1499 = vmatprep.subr.bf16.mxu0 0
        %1500 = vmatpush1.bf16.msra.mxu0 %v1459
        %1501 = vmatprep.subr.bf16.mxu0 0
        %1502 = vmatpush1.bf16.msra.mxu0 %v1458
        %1503 = vmatprep.subr.bf16.mxu0 0
        %1504 = vmatpush1.bf16.msra.mxu0 %v1457
        %1505 = vmatprep.subr.bf16.mxu0 0
        %1506 = vmatpush2.bf16.msra.mxu0 %v1472
        %1507 = vmatprep.subr.bf16.mxu0 0
        %1508 = vmatpush2.bf16.msra.mxu0 %v1471
        %1509 = vmatprep.subr.bf16.mxu0 0
        %1510 = vmatpush2.bf16.msra.mxu0 %v1470
        %1511 = vmatprep.subr.bf16.mxu0 0
        %1512 = vmatpush2.bf16.msra.mxu0 %v1469
        %1513 = vmatprep.subr.bf16.mxu0 0
        %1514 = vmatpush2.bf16.msra.mxu0 %v1468
        %1515 = vmatprep.subr.bf16.mxu0 0
        %1516 = vmatpush2.bf16.msra.mxu0 %v1467
        %1517 = vmatprep.subr.bf16.mxu0 0
        %1518 = vmatpush2.bf16.msra.mxu0 %v1466
        %1519 = vmatprep.subr.bf16.mxu0 0
        %1520 = vmatpush2.bf16.msra.mxu0 %v1465
        %1521 = vmatprep.mubr.bf16.mxu0 %v1360
        %1522 = vmatmul.mubr.bf16.gmra.mxu0 %v1359
        %v1523 = vpop.f32.mrf.mxu0
        %v1524 = vadd.f32 0.0, %v1523
        %v1525 = vpop.f32.mrf.mxu0
        %v1526 = vpop.f32.mrf.mxu0
        %v1527 = vpop.f32.mrf.mxu0
        %1528 = vdwg.mxu0
        %1530 = vrot.lane.b32.xlu0 %v1524, 9
        %v1531 = vpop.permute.xlu0 %1530
        %vm1533 = vcmask 72704
        %v1534 = vsel %vm1533, 0.0, %v1531
        %v1535 = vld [vmem:[%s49] sm:$0x1]
        %v1536 = vlaneseq
        %v1537 = vshrl.u32 %v1536, 7
        %v1538 = vsub.s32 0, %v1537
        %v1539 = vrot.slane %v1535, %v1538
        %v1540 = vmul.f32 %v1534, %v1539
        %1541 = vrot.lane.b32.xlu0 %v1524, 8
        %v1542 = vpop.permute.xlu0 %1541
        %vm1544 = vcmask 64512
        %v1545 = vsel %vm1544, 0.0, %v1542
        %v1546 = vld [vmem:[%s49 + $0x1] sm:$0x1]
        %v1547 = vlaneseq
        %v1548 = vshrl.u32 %v1547, 7
        %v1549 = vsub.s32 0, %v1548
        %v1550 = vrot.slane %v1546, %v1549
        %v1551 = vmul.f32 %v1545, %v1550
        %1552 = vrot.lane.b32.xlu0 %v1524, 7
        %v1553 = vpop.permute.xlu0 %1552
        %vm1555 = vcmask 56320
        %v1556 = vsel %vm1555, 0.0, %v1553
        %v1557 = vld [vmem:[%s49 + $0x2] sm:$0x1]
        %v1558 = vlaneseq
        %v1559 = vshrl.u32 %v1558, 7
        %v1560 = vsub.s32 0, %v1559
        %v1561 = vrot.slane %v1557, %v1560
        %v1562 = vmul.f32 %v1556, %v1561
        %1563 = vrot.lane.b32.xlu0 %v1524, 1
        %v1564 = vpop.permute.xlu0 %1563
        %vm1566 = vcmask 7168
        %v1567 = vsel %vm1566, 0.0, %v1564
        %v1568 = vld [vmem:[%s49 + $0x3] sm:$0x1]
        %v1569 = vlaneseq
        %v1570 = vshrl.u32 %v1569, 7
        %v1571 = vsub.s32 0, %v1570
        %v1572 = vrot.slane %v1568, %v1571
        %v1573 = vmul.f32 %v1567, %v1572
        %v1574 = vld [vmem:[%s49 + $0x4] sm:$0x1]
        %v1575 = vlaneseq
        %v1576 = vshrl.u32 %v1575, 7
        %v1577 = vsub.s32 0, %v1576
        %v1578 = vrot.slane %v1574, %v1577
        %v1579 = vmul.f32 %v1524, %v1578
        %1580 = vrot.lane.b32.xlu0 %v1524, 127
        %v1581 = vpop.permute.xlu0 %1580
        %vm1583 = vcmask 515072
        %v1584 = vsel %vm1583, %v1581, 0.0
        %v1585 = vld [vmem:[%s49 + $0x5] sm:$0x1]
        %v1586 = vlaneseq
        %v1587 = vshrl.u32 %v1586, 7
        %v1588 = vsub.s32 0, %v1587
        %v1589 = vrot.slane %v1585, %v1588
        %v1590 = vmul.f32 %v1584, %v1589
        %1591 = vrot.lane.b32.xlu0 %v1524, 121
        %v1592 = vpop.permute.xlu0 %1591
        %vm1594 = vcmask 465920
        %v1595 = vsel %vm1594, %v1592, 0.0
        %v1596 = vld [vmem:[%s49 + $0x6] sm:$0x1]
        %v1597 = vlaneseq
        %v1598 = vshrl.u32 %v1597, 7
        %v1599 = vsub.s32 0, %v1598
        %v1600 = vrot.slane %v1596, %v1599
        %v1601 = vmul.f32 %v1595, %v1600
        %1602 = vrot.lane.b32.xlu0 %v1524, 120
        %v1603 = vpop.permute.xlu0 %1602
        %vm1605 = vcmask 457728
        %v1606 = vsel %vm1605, %v1603, 0.0
        %v1607 = vld [vmem:[%s49 + $0x7] sm:$0x1]
        %v1608 = vlaneseq
        %v1609 = vshrl.u32 %v1608, 7
        %v1610 = vsub.s32 0, %v1609
        %v1611 = vrot.slane %v1607, %v1610
        %v1612 = vmul.f32 %v1606, %v1611
        %1613 = vrot.lane.b32.xlu0 %v1524, 119
        %v1614 = vpop.permute.xlu0 %1613
        %vm1616 = vcmask 449536
        %v1617 = vsel %vm1616, %v1614, 0.0
        %v1618 = vld [vmem:[%s49 + $0x8] sm:$0x1]
        %v1619 = vlaneseq
        %v1620 = vshrl.u32 %v1619, 7
        %v1621 = vsub.s32 0, %v1620
        %v1622 = vrot.slane %v1618, %v1621
        %v1623 = vmul.f32 %v1617, %v1622
        %v1624 = vpack.c.bf16 %v1551, %v1540
        %v1625 = vpack.c.bf16 %v1573, %v1562
        %v1626 = vpack.c.bf16 %v1590, %v1579
        %v1627 = vpack.c.bf16 %v1612, %v1601
        %v1628 = vpack.c.bf16 %v1623, %v1623
        %v1629 = vld [vmem:[%s11] sm:$0xf]
        %v1630 = vld [vmem:[%s11 + $0x4] sm:$0xf]
        %v1631 = vld [vmem:[%s13] sm:$0xff]
        %v1632 = vld [vmem:[%s13 + $0x8] sm:$0xff]
        %1634 = vset.pattern.permute.xlu0 0
        %1635 = vperm.xlu0 %1634, %v1631
        %v1636 = vpop.permute.xlu0 %1635
        %1639 = vset.pattern.permute.xlu0 0
        %1640 = vperm.xlu0 %1639, %v1632
        %v1641 = vpop.permute.xlu0 %1640
        %v1645 = vunpack.c.l.b16 %v1629
        %v1646 = vunpack.c.l.b16 %v1630
        %v1647 = vpack.c.b16 %v1646, %v1645
        %v1649 = vsel %vm1154, %v1647, 0
        %v1652 = vsel %vm1158, %v1628, 0
        %1654 = vmatprep.subr.bf16.mxu0 0
        %1655 = vmatpush1.bf16.msra.mxu0 0
        %1656 = vmatprep.subr.bf16.mxu0 0
        %1657 = vmatpush1.bf16.msra.mxu0 0
        %1658 = vmatprep.subr.bf16.mxu0 0
        %1659 = vmatpush1.bf16.msra.mxu0 0
        %1660 = vmatprep.subr.bf16.mxu0 0
        %1661 = vmatpush1.bf16.msra.mxu0 %v1652
        %1662 = vmatprep.subr.bf16.mxu0 0
        %1663 = vmatpush1.bf16.msra.mxu0 %v1627
        %1664 = vmatprep.subr.bf16.mxu0 0
        %1665 = vmatpush1.bf16.msra.mxu0 %v1626
        %1666 = vmatprep.subr.bf16.mxu0 0
        %1667 = vmatpush1.bf16.msra.mxu0 %v1625
        %1668 = vmatprep.subr.bf16.mxu0 0
        %1669 = vmatpush1.bf16.msra.mxu0 %v1624
        %1670 = vmatprep.subr.bf16.mxu0 0
        %1671 = vmatpush2.bf16.msra.mxu0 0
        %1672 = vmatprep.subr.bf16.mxu0 0
        %1673 = vmatpush2.bf16.msra.mxu0 0
        %1674 = vmatprep.subr.bf16.mxu0 0
        %1675 = vmatpush2.bf16.msra.mxu0 0
        %1676 = vmatprep.subr.bf16.mxu0 0
        %1677 = vmatpush2.bf16.msra.mxu0 0
        %1678 = vmatprep.subr.bf16.mxu0 0
        %1679 = vmatpush2.bf16.msra.mxu0 0
        %1680 = vmatprep.subr.bf16.mxu0 0
        %1681 = vmatpush2.bf16.msra.mxu0 0
        %1682 = vmatprep.subr.bf16.mxu0 0
        %1683 = vmatpush2.bf16.msra.mxu0 0
        %1684 = vmatprep.subr.bf16.mxu0 0
        %1685 = vmatpush2.bf16.msra.mxu0 0
        %1686 = vmatprep.mubr.bf16.mxu0 0
        %1687 = vmatmul.mubr.bf16.gmra.mxu0 %v1649
        %v1688 = vpop.f32.mrf.mxu0
        %v1689 = vadd.f32 %v1636, %v1688
        %v1690 = vpop.f32.mrf.mxu0
        %v1691 = vpop.f32.mrf.mxu0
        %v1692 = vadd.f32 %v1641, %v1691
        %v1693 = vpop.f32.mrf.mxu0
        %1694 = vdwg.mxu0
        %v1695 = vmax.f32 %v1689, 0.0
        %v1696 = vmax.f32 %v1692, 0.0
        %1699 = vrot.lane.b32.xlu0 %v1695, 9
        %v1700 = vpop.permute.xlu0 %1699
        %1701 = vrot.lane.b32.xlu0 %v1696, 9
        %v1702 = vpop.permute.xlu0 %1701
        %v1705 = vsel %vm1533, 0.0, %v1700
        %v1706 = vsel %vm1533, 0.0, %v1702
        %v1707 = vmul.f32 %v1705, %v1539
        %v1708 = vmul.f32 %v1706, %v1539
        %1709 = vrot.lane.b32.xlu0 %v1695, 8
        %v1710 = vpop.permute.xlu0 %1709
        %1711 = vrot.lane.b32.xlu0 %v1696, 8
        %v1712 = vpop.permute.xlu0 %1711
        %v1715 = vsel %vm1544, 0.0, %v1710
        %v1716 = vsel %vm1544, 0.0, %v1712
        %v1717 = vmul.f32 %v1715, %v1550
        %v1718 = vmul.f32 %v1716, %v1550
        %1719 = vrot.lane.b32.xlu0 %v1695, 7
        %v1720 = vpop.permute.xlu0 %1719
        %1721 = vrot.lane.b32.xlu0 %v1696, 7
        %v1722 = vpop.permute.xlu0 %1721
        %v1725 = vsel %vm1555, 0.0, %v1720
        %v1726 = vsel %vm1555, 0.0, %v1722
        %v1727 = vmul.f32 %v1725, %v1561
        %v1728 = vmul.f32 %v1726, %v1561
        %1729 = vrot.lane.b32.xlu0 %v1695, 1
        %v1730 = vpop.permute.xlu0 %1729
        %1731 = vrot.lane.b32.xlu0 %v1696, 1
        %v1732 = vpop.permute.xlu0 %1731
        %v1735 = vsel %vm1566, 0.0, %v1730
        %v1736 = vsel %vm1566, 0.0, %v1732
        %v1737 = vmul.f32 %v1735, %v1572
        %v1738 = vmul.f32 %v1736, %v1572
        %v1739 = vmul.f32 %v1695, %v1578
        %v1740 = vmul.f32 %v1696, %v1578
        %1741 = vrot.lane.b32.xlu0 %v1695, 127
        %v1742 = vpop.permute.xlu0 %1741
        %1743 = vrot.lane.b32.xlu0 %v1696, 127
        %v1744 = vpop.permute.xlu0 %1743
        %v1747 = vsel %vm1583, %v1742, 0.0
        %v1748 = vsel %vm1583, %v1744, 0.0
        %v1749 = vmul.f32 %v1747, %v1589
        %v1750 = vmul.f32 %v1748, %v1589
        %1751 = vrot.lane.b32.xlu0 %v1695, 121
        %v1752 = vpop.permute.xlu0 %1751
        %1753 = vrot.lane.b32.xlu0 %v1696, 121
        %v1754 = vpop.permute.xlu0 %1753
        %v1757 = vsel %vm1594, %v1752, 0.0
        %v1758 = vsel %vm1594, %v1754, 0.0
        %v1759 = vmul.f32 %v1757, %v1600
        %v1760 = vmul.f32 %v1758, %v1600
        %1761 = vrot.lane.b32.xlu0 %v1695, 120
        %v1762 = vpop.permute.xlu0 %1761
        %1763 = vrot.lane.b32.xlu0 %v1696, 120
        %v1764 = vpop.permute.xlu0 %1763
        %v1767 = vsel %vm1605, %v1762, 0.0
        %v1768 = vsel %vm1605, %v1764, 0.0
        %v1769 = vmul.f32 %v1767, %v1611
        %v1770 = vmul.f32 %v1768, %v1611
        %1771 = vrot.lane.b32.xlu0 %v1695, 119
        %v1772 = vpop.permute.xlu0 %1771
        %1773 = vrot.lane.b32.xlu0 %v1696, 119
        %v1774 = vpop.permute.xlu0 %1773
        %v1777 = vsel %vm1616, %v1772, 0.0
        %v1778 = vsel %vm1616, %v1774, 0.0
        %v1779 = vmul.f32 %v1777, %v1622
        %v1780 = vmul.f32 %v1778, %v1622
        %v1781 = vpack.c.bf16 %v1708, %v1707
        %v1782 = vpack.c.bf16 %v1718, %v1717
        %v1783 = vpack.c.bf16 %v1728, %v1727
        %v1784 = vpack.c.bf16 %v1738, %v1737
        %v1785 = vpack.c.bf16 %v1740, %v1739
        %v1786 = vpack.c.bf16 %v1750, %v1749
        %v1787 = vpack.c.bf16 %v1760, %v1759
        %v1788 = vpack.c.bf16 %v1770, %v1769
        %v1789 = vpack.c.bf16 %v1780, %v1779
        %v1790 = vld [vmem:[%s15] sm:$0xff]
        %v1791 = vld [vmem:[%s15 + $0x8] sm:$0xff]
        %v1792 = vld [vmem:[%s17] sm:$0xff]
        %v1793 = vld [vmem:[%s17 + $0x8] sm:$0xff]
        %1795 = vset.pattern.permute.xlu0 0
        %1796 = vperm.xlu0 %1795, %v1792
        %v1797 = vpop.permute.xlu0 %1796
        %1800 = vset.pattern.permute.xlu0 0
        %1801 = vperm.xlu0 %1800, %v1793
        %v1802 = vpop.permute.xlu0 %1801
        %v1806 = vunpack.c.l.b16 %v1790
        %v1807 = vunpack.c.h.b16 %v1790
        %v1808 = vunpack.c.l.b16 %v1791
        %v1809 = vunpack.c.h.b16 %v1791
        %v1810 = vpack.c.b16 %v1808, %v1806
        %v1811 = vpack.c.b16 %v1809, %v1807
        %vm1813 = vcmask 130048
        %v1815 = vsel %vm1813, %v1811, 0
        %1817 = vmatprep.subr.bf16.mxu0 0
        %1818 = vmatpush1.bf16.msra.mxu0 %v1788
        %1819 = vmatprep.subr.bf16.mxu0 0
        %1820 = vmatpush1.bf16.msra.mxu0 %v1787
        %1821 = vmatprep.subr.bf16.mxu0 0
        %1822 = vmatpush1.bf16.msra.mxu0 %v1786
        %1823 = vmatprep.subr.bf16.mxu0 0
        %1824 = vmatpush1.bf16.msra.mxu0 %v1785
        %1825 = vmatprep.subr.bf16.mxu0 0
        %1826 = vmatpush1.bf16.msra.mxu0 %v1784
        %1827 = vmatprep.subr.bf16.mxu0 0
        %1828 = vmatpush1.bf16.msra.mxu0 %v1783
        %1829 = vmatprep.subr.bf16.mxu0 0
        %1830 = vmatpush1.bf16.msra.mxu0 %v1782
        %1831 = vmatprep.subr.bf16.mxu0 0
        %1832 = vmatpush1.bf16.msra.mxu0 %v1781
        %1833 = vmatprep.subr.bf16.mxu0 0
        %1834 = vmatpush2.bf16.msra.mxu0 0
        %1835 = vmatprep.subr.bf16.mxu0 0
        %1836 = vmatpush2.bf16.msra.mxu0 0
        %1837 = vmatprep.subr.bf16.mxu0 0
        %1838 = vmatpush2.bf16.msra.mxu0 0
        %1839 = vmatprep.subr.bf16.mxu0 0
        %1840 = vmatpush2.bf16.msra.mxu0 0
        %1841 = vmatprep.subr.bf16.mxu0 0
        %1842 = vmatpush2.bf16.msra.mxu0 0
        %1843 = vmatprep.subr.bf16.mxu0 0
        %1844 = vmatpush2.bf16.msra.mxu0 0
        %1845 = vmatprep.subr.bf16.mxu0 0
        %1846 = vmatpush2.bf16.msra.mxu0 0
        %1847 = vmatprep.subr.bf16.mxu0 0
        %1848 = vmatpush2.bf16.msra.mxu0 %v1789
        %1849 = vmatprep.mubr.bf16.mxu0 %v1815
        %1850 = vmatmul.mubr.bf16.gmra.mxu0 %v1810
        %v1851 = vpop.f32.mrf.mxu0
        %v1852 = vadd.f32 %v1797, %v1851
        %v1853 = vpop.f32.mrf.mxu0
        %v1854 = vpop.f32.mrf.mxu0
        %v1855 = vadd.f32 %v1802, %v1854
        %v1856 = vpop.f32.mrf.mxu0
        %1857 = vdwg.mxu0
        %v1858 = vmax.f32 %v1852, 0.0
        %v1859 = vmax.f32 %v1855, 0.0
        %1862 = vrot.lane.b32.xlu0 %v1858, 127
        %v1863 = vpop.permute.xlu0 %1862
        %1864 = vrot.lane.b32.xlu0 %v1859, 127
        %v1865 = vpop.permute.xlu0 %1864
        %v1868 = vsel %vm1583, %v1863, 0.0
        %v1869 = vsel %vm1583, %v1865, 0.0
        %v1870 = vmax.f32 %v1858, %v1868
        %v1871 = vmax.f32 %v1859, %v1869
        %1874 = vrot.lane.b32.xlu0 %v1870, 120
        %v1875 = vpop.permute.xlu0 %1874
        %1876 = vrot.lane.b32.xlu0 %v1871, 120
        %v1877 = vpop.permute.xlu0 %1876
        %v1880 = vsel %vm1605, %v1875, 0.0
        %v1881 = vsel %vm1605, %v1877, 0.0
        %v1882 = vmax.f32 %v1870, %v1880
        %v1883 = vmax.f32 %v1871, %v1881
        %v1884 = vpack.c.bf16 %v1883, %v1882
        %v1885 = vld [vmem:[%s55] sm:$0xf]
        %v1886 = vld [vmem:[%s55 + $0x4] sm:$0xf]
        %v1887 = vld [vmem:[%s55 + $0x8] sm:$0xf]
        %v1888 = vld [vmem:[%s55 + $0xc] sm:$0xf]
        %v1889 = vld [vmem:[%s55 + $0x10] sm:$0xf]
        %v1890 = vld [vmem:[%s55 + $0x14] sm:$0xf]
        %v1891 = vld [vmem:[%s55 + $0x18] sm:$0xf]
        %v1892 = vld [vmem:[%s55 + $0x1c] sm:$0xf]
        %v1901 = vunpack.c.l.b16 %v1885
        %v1902 = vunpack.c.l.b16 %v1886
        %v1903 = vunpack.c.l.b16 %v1887
        %v1904 = vunpack.c.l.b16 %v1888
        %v1905 = vunpack.c.l.b16 %v1889
        %v1906 = vunpack.c.l.b16 %v1890
        %v1907 = vunpack.c.l.b16 %v1891
        %v1908 = vunpack.c.l.b16 %v1892
        %v1909 = vpack.c.b16 %v1902, %v1901
        %v1910 = vpack.c.b16 %v1904, %v1903
        %v1911 = vpack.c.b16 %v1906, %v1905
        %v1912 = vpack.c.b16 %v1908, %v1907
        %vm1917 = vcmask 523264
        %v1919 = vsel %vm1917, %v1884, 0
        %1921 = vmatprep.subr.bf16.mxu0 0
        %1922 = vmatpush1.bf16.msra.mxu0 0
        %1923 = vmatprep.subr.bf16.mxu0 0
        %1924 = vmatpush1.bf16.msra.mxu0 0
        %1925 = vmatprep.subr.bf16.mxu0 0
        %1926 = vmatpush1.bf16.msra.mxu0 0
        %1927 = vmatprep.subr.bf16.mxu0 0
        %1928 = vmatpush1.bf16.msra.mxu0 0
        %1929 = vmatprep.subr.bf16.mxu0 0
        %1930 = vmatpush1.bf16.msra.mxu0 %v1912
        %1931 = vmatprep.subr.bf16.mxu0 0
        %1932 = vmatpush1.bf16.msra.mxu0 %v1911
        %1933 = vmatprep.subr.bf16.mxu0 0
        %1934 = vmatpush1.bf16.msra.mxu0 %v1910
        %1935 = vmatprep.subr.bf16.mxu0 0
        %1936 = vmatpush1.bf16.msra.mxu0 %v1909
        %1937 = vmatprep.subr.bf16.mxu0 0
        %1938 = vmatpush2.bf16.msra.mxu0 0
        %1939 = vmatprep.subr.bf16.mxu0 0
        %1940 = vmatpush2.bf16.msra.mxu0 0
        %1941 = vmatprep.subr.bf16.mxu0 0
        %1942 = vmatpush2.bf16.msra.mxu0 0
        %1943 = vmatprep.subr.bf16.mxu0 0
        %1944 = vmatpush2.bf16.msra.mxu0 0
        %1945 = vmatprep.subr.bf16.mxu0 0
        %1946 = vmatpush2.bf16.msra.mxu0 0
        %1947 = vmatprep.subr.bf16.mxu0 0
        %1948 = vmatpush2.bf16.msra.mxu0 0
        %1949 = vmatprep.subr.bf16.mxu0 0
        %1950 = vmatpush2.bf16.msra.mxu0 0
        %1951 = vmatprep.subr.bf16.mxu0 0
        %1952 = vmatpush2.bf16.msra.mxu0 0
        %1953 = vmatprep.mubr.bf16.mxu0 0
        %1954 = vmatmul.mubr.bf16.gmra.mxu0 %v1919
        %v1955 = vpop.f32.mrf.mxu0
        %v1956 = vadd.f32 0.0, %v1955
        %v1957 = vpop.f32.mrf.mxu0
        %v1958 = vpop.f32.mrf.mxu0
        %v1959 = vadd.f32 0.0, %v1958
        %v1960 = vpop.f32.mrf.mxu0
        %1961 = vdwg.mxu0
        %1964 = vrot.lane.b32.xlu0 %v1956, 5
        %v1965 = vpop.permute.xlu0 %1964
        %1966 = vrot.lane.b32.xlu0 %v1959, 5
        %v1967 = vpop.permute.xlu0 %1966
        %vm1970 = vcmask 39936
        %v1971 = vsel %vm1970, 0.0, %v1965
        %v1972 = vsel %vm1970, 0.0, %v1967
        %v1973 = vld [vmem:[%s51] sm:$0x1]
        %v1974 = vlaneseq
        %v1975 = vshrl.u32 %v1974, 7
        %v1976 = vsub.s32 0, %v1975
        %v1977 = vrot.slane %v1973, %v1976
        %v1978 = vmul.f32 %v1971, %v1977
        %v1979 = vmul.f32 %v1972, %v1977
        %1980 = vrot.lane.b32.xlu0 %v1956, 4
        %v1981 = vpop.permute.xlu0 %1980
        %1982 = vrot.lane.b32.xlu0 %v1959, 4
        %v1983 = vpop.permute.xlu0 %1982
        %vm1986 = vcmask 31744
        %v1987 = vsel %vm1986, 0.0, %v1981
        %v1988 = vsel %vm1986, 0.0, %v1983
        %v1989 = vld [vmem:[%s51 + $0x1] sm:$0x1]
        %v1990 = vlaneseq
        %v1991 = vshrl.u32 %v1990, 7
        %v1992 = vsub.s32 0, %v1991
        %v1993 = vrot.slane %v1989, %v1992
        %v1994 = vmul.f32 %v1987, %v1993
        %v1995 = vmul.f32 %v1988, %v1993
        %1996 = vrot.lane.b32.xlu0 %v1956, 3
        %v1997 = vpop.permute.xlu0 %1996
        %1998 = vrot.lane.b32.xlu0 %v1959, 3
        %v1999 = vpop.permute.xlu0 %1998
        %vm2002 = vcmask 23552
        %v2003 = vsel %vm2002, 0.0, %v1997
        %v2004 = vsel %vm2002, 0.0, %v1999
        %v2005 = vld [vmem:[%s51 + $0x2] sm:$0x1]
        %v2006 = vlaneseq
        %v2007 = vshrl.u32 %v2006, 7
        %v2008 = vsub.s32 0, %v2007
        %v2009 = vrot.slane %v2005, %v2008
        %v2010 = vmul.f32 %v2003, %v2009
        %v2011 = vmul.f32 %v2004, %v2009
        %2012 = vrot.lane.b32.xlu0 %v1956, 1
        %v2013 = vpop.permute.xlu0 %2012
        %2014 = vrot.lane.b32.xlu0 %v1959, 1
        %v2015 = vpop.permute.xlu0 %2014
        %v2018 = vsel %vm1566, 0.0, %v2013
        %v2019 = vsel %vm1566, 0.0, %v2015
        %v2020 = vld [vmem:[%s51 + $0x3] sm:$0x1]
        %v2021 = vlaneseq
        %v2022 = vshrl.u32 %v2021, 7
        %v2023 = vsub.s32 0, %v2022
        %v2024 = vrot.slane %v2020, %v2023
        %v2025 = vmul.f32 %v2018, %v2024
        %v2026 = vmul.f32 %v2019, %v2024
        %v2027 = vld [vmem:[%s51 + $0x4] sm:$0x1]
        %v2028 = vlaneseq
        %v2029 = vshrl.u32 %v2028, 7
        %v2030 = vsub.s32 0, %v2029
        %v2031 = vrot.slane %v2027, %v2030
        %v2032 = vmul.f32 %v1956, %v2031
        %v2033 = vmul.f32 %v1959, %v2031
        %2034 = vrot.lane.b32.xlu0 %v1956, 127
        %v2035 = vpop.permute.xlu0 %2034
        %2036 = vrot.lane.b32.xlu0 %v1959, 127
        %v2037 = vpop.permute.xlu0 %2036
        %vm2040 = vcmask 121856
        %v2041 = vsel %vm2040, %v2035, 0.0
        %v2042 = vsel %vm2040, %v2037, 0.0
        %v2043 = vld [vmem:[%s51 + $0x5] sm:$0x1]
        %v2044 = vlaneseq
        %v2045 = vshrl.u32 %v2044, 7
        %v2046 = vsub.s32 0, %v2045
        %v2047 = vrot.slane %v2043, %v2046
        %v2048 = vmul.f32 %v2041, %v2047
        %v2049 = vmul.f32 %v2042, %v2047
        %2050 = vrot.lane.b32.xlu0 %v1956, 125
        %v2051 = vpop.permute.xlu0 %2050
        %2052 = vrot.lane.b32.xlu0 %v1959, 125
        %v2053 = vpop.permute.xlu0 %2052
        %vm2056 = vcmask 105472
        %v2057 = vsel %vm2056, %v2051, 0.0
        %v2058 = vsel %vm2056, %v2053, 0.0
        %v2059 = vld [vmem:[%s51 + $0x6] sm:$0x1]
        %v2060 = vlaneseq
        %v2061 = vshrl.u32 %v2060, 7
        %v2062 = vsub.s32 0, %v2061
        %v2063 = vrot.slane %v2059, %v2062
        %v2064 = vmul.f32 %v2057, %v2063
        %v2065 = vmul.f32 %v2058, %v2063
        %2066 = vrot.lane.b32.xlu0 %v1956, 124
        %v2067 = vpop.permute.xlu0 %2066
        %2068 = vrot.lane.b32.xlu0 %v1959, 124
        %v2069 = vpop.permute.xlu0 %2068
        %vm2072 = vcmask 97280
        %v2073 = vsel %vm2072, %v2067, 0.0
        %v2074 = vsel %vm2072, %v2069, 0.0
        %v2075 = vld [vmem:[%s51 + $0x7] sm:$0x1]
        %v2076 = vlaneseq
        %v2077 = vshrl.u32 %v2076, 7
        %v2078 = vsub.s32 0, %v2077
        %v2079 = vrot.slane %v2075, %v2078
        %v2080 = vmul.f32 %v2073, %v2079
        %v2081 = vmul.f32 %v2074, %v2079
        %2082 = vrot.lane.b32.xlu0 %v1956, 123
        %v2083 = vpop.permute.xlu0 %2082
        %2084 = vrot.lane.b32.xlu0 %v1959, 123
        %v2085 = vpop.permute.xlu0 %2084
        %vm2088 = vcmask 89088
        %v2089 = vsel %vm2088, %v2083, 0.0
        %v2090 = vsel %vm2088, %v2085, 0.0
        %v2091 = vld [vmem:[%s51 + $0x8] sm:$0x1]
        %v2092 = vlaneseq
        %v2093 = vshrl.u32 %v2092, 7
        %v2094 = vsub.s32 0, %v2093
        %v2095 = vrot.slane %v2091, %v2094
        %v2096 = vmul.f32 %v2089, %v2095
        %v2097 = vmul.f32 %v2090, %v2095
        %v2098 = vpack.c.bf16 %v1979, %v1978
        %v2099 = vpack.c.bf16 %v1995, %v1994
        %v2100 = vpack.c.bf16 %v2011, %v2010
        %v2101 = vpack.c.bf16 %v2026, %v2025
        %v2102 = vpack.c.bf16 %v2033, %v2032
        %v2103 = vpack.c.bf16 %v2049, %v2048
        %v2104 = vpack.c.bf16 %v2065, %v2064
        %v2105 = vpack.c.bf16 %v2081, %v2080
        %v2106 = vpack.c.bf16 %v2097, %v2096
        %v2107 = vld [vmem:[%s19] sm:$0xff]
        %v2108 = vld [vmem:[%s19 + $0x8] sm:$0xff]
        %v2109 = vld [vmem:[%s19 + $0x10] sm:$0xff]
        %v2110 = vld [vmem:[%s19 + $0x18] sm:$0xff]
        %v2111 = vld [vmem:[%s21] sm:$0xff]
        %v2112 = vld [vmem:[%s21 + $0x8] sm:$0xff]
        %v2113 = vld [vmem:[%s21 + $0x10] sm:$0xff]
        %v2114 = vld [vmem:[%s21 + $0x18] sm:$0xff]
        %2116 = vset.pattern.permute.xlu0 0
        %2117 = vperm.xlu0 %2116, %v2111
        %v2118 = vpop.permute.xlu0 %2117
        %2121 = vset.pattern.permute.xlu0 0
        %2122 = vperm.xlu0 %2121, %v2112
        %v2123 = vpop.permute.xlu0 %2122
        %2126 = vset.pattern.permute.xlu0 0
        %2127 = vperm.xlu0 %2126, %v2113
        %v2128 = vpop.permute.xlu0 %2127
        %2131 = vset.pattern.permute.xlu0 0
        %2132 = vperm.xlu0 %2131, %v2114
        %v2133 = vpop.permute.xlu0 %2132
        %v2139 = vunpack.c.l.b16 %v2107
        %v2140 = vunpack.c.h.b16 %v2107
        %v2141 = vunpack.c.l.b16 %v2108
        %v2142 = vunpack.c.h.b16 %v2108
        %v2143 = vunpack.c.l.b16 %v2109
        %v2144 = vunpack.c.h.b16 %v2109
        %v2145 = vunpack.c.l.b16 %v2110
        %v2146 = vunpack.c.h.b16 %v2110
        %v2147 = vpack.c.b16 %v2141, %v2139
        %v2148 = vpack.c.b16 %v2142, %v2140
        %v2149 = vpack.c.b16 %v2145, %v2143
        %v2150 = vpack.c.b16 %v2146, %v2144
        %v2154 = vsel %vm1813, %v2148, 0
        %v2157 = vsel %vm1813, %v2150, 0
        %2159 = vmatprep.subr.bf16.mxu0 0
        %2160 = vmatpush1.bf16.msra.mxu0 %v2105
        %2161 = vmatprep.subr.bf16.mxu0 0
        %2162 = vmatpush1.bf16.msra.mxu0 %v2104
        %2163 = vmatprep.subr.bf16.mxu0 0
        %2164 = vmatpush1.bf16.msra.mxu0 %v2103
        %2165 = vmatprep.subr.bf16.mxu0 0
        %2166 = vmatpush1.bf16.msra.mxu0 %v2102
        %2167 = vmatprep.subr.bf16.mxu0 0
        %2168 = vmatpush1.bf16.msra.mxu0 %v2101
        %2169 = vmatprep.subr.bf16.mxu0 0
        %2170 = vmatpush1.bf16.msra.mxu0 %v2100
        %2171 = vmatprep.subr.bf16.mxu0 0
        %2172 = vmatpush1.bf16.msra.mxu0 %v2099
        %2173 = vmatprep.subr.bf16.mxu0 0
        %2174 = vmatpush1.bf16.msra.mxu0 %v2098
        %2175 = vmatprep.subr.bf16.mxu0 0
        %2176 = vmatpush2.bf16.msra.mxu0 0
        %2177 = vmatprep.subr.bf16.mxu0 0
        %2178 = vmatpush2.bf16.msra.mxu0 0
        %2179 = vmatprep.subr.bf16.mxu0 0
        %2180 = vmatpush2.bf16.msra.mxu0 0
        %2181 = vmatprep.subr.bf16.mxu0 0
        %2182 = vmatpush2.bf16.msra.mxu0 0
        %2183 = vmatprep.subr.bf16.mxu0 0
        %2184 = vmatpush2.bf16.msra.mxu0 0
        %2185 = vmatprep.subr.bf16.mxu0 0
        %2186 = vmatpush2.bf16.msra.mxu0 0
        %2187 = vmatprep.subr.bf16.mxu0 0
        %2188 = vmatpush2.bf16.msra.mxu0 0
        %2189 = vmatprep.subr.bf16.mxu0 0
        %2190 = vmatpush2.bf16.msra.mxu0 %v2106
        %2191 = vmatprep.mubr.bf16.mxu0 %v2154
        %2192 = vmatmul.mubr.bf16.gmra.mxu0 %v2147
        %v2193 = vpop.f32.mrf.mxu0
        %v2194 = vadd.f32 %v2118, %v2193
        %v2195 = vpop.f32.mrf.mxu0
        %v2196 = vpop.f32.mrf.mxu0
        %v2197 = vadd.f32 %v2123, %v2196
        %v2198 = vpop.f32.mrf.mxu0
        %2199 = vmatprep.mubr.bf16.mxu0 %v2157
        %2200 = vmatmul.mubr.bf16.gmra.mxu0 %v2149
        %v2201 = vpop.f32.mrf.mxu0
        %v2202 = vadd.f32 %v2128, %v2201
        %v2203 = vpop.f32.mrf.mxu0
        %v2204 = vpop.f32.mrf.mxu0
        %v2205 = vadd.f32 %v2133, %v2204
        %v2206 = vpop.f32.mrf.mxu0
        %2207 = vdwg.mxu0
        %v2208 = vmax.f32 %v2194, 0.0
        %v2209 = vmax.f32 %v2197, 0.0
        %v2210 = vmax.f32 %v2202, 0.0
        %v2211 = vmax.f32 %v2205, 0.0
        %2216 = vrot.lane.b32.xlu0 %v2208, 5
        %v2217 = vpop.permute.xlu0 %2216
        %2218 = vrot.lane.b32.xlu0 %v2209, 5
        %v2219 = vpop.permute.xlu0 %2218
        %2220 = vrot.lane.b32.xlu0 %v2210, 5
        %v2221 = vpop.permute.xlu0 %2220
        %2222 = vrot.lane.b32.xlu0 %v2211, 5
        %v2223 = vpop.permute.xlu0 %2222
        %v2228 = vsel %vm1970, 0.0, %v2217
        %v2229 = vsel %vm1970, 0.0, %v2219
        %v2230 = vsel %vm1970, 0.0, %v2221
        %v2231 = vsel %vm1970, 0.0, %v2223
        %v2232 = vmul.f32 %v2228, %v1977
        %v2233 = vmul.f32 %v2229, %v1977
        %v2234 = vmul.f32 %v2230, %v1977
        %v2235 = vmul.f32 %v2231, %v1977
        %2236 = vrot.lane.b32.xlu0 %v2208, 4
        %v2237 = vpop.permute.xlu0 %2236
        %2238 = vrot.lane.b32.xlu0 %v2209, 4
        %v2239 = vpop.permute.xlu0 %2238
        %2240 = vrot.lane.b32.xlu0 %v2210, 4
        %v2241 = vpop.permute.xlu0 %2240
        %2242 = vrot.lane.b32.xlu0 %v2211, 4
        %v2243 = vpop.permute.xlu0 %2242
        %v2248 = vsel %vm1986, 0.0, %v2237
        %v2249 = vsel %vm1986, 0.0, %v2239
        %v2250 = vsel %vm1986, 0.0, %v2241
        %v2251 = vsel %vm1986, 0.0, %v2243
        %v2252 = vmul.f32 %v2248, %v1993
        %v2253 = vmul.f32 %v2249, %v1993
        %v2254 = vmul.f32 %v2250, %v1993
        %v2255 = vmul.f32 %v2251, %v1993
        %2256 = vrot.lane.b32.xlu0 %v2208, 3
        %v2257 = vpop.permute.xlu0 %2256
        %2258 = vrot.lane.b32.xlu0 %v2209, 3
        %v2259 = vpop.permute.xlu0 %2258
        %2260 = vrot.lane.b32.xlu0 %v2210, 3
        %v2261 = vpop.permute.xlu0 %2260
        %2262 = vrot.lane.b32.xlu0 %v2211, 3
        %v2263 = vpop.permute.xlu0 %2262
        %v2268 = vsel %vm2002, 0.0, %v2257
        %v2269 = vsel %vm2002, 0.0, %v2259
        %v2270 = vsel %vm2002, 0.0, %v2261
        %v2271 = vsel %vm2002, 0.0, %v2263
        %v2272 = vmul.f32 %v2268, %v2009
        %v2273 = vmul.f32 %v2269, %v2009
        %v2274 = vmul.f32 %v2270, %v2009
        %v2275 = vmul.f32 %v2271, %v2009
        %2276 = vrot.lane.b32.xlu0 %v2208, 1
        %v2277 = vpop.permute.xlu0 %2276
        %2278 = vrot.lane.b32.xlu0 %v2209, 1
        %v2279 = vpop.permute.xlu0 %2278
        %2280 = vrot.lane.b32.xlu0 %v2210, 1
        %v2281 = vpop.permute.xlu0 %2280
        %2282 = vrot.lane.b32.xlu0 %v2211, 1
        %v2283 = vpop.permute.xlu0 %2282
        %v2288 = vsel %vm1566, 0.0, %v2277
        %v2289 = vsel %vm1566, 0.0, %v2279
        %v2290 = vsel %vm1566, 0.0, %v2281
        %v2291 = vsel %vm1566, 0.0, %v2283
        %v2292 = vmul.f32 %v2288, %v2024
        %v2293 = vmul.f32 %v2289, %v2024
        %v2294 = vmul.f32 %v2290, %v2024
        %v2295 = vmul.f32 %v2291, %v2024
        %v2296 = vmul.f32 %v2208, %v2031
        %v2297 = vmul.f32 %v2209, %v2031
        %v2298 = vmul.f32 %v2210, %v2031
        %v2299 = vmul.f32 %v2211, %v2031
        %2300 = vrot.lane.b32.xlu0 %v2208, 127
        %v2301 = vpop.permute.xlu0 %2300
        %2302 = vrot.lane.b32.xlu0 %v2209, 127
        %v2303 = vpop.permute.xlu0 %2302
        %2304 = vrot.lane.b32.xlu0 %v2210, 127
        %v2305 = vpop.permute.xlu0 %2304
        %2306 = vrot.lane.b32.xlu0 %v2211, 127
        %v2307 = vpop.permute.xlu0 %2306
        %v2312 = vsel %vm2040, %v2301, 0.0
        %v2313 = vsel %vm2040, %v2303, 0.0
        %v2314 = vsel %vm2040, %v2305, 0.0
        %v2315 = vsel %vm2040, %v2307, 0.0
        %v2316 = vmul.f32 %v2312, %v2047
        %v2317 = vmul.f32 %v2313, %v2047
        %v2318 = vmul.f32 %v2314, %v2047
        %v2319 = vmul.f32 %v2315, %v2047
        %2320 = vrot.lane.b32.xlu0 %v2208, 125
        %v2321 = vpop.permute.xlu0 %2320
        %2322 = vrot.lane.b32.xlu0 %v2209, 125
        %v2323 = vpop.permute.xlu0 %2322
        %2324 = vrot.lane.b32.xlu0 %v2210, 125
        %v2325 = vpop.permute.xlu0 %2324
        %2326 = vrot.lane.b32.xlu0 %v2211, 125
        %v2327 = vpop.permute.xlu0 %2326
        %v2332 = vsel %vm2056, %v2321, 0.0
        %v2333 = vsel %vm2056, %v2323, 0.0
        %v2334 = vsel %vm2056, %v2325, 0.0
        %v2335 = vsel %vm2056, %v2327, 0.0
        %v2336 = vmul.f32 %v2332, %v2063
        %v2337 = vmul.f32 %v2333, %v2063
        %v2338 = vmul.f32 %v2334, %v2063
        %v2339 = vmul.f32 %v2335, %v2063
        %2340 = vrot.lane.b32.xlu0 %v2208, 124
        %v2341 = vpop.permute.xlu0 %2340
        %2342 = vrot.lane.b32.xlu0 %v2209, 124
        %v2343 = vpop.permute.xlu0 %2342
        %2344 = vrot.lane.b32.xlu0 %v2210, 124
        %v2345 = vpop.permute.xlu0 %2344
        %2346 = vrot.lane.b32.xlu0 %v2211, 124
        %v2347 = vpop.permute.xlu0 %2346
        %v2352 = vsel %vm2072, %v2341, 0.0
        %v2353 = vsel %vm2072, %v2343, 0.0
        %v2354 = vsel %vm2072, %v2345, 0.0
        %v2355 = vsel %vm2072, %v2347, 0.0
        %v2356 = vmul.f32 %v2352, %v2079
        %v2357 = vmul.f32 %v2353, %v2079
        %v2358 = vmul.f32 %v2354, %v2079
        %v2359 = vmul.f32 %v2355, %v2079
        %2360 = vrot.lane.b32.xlu0 %v2208, 123
        %v2361 = vpop.permute.xlu0 %2360
        %2362 = vrot.lane.b32.xlu0 %v2209, 123
        %v2363 = vpop.permute.xlu0 %2362
        %2364 = vrot.lane.b32.xlu0 %v2210, 123
        %v2365 = vpop.permute.xlu0 %2364
        %2366 = vrot.lane.b32.xlu0 %v2211, 123
        %v2367 = vpop.permute.xlu0 %2366
        %v2372 = vsel %vm2088, %v2361, 0.0
        %v2373 = vsel %vm2088, %v2363, 0.0
        %v2374 = vsel %vm2088, %v2365, 0.0
        %v2375 = vsel %vm2088, %v2367, 0.0
        %v2376 = vmul.f32 %v2372, %v2095
        %v2377 = vmul.f32 %v2373, %v2095
        %v2378 = vmul.f32 %v2374, %v2095
        %v2379 = vmul.f32 %v2375, %v2095
        %v2380 = vpack.c.bf16 %v2233, %v2232
        %v2381 = vpack.c.bf16 %v2235, %v2234
        %v2382 = vpack.c.bf16 %v2253, %v2252
        %v2383 = vpack.c.bf16 %v2255, %v2254
        %v2384 = vpack.c.bf16 %v2273, %v2272
        %v2385 = vpack.c.bf16 %v2275, %v2274
        %v2386 = vpack.c.bf16 %v2293, %v2292
        %v2387 = vpack.c.bf16 %v2295, %v2294
        %v2388 = vpack.c.bf16 %v2297, %v2296
        %v2389 = vpack.c.bf16 %v2299, %v2298
        %v2390 = vpack.c.bf16 %v2317, %v2316
        %v2391 = vpack.c.bf16 %v2319, %v2318
        %v2392 = vpack.c.bf16 %v2337, %v2336
        %v2393 = vpack.c.bf16 %v2339, %v2338
        %v2394 = vpack.c.bf16 %v2357, %v2356
        %v2395 = vpack.c.bf16 %v2359, %v2358
        %v2396 = vpack.c.bf16 %v2377, %v2376
        %v2397 = vpack.c.bf16 %v2379, %v2378
        %v2398 = vld [vmem:[%s23] sm:$0xff]
        %v2399 = vld [vmem:[%s23 + $0x8] sm:$0xf]
        %v2400 = vld [vmem:[%s23 + $0xc] sm:$0xff]
        %v2401 = vld [vmem:[%s23 + $0x14] sm:$0xf]
        %v2402 = vld [vmem:[%s23 + $0x18] sm:$0xff]
        %v2403 = vld [vmem:[%s23 + $0x20] sm:$0xf]
        %v2404 = vld [vmem:[%s23 + $0x24] sm:$0xff]
        %v2405 = vld [vmem:[%s23 + $0x2c] sm:$0xf]
        %v2406 = vld [vmem:[%s25] sm:$0xff]
        %v2407 = vld [vmem:[%s25 + $0x8] sm:$0xff]
        %v2408 = vld [vmem:[%s25 + $0x10] sm:$0xff]
        %v2409 = vld [vmem:[%s25 + $0x18] sm:$0xff]
        %2411 = vset.pattern.permute.xlu0 0
        %2412 = vperm.xlu0 %2411, %v2406
        %v2413 = vpop.permute.xlu0 %2412
        %2416 = vset.pattern.permute.xlu0 0
        %2417 = vperm.xlu0 %2416, %v2407
        %v2418 = vpop.permute.xlu0 %2417
        %2421 = vset.pattern.permute.xlu0 0
        %2422 = vperm.xlu0 %2421, %v2408
        %v2423 = vpop.permute.xlu0 %2422
        %2426 = vset.pattern.permute.xlu0 0
        %2427 = vperm.xlu0 %2426, %v2409
        %v2428 = vpop.permute.xlu0 %2427
        %v2438 = vunpack.c.l.b16 %v2398
        %v2439 = vunpack.c.h.b16 %v2398
        %v2440 = vunpack.c.l.b16 %v2399
        %v2441 = vunpack.c.l.b16 %v2400
        %v2442 = vunpack.c.h.b16 %v2400
        %v2443 = vunpack.c.l.b16 %v2401
        %v2444 = vunpack.c.l.b16 %v2402
        %v2445 = vunpack.c.h.b16 %v2402
        %v2446 = vunpack.c.l.b16 %v2403
        %v2447 = vunpack.c.l.b16 %v2404
        %v2448 = vunpack.c.h.b16 %v2404
        %v2449 = vunpack.c.l.b16 %v2405
        %v2450 = vpack.c.b16 %v2441, %v2438
        %v2451 = vpack.c.b16 %v2442, %v2439
        %v2452 = vpack.c.b16 %v2443, %v2440
        %v2453 = vpack.c.b16 %v2447, %v2444
        %v2454 = vpack.c.b16 %v2448, %v2445
        %v2455 = vpack.c.b16 %v2449, %v2446
        %vm2460 = vcmask 261120
        %v2462 = vsel %vm2460, %v2452, 0
        %v2465 = vsel %vm2460, %v2455, 0
        %2467 = vmatprep.subr.bf16.mxu0 0
        %2468 = vmatpush1.bf16.msra.mxu0 %v2387
        %2469 = vmatprep.subr.bf16.mxu0 0
        %2470 = vmatpush1.bf16.msra.mxu0 %v2386
        %2471 = vmatprep.subr.bf16.mxu0 0
        %2472 = vmatpush1.bf16.msra.mxu0 %v2385
        %2473 = vmatprep.subr.bf16.mxu0 0
        %2474 = vmatpush1.bf16.msra.mxu0 %v2384
        %2475 = vmatprep.subr.bf16.mxu0 0
        %2476 = vmatpush1.bf16.msra.mxu0 %v2383
        %2477 = vmatprep.subr.bf16.mxu0 0
        %2478 = vmatpush1.bf16.msra.mxu0 %v2382
        %2479 = vmatprep.subr.bf16.mxu0 0
        %2480 = vmatpush1.bf16.msra.mxu0 %v2381
        %2481 = vmatprep.subr.bf16.mxu0 0
        %2482 = vmatpush1.bf16.msra.mxu0 %v2380
        %2483 = vmatprep.subr.bf16.mxu0 0
        %2484 = vmatpush2.bf16.msra.mxu0 %v2395
        %2485 = vmatprep.subr.bf16.mxu0 0
        %2486 = vmatpush2.bf16.msra.mxu0 %v2394
        %2487 = vmatprep.subr.bf16.mxu0 0
        %2488 = vmatpush2.bf16.msra.mxu0 %v2393
        %2489 = vmatprep.subr.bf16.mxu0 0
        %2490 = vmatpush2.bf16.msra.mxu0 %v2392
        %2491 = vmatprep.subr.bf16.mxu0 0
        %2492 = vmatpush2.bf16.msra.mxu0 %v2391
        %2493 = vmatprep.subr.bf16.mxu0 0
        %2494 = vmatpush2.bf16.msra.mxu0 %v2390
        %2495 = vmatprep.subr.bf16.mxu0 0
        %2496 = vmatpush2.bf16.msra.mxu0 %v2389
        %2497 = vmatprep.subr.bf16.mxu0 0
        %2498 = vmatpush2.bf16.msra.mxu0 %v2388
        %2499 = vmatprep.mubr.bf16.mxu0 %v2451
        %2500 = vmatmul.mubr.bf16.gmra.mxu0 %v2450
        %v2501 = vpop.f32.mrf.mxu0
        %v2502 = vadd.f32 %v2413, %v2501
        %v2503 = vpop.f32.mrf.mxu0
        %v2504 = vpop.f32.mrf.mxu0
        %v2505 = vadd.f32 %v2418, %v2504
        %v2506 = vpop.f32.mrf.mxu0
        %2507 = vmatprep.mubr.bf16.mxu0 %v2454
        %2508 = vmatmul.mubr.bf16.gmra.mxu0 %v2453
        %v2509 = vpop.f32.mrf.mxu0
        %v2510 = vadd.f32 %v2423, %v2509
        %v2511 = vpop.f32.mrf.mxu0
        %v2512 = vpop.f32.mrf.mxu0
        %v2513 = vadd.f32 %v2428, %v2512
        %v2514 = vpop.f32.mrf.mxu0
        %2515 = vdwg.mxu0
        %2516 = vmatprep.subr.bf16.mxu0 0
        %2517 = vmatpush1.bf16.msra.mxu0 0
        %2518 = vmatprep.subr.bf16.mxu0 0
        %2519 = vmatpush1.bf16.msra.mxu0 0
        %2520 = vmatprep.subr.bf16.mxu0 0
        %2521 = vmatpush1.bf16.msra.mxu0 0
        %2522 = vmatprep.subr.bf16.mxu0 0
        %2523 = vmatpush1.bf16.msra.mxu0 0
        %2524 = vmatprep.subr.bf16.mxu0 0
        %2525 = vmatpush1.bf16.msra.mxu0 0
        %2526 = vmatprep.subr.bf16.mxu0 0
        %2527 = vmatpush1.bf16.msra.mxu0 0
        %2528 = vmatprep.subr.bf16.mxu0 0
        %2529 = vmatpush1.bf16.msra.mxu0 %v2397
        %2530 = vmatprep.subr.bf16.mxu0 0
        %2531 = vmatpush1.bf16.msra.mxu0 %v2396
        %2532 = vmatprep.subr.bf16.mxu0 0
        %2533 = vmatpush2.bf16.msra.mxu0 0
        %2534 = vmatprep.subr.bf16.mxu0 0
        %2535 = vmatpush2.bf16.msra.mxu0 0
        %2536 = vmatprep.subr.bf16.mxu0 0
        %2537 = vmatpush2.bf16.msra.mxu0 0
        %2538 = vmatprep.subr.bf16.mxu0 0
        %2539 = vmatpush2.bf16.msra.mxu0 0
        %2540 = vmatprep.subr.bf16.mxu0 0
        %2541 = vmatpush2.bf16.msra.mxu0 0
        %2542 = vmatprep.subr.bf16.mxu0 0
        %2543 = vmatpush2.bf16.msra.mxu0 0
        %2544 = vmatprep.subr.bf16.mxu0 0
        %2545 = vmatpush2.bf16.msra.mxu0 0
        %2546 = vmatprep.subr.bf16.mxu0 0
        %2547 = vmatpush2.bf16.msra.mxu0 0
        %2548 = vmatprep.mubr.bf16.mxu0 0
        %2549 = vmatmul.mubr.bf16.gmra.mxu0 %v2462
        %v2550 = vpop.f32.mrf.mxu0
        %v2551 = vadd.f32 %v2502, %v2550
        %v2552 = vpop.f32.mrf.mxu0
        %v2553 = vpop.f32.mrf.mxu0
        %v2554 = vadd.f32 %v2505, %v2553
        %v2555 = vpop.f32.mrf.mxu0
        %2556 = vmatprep.mubr.bf16.mxu0 0
        %2557 = vmatmul.mubr.bf16.gmra.mxu0 %v2465
        %v2558 = vpop.f32.mrf.mxu0
        %v2559 = vadd.f32 %v2510, %v2558
        %v2560 = vpop.f32.mrf.mxu0
        %v2561 = vpop.f32.mrf.mxu0
        %v2562 = vadd.f32 %v2513, %v2561
        %v2563 = vpop.f32.mrf.mxu0
        %2564 = vdwg.mxu0
        %v2565 = vmax.f32 %v2551, 0.0
        %v2566 = vmax.f32 %v2554, 0.0
        %v2567 = vmax.f32 %v2559, 0.0
        %v2568 = vmax.f32 %v2562, 0.0
        %v2569 = vpack.c.bf16 %v2566, %v2565
        %v2570 = vpack.c.bf16 %v2568, %v2567
        %v2571 = vld [vmem:[%s59] sm:$0xf]
        %v2572 = vld [vmem:[%s59 + $0x4] sm:$0xf]
        %v2575 = vunpack.c.l.b16 %v2571
        %v2576 = vunpack.c.l.b16 %v2572
        %v2577 = vpack.c.b16 %v2576, %v2575
        %v2580 = vsel %vm1813, %v2569, 0
        %v2583 = vsel %vm1813, %v2570, 0
        %2585 = vmatprep.subr.bf16.mxu0 0
        %2586 = vmatpush1.bf16.msra.mxu0 0
        %2587 = vmatprep.subr.bf16.mxu0 0
        %2588 = vmatpush1.bf16.msra.mxu0 0
        %2589 = vmatprep.subr.bf16.mxu0 0
        %2590 = vmatpush1.bf16.msra.mxu0 0
        %2591 = vmatprep.subr.bf16.mxu0 0
        %2592 = vmatpush1.bf16.msra.mxu0 0
        %2593 = vmatprep.subr.bf16.mxu0 0
        %2594 = vmatpush1.bf16.msra.mxu0 0
        %2595 = vmatprep.subr.bf16.mxu0 0
        %2596 = vmatpush1.bf16.msra.mxu0 0
        %2597 = vmatprep.subr.bf16.mxu0 0
        %2598 = vmatpush1.bf16.msra.mxu0 0
        %2599 = vmatprep.subr.bf16.mxu0 0
        %2600 = vmatpush1.bf16.msra.mxu0 %v2577
        %2601 = vmatprep.subr.bf16.mxu0 0
        %2602 = vmatpush2.bf16.msra.mxu0 0
        %2603 = vmatprep.subr.bf16.mxu0 0
        %2604 = vmatpush2.bf16.msra.mxu0 0
        %2605 = vmatprep.subr.bf16.mxu0 0
        %2606 = vmatpush2.bf16.msra.mxu0 0
        %2607 = vmatprep.subr.bf16.mxu0 0
        %2608 = vmatpush2.bf16.msra.mxu0 0
        %2609 = vmatprep.subr.bf16.mxu0 0
        %2610 = vmatpush2.bf16.msra.mxu0 0
        %2611 = vmatprep.subr.bf16.mxu0 0
        %2612 = vmatpush2.bf16.msra.mxu0 0
        %2613 = vmatprep.subr.bf16.mxu0 0
        %2614 = vmatpush2.bf16.msra.mxu0 0
        %2615 = vmatprep.subr.bf16.mxu0 0
        %2616 = vmatpush2.bf16.msra.mxu0 0
        %2617 = vmatprep.mubr.bf16.mxu0 0
        %2618 = vmatmul.mubr.bf16.gmra.mxu0 %v2580
        %v2619 = vpop.f32.mrf.mxu0
        %v2620 = vadd.f32 0.0, %v2619
        %v2621 = vpop.f32.mrf.mxu0
        %v2622 = vpop.f32.mrf.mxu0
        %v2623 = vadd.f32 0.0, %v2622
        %v2624 = vpop.f32.mrf.mxu0
        %2625 = vmatprep.mubr.bf16.mxu0 0
        %2626 = vmatmul.mubr.bf16.gmra.mxu0 %v2583
        %v2627 = vpop.f32.mrf.mxu0
        %v2628 = vadd.f32 0.0, %v2627
        %v2629 = vpop.f32.mrf.mxu0
        %v2630 = vpop.f32.mrf.mxu0
        %v2631 = vadd.f32 0.0, %v2630
        %v2632 = vpop.f32.mrf.mxu0
        %2633 = vdwg.mxu0
        %2638 = vrot.lane.b32.xlu0 %v1858, 9
        %v2639 = vpop.permute.xlu0 %2638
        %2640 = vrot.lane.b32.xlu0 %v1859, 9
        %v2641 = vpop.permute.xlu0 %2640
        %2642 = vrot.lane.b32.xlu0 %v2620, 9
        %v2643 = vpop.permute.xlu0 %2642
        %2644 = vrot.lane.b32.xlu0 %v2623, 9
        %v2645 = vpop.permute.xlu0 %2644
        %2646 = vrot.lane.b32.xlu0 %v2628, 9
        %v2647 = vpop.permute.xlu0 %2646
        %2648 = vrot.lane.b32.xlu0 %v2631, 9
        %v2649 = vpop.permute.xlu0 %2648
        %v2656 = vsel %vm1533, 0.0, %v2639
        %v2657 = vsel %vm1533, 0.0, %v2641
        %v2658 = vsel %vm1533, 0.0, %v2643
        %v2659 = vsel %vm1533, 0.0, %v2645
        %v2660 = vsel %vm1533, 0.0, %v2647
        %v2661 = vsel %vm1533, 0.0, %v2649
        %v2662 = vmul.f32 %v2656, %v1539
        %v2663 = vmul.f32 %v2657, %v1539
        %v2664 = vmul.f32 %v2658, %v1539
        %v2665 = vmul.f32 %v2659, %v1539
        %v2666 = vmul.f32 %v2660, %v1539
        %v2667 = vmul.f32 %v2661, %v1539
        %2668 = vrot.lane.b32.xlu0 %v1858, 8
        %v2669 = vpop.permute.xlu0 %2668
        %2670 = vrot.lane.b32.xlu0 %v1859, 8
        %v2671 = vpop.permute.xlu0 %2670
        %2672 = vrot.lane.b32.xlu0 %v2620, 8
        %v2673 = vpop.permute.xlu0 %2672
        %2674 = vrot.lane.b32.xlu0 %v2623, 8
        %v2675 = vpop.permute.xlu0 %2674
        %2676 = vrot.lane.b32.xlu0 %v2628, 8
        %v2677 = vpop.permute.xlu0 %2676
        %2678 = vrot.lane.b32.xlu0 %v2631, 8
        %v2679 = vpop.permute.xlu0 %2678
        %v2686 = vsel %vm1544, 0.0, %v2669
        %v2687 = vsel %vm1544, 0.0, %v2671
        %v2688 = vsel %vm1544, 0.0, %v2673
        %v2689 = vsel %vm1544, 0.0, %v2675
        %v2690 = vsel %vm1544, 0.0, %v2677
        %v2691 = vsel %vm1544, 0.0, %v2679
        %v2692 = vmul.f32 %v2686, %v1550
        %v2693 = vmul.f32 %v2687, %v1550
        %v2694 = vmul.f32 %v2688, %v1550
        %v2695 = vmul.f32 %v2689, %v1550
        %v2696 = vmul.f32 %v2690, %v1550
        %v2697 = vmul.f32 %v2691, %v1550
        %2698 = vrot.lane.b32.xlu0 %v1858, 7
        %v2699 = vpop.permute.xlu0 %2698
        %2700 = vrot.lane.b32.xlu0 %v1859, 7
        %v2701 = vpop.permute.xlu0 %2700
        %2702 = vrot.lane.b32.xlu0 %v2620, 7
        %v2703 = vpop.permute.xlu0 %2702
        %2704 = vrot.lane.b32.xlu0 %v2623, 7
        %v2705 = vpop.permute.xlu0 %2704
        %2706 = vrot.lane.b32.xlu0 %v2628, 7
        %v2707 = vpop.permute.xlu0 %2706
        %2708 = vrot.lane.b32.xlu0 %v2631, 7
        %v2709 = vpop.permute.xlu0 %2708
        %v2716 = vsel %vm1555, 0.0, %v2699
        %v2717 = vsel %vm1555, 0.0, %v2701
        %v2718 = vsel %vm1555, 0.0, %v2703
        %v2719 = vsel %vm1555, 0.0, %v2705
        %v2720 = vsel %vm1555, 0.0, %v2707
        %v2721 = vsel %vm1555, 0.0, %v2709
        %v2722 = vmul.f32 %v2716, %v1561
        %v2723 = vmul.f32 %v2717, %v1561
        %v2724 = vmul.f32 %v2718, %v1561
        %v2725 = vmul.f32 %v2719, %v1561
        %v2726 = vmul.f32 %v2720, %v1561
        %v2727 = vmul.f32 %v2721, %v1561
        %2728 = vrot.lane.b32.xlu0 %v1858, 1
        %v2729 = vpop.permute.xlu0 %2728
        %2730 = vrot.lane.b32.xlu0 %v1859, 1
        %v2731 = vpop.permute.xlu0 %2730
        %2732 = vrot.lane.b32.xlu0 %v2620, 1
        %v2733 = vpop.permute.xlu0 %2732
        %2734 = vrot.lane.b32.xlu0 %v2623, 1
        %v2735 = vpop.permute.xlu0 %2734
        %2736 = vrot.lane.b32.xlu0 %v2628, 1
        %v2737 = vpop.permute.xlu0 %2736
        %2738 = vrot.lane.b32.xlu0 %v2631, 1
        %v2739 = vpop.permute.xlu0 %2738
        %v2746 = vsel %vm1566, 0.0, %v2729
        %v2747 = vsel %vm1566, 0.0, %v2731
        %v2748 = vsel %vm1566, 0.0, %v2733
        %v2749 = vsel %vm1566, 0.0, %v2735
        %v2750 = vsel %vm1566, 0.0, %v2737
        %v2751 = vsel %vm1566, 0.0, %v2739
        %v2752 = vmul.f32 %v2746, %v1572
        %v2753 = vmul.f32 %v2747, %v1572
        %v2754 = vmul.f32 %v2748, %v1572
        %v2755 = vmul.f32 %v2749, %v1572
        %v2756 = vmul.f32 %v2750, %v1572
        %v2757 = vmul.f32 %v2751, %v1572
        %v2758 = vmul.f32 %v1858, %v1578
        %v2759 = vmul.f32 %v1859, %v1578
        %v2760 = vmul.f32 %v2620, %v1578
        %v2761 = vmul.f32 %v2623, %v1578
        %v2762 = vmul.f32 %v2628, %v1578
        %v2763 = vmul.f32 %v2631, %v1578
        %2764 = vrot.lane.b32.xlu0 %v2620, 127
        %v2765 = vpop.permute.xlu0 %2764
        %2766 = vrot.lane.b32.xlu0 %v2623, 127
        %v2767 = vpop.permute.xlu0 %2766
        %2768 = vrot.lane.b32.xlu0 %v2628, 127
        %v2769 = vpop.permute.xlu0 %2768
        %2770 = vrot.lane.b32.xlu0 %v2631, 127
        %v2771 = vpop.permute.xlu0 %2770
        %v2776 = vsel %vm1583, %v2765, 0.0
        %v2777 = vsel %vm1583, %v2767, 0.0
        %v2778 = vsel %vm1583, %v2769, 0.0
        %v2779 = vsel %vm1583, %v2771, 0.0
        %v2780 = vmul.f32 %v1868, %v1589
        %v2781 = vmul.f32 %v1869, %v1589
        %v2782 = vmul.f32 %v2776, %v1589
        %v2783 = vmul.f32 %v2777, %v1589
        %v2784 = vmul.f32 %v2778, %v1589
        %v2785 = vmul.f32 %v2779, %v1589
        %2786 = vrot.lane.b32.xlu0 %v1858, 121
        %v2787 = vpop.permute.xlu0 %2786
        %2788 = vrot.lane.b32.xlu0 %v1859, 121
        %v2789 = vpop.permute.xlu0 %2788
        %2790 = vrot.lane.b32.xlu0 %v2620, 121
        %v2791 = vpop.permute.xlu0 %2790
        %2792 = vrot.lane.b32.xlu0 %v2623, 121
        %v2793 = vpop.permute.xlu0 %2792
        %2794 = vrot.lane.b32.xlu0 %v2628, 121
        %v2795 = vpop.permute.xlu0 %2794
        %2796 = vrot.lane.b32.xlu0 %v2631, 121
        %v2797 = vpop.permute.xlu0 %2796
        %v2804 = vsel %vm1594, %v2787, 0.0
        %v2805 = vsel %vm1594, %v2789, 0.0
        %v2806 = vsel %vm1594, %v2791, 0.0
        %v2807 = vsel %vm1594, %v2793, 0.0
        %v2808 = vsel %vm1594, %v2795, 0.0
        %v2809 = vsel %vm1594, %v2797, 0.0
        %v2810 = vmul.f32 %v2804, %v1600
        %v2811 = vmul.f32 %v2805, %v1600
        %v2812 = vmul.f32 %v2806, %v1600
        %v2813 = vmul.f32 %v2807, %v1600
        %v2814 = vmul.f32 %v2808, %v1600
        %v2815 = vmul.f32 %v2809, %v1600
        %2816 = vrot.lane.b32.xlu0 %v1858, 120
        %v2817 = vpop.permute.xlu0 %2816
        %2818 = vrot.lane.b32.xlu0 %v1859, 120
        %v2819 = vpop.permute.xlu0 %2818
        %2820 = vrot.lane.b32.xlu0 %v2620, 120
        %v2821 = vpop.permute.xlu0 %2820
        %2822 = vrot.lane.b32.xlu0 %v2623, 120
        %v2823 = vpop.permute.xlu0 %2822
        %2824 = vrot.lane.b32.xlu0 %v2628, 120
        %v2825 = vpop.permute.xlu0 %2824
        %2826 = vrot.lane.b32.xlu0 %v2631, 120
        %v2827 = vpop.permute.xlu0 %2826
        %v2834 = vsel %vm1605, %v2817, 0.0
        %v2835 = vsel %vm1605, %v2819, 0.0
        %v2836 = vsel %vm1605, %v2821, 0.0
        %v2837 = vsel %vm1605, %v2823, 0.0
        %v2838 = vsel %vm1605, %v2825, 0.0
        %v2839 = vsel %vm1605, %v2827, 0.0
        %v2840 = vmul.f32 %v2834, %v1611
        %v2841 = vmul.f32 %v2835, %v1611
        %v2842 = vmul.f32 %v2836, %v1611
        %v2843 = vmul.f32 %v2837, %v1611
        %v2844 = vmul.f32 %v2838, %v1611
        %v2845 = vmul.f32 %v2839, %v1611
        %2846 = vrot.lane.b32.xlu0 %v1858, 119
        %v2847 = vpop.permute.xlu0 %2846
        %2848 = vrot.lane.b32.xlu0 %v1859, 119
        %v2849 = vpop.permute.xlu0 %2848
        %2850 = vrot.lane.b32.xlu0 %v2620, 119
        %v2851 = vpop.permute.xlu0 %2850
        %2852 = vrot.lane.b32.xlu0 %v2623, 119
        %v2853 = vpop.permute.xlu0 %2852
        %2854 = vrot.lane.b32.xlu0 %v2628, 119
        %v2855 = vpop.permute.xlu0 %2854
        %2856 = vrot.lane.b32.xlu0 %v2631, 119
        %v2857 = vpop.permute.xlu0 %2856
        %v2864 = vsel %vm1616, %v2847, 0.0
        %v2865 = vsel %vm1616, %v2849, 0.0
        %v2866 = vsel %vm1616, %v2851, 0.0
        %v2867 = vsel %vm1616, %v2853, 0.0
        %v2868 = vsel %vm1616, %v2855, 0.0
        %v2869 = vsel %vm1616, %v2857, 0.0
        %v2870 = vmul.f32 %v2864, %v1622
        %v2871 = vmul.f32 %v2865, %v1622
        %v2872 = vmul.f32 %v2866, %v1622
        %v2873 = vmul.f32 %v2867, %v1622
        %v2874 = vmul.f32 %v2868, %v1622
        %v2875 = vmul.f32 %v2869, %v1622
        %v2876 = vpack.c.bf16 %v2663, %v2662
        %v2877 = vpack.c.bf16 %v2665, %v2664
        %v2878 = vpack.c.bf16 %v2667, %v2666
        %v2879 = vpack.c.bf16 %v2693, %v2692
        %v2880 = vpack.c.bf16 %v2695, %v2694
        %v2881 = vpack.c.bf16 %v2697, %v2696
        %v2882 = vpack.c.bf16 %v2723, %v2722
        %v2883 = vpack.c.bf16 %v2725, %v2724
        %v2884 = vpack.c.bf16 %v2727, %v2726
        %v2885 = vpack.c.bf16 %v2753, %v2752
        %v2886 = vpack.c.bf16 %v2755, %v2754
        %v2887 = vpack.c.bf16 %v2757, %v2756
        %v2888 = vpack.c.bf16 %v2759, %v2758
        %v2889 = vpack.c.bf16 %v2761, %v2760
        %v2890 = vpack.c.bf16 %v2763, %v2762
        %v2891 = vpack.c.bf16 %v2781, %v2780
        %v2892 = vpack.c.bf16 %v2783, %v2782
        %v2893 = vpack.c.bf16 %v2785, %v2784
        %v2894 = vpack.c.bf16 %v2811, %v2810
        %v2895 = vpack.c.bf16 %v2813, %v2812
        %v2896 = vpack.c.bf16 %v2815, %v2814
        %v2897 = vpack.c.bf16 %v2841, %v2840
        %v2898 = vpack.c.bf16 %v2843, %v2842
        %v2899 = vpack.c.bf16 %v2845, %v2844
        %v2900 = vpack.c.bf16 %v2871, %v2870
        %v2901 = vpack.c.bf16 %v2873, %v2872
        %v2902 = vpack.c.bf16 %v2875, %v2874
        %v2903 = vld [vmem:[%s27] sm:$0xff]
        %v2904 = vld [vmem:[%s27 + $0x8] sm:$0xff]
        %v2905 = vld [vmem:[%s27 + $0x10] sm:$0xff]
        %v2906 = vld [vmem:[%s27 + $0x18] sm:$0xff]
        %v2907 = vld [vmem:[%s29] sm:$0xff]
        %v2908 = vld [vmem:[%s29 + $0x8] sm:$0xff]
        %2910 = vset.pattern.permute.xlu0 0
        %2911 = vperm.xlu0 %2910, %v2907
        %v2912 = vpop.permute.xlu0 %2911
        %2915 = vset.pattern.permute.xlu0 0
        %2916 = vperm.xlu0 %2915, %v2908
        %v2917 = vpop.permute.xlu0 %2916
        %v2923 = vunpack.c.l.b16 %v2903
        %v2924 = vunpack.c.h.b16 %v2903
        %v2925 = vunpack.c.l.b16 %v2904
        %v2926 = vunpack.c.h.b16 %v2904
        %v2927 = vunpack.c.l.b16 %v2905
        %v2928 = vunpack.c.h.b16 %v2905
        %v2929 = vunpack.c.l.b16 %v2906
        %v2930 = vunpack.c.h.b16 %v2906
        %v2931 = vpack.c.b16 %v2927, %v2923
        %v2932 = vpack.c.b16 %v2928, %v2924
        %v2933 = vpack.c.b16 %v2929, %v2925
        %v2934 = vpack.c.b16 %v2930, %v2926
        %vm2938 = vcmask 392192
        %v2940 = vsel %vm2938, %v2934, 0
        %2942 = vmatprep.subr.bf16.mxu0 0
        %2943 = vmatpush1.bf16.msra.mxu0 %v2883
        %2944 = vmatprep.subr.bf16.mxu0 0
        %2945 = vmatpush1.bf16.msra.mxu0 %v2882
        %2946 = vmatprep.subr.bf16.mxu0 0
        %2947 = vmatpush1.bf16.msra.mxu0 %v2881
        %2948 = vmatprep.subr.bf16.mxu0 0
        %2949 = vmatpush1.bf16.msra.mxu0 %v2880
        %2950 = vmatprep.subr.bf16.mxu0 0
        %2951 = vmatpush1.bf16.msra.mxu0 %v2879
        %2952 = vmatprep.subr.bf16.mxu0 0
        %2953 = vmatpush1.bf16.msra.mxu0 %v2878
        %2954 = vmatprep.subr.bf16.mxu0 0
        %2955 = vmatpush1.bf16.msra.mxu0 %v2877
        %2956 = vmatprep.subr.bf16.mxu0 0
        %2957 = vmatpush1.bf16.msra.mxu0 %v2876
        %2958 = vmatprep.subr.bf16.mxu0 0
        %2959 = vmatpush2.bf16.msra.mxu0 %v2891
        %2960 = vmatprep.subr.bf16.mxu0 0
        %2961 = vmatpush2.bf16.msra.mxu0 %v2890
        %2962 = vmatprep.subr.bf16.mxu0 0
        %2963 = vmatpush2.bf16.msra.mxu0 %v2889
        %2964 = vmatprep.subr.bf16.mxu0 0
        %2965 = vmatpush2.bf16.msra.mxu0 %v2888
        %2966 = vmatprep.subr.bf16.mxu0 0
        %2967 = vmatpush2.bf16.msra.mxu0 %v2887
        %2968 = vmatprep.subr.bf16.mxu0 0
        %2969 = vmatpush2.bf16.msra.mxu0 %v2886
        %2970 = vmatprep.subr.bf16.mxu0 0
        %2971 = vmatpush2.bf16.msra.mxu0 %v2885
        %2972 = vmatprep.subr.bf16.mxu0 0
        %2973 = vmatpush2.bf16.msra.mxu0 %v2884
        %2974 = vmatprep.mubr.bf16.mxu0 %v2932
        %2975 = vmatmul.mubr.bf16.gmra.mxu0 %v2931
        %v2976 = vpop.f32.mrf.mxu0
        %v2977 = vadd.f32 %v2912, %v2976
        %v2978 = vpop.f32.mrf.mxu0
        %v2979 = vpop.f32.mrf.mxu0
        %v2980 = vadd.f32 %v2917, %v2979
        %v2981 = vpop.f32.mrf.mxu0
        %2982 = vdwg.mxu0
        %2983 = vmatprep.subr.bf16.mxu0 0
        %2984 = vmatpush1.bf16.msra.mxu0 %v2899
        %2985 = vmatprep.subr.bf16.mxu0 0
        %2986 = vmatpush1.bf16.msra.mxu0 %v2898
        %2987 = vmatprep.subr.bf16.mxu0 0
        %2988 = vmatpush1.bf16.msra.mxu0 %v2897
        %2989 = vmatprep.subr.bf16.mxu0 0
        %2990 = vmatpush1.bf16.msra.mxu0 %v2896
        %2991 = vmatprep.subr.bf16.mxu0 0
        %2992 = vmatpush1.bf16.msra.mxu0 %v2895
        %2993 = vmatprep.subr.bf16.mxu0 0
        %2994 = vmatpush1.bf16.msra.mxu0 %v2894
        %2995 = vmatprep.subr.bf16.mxu0 0
        %2996 = vmatpush1.bf16.msra.mxu0 %v2893
        %2997 = vmatprep.subr.bf16.mxu0 0
        %2998 = vmatpush1.bf16.msra.mxu0 %v2892
        %2999 = vmatprep.subr.bf16.mxu0 0
        %3000 = vmatpush2.bf16.msra.mxu0 0
        %3001 = vmatprep.subr.bf16.mxu0 0
        %3002 = vmatpush2.bf16.msra.mxu0 0
        %3003 = vmatprep.subr.bf16.mxu0 0
        %3004 = vmatpush2.bf16.msra.mxu0 0
        %3005 = vmatprep.subr.bf16.mxu0 0
        %3006 = vmatpush2.bf16.msra.mxu0 0
        %3007 = vmatprep.subr.bf16.mxu0 0
        %3008 = vmatpush2.bf16.msra.mxu0 0
        %3009 = vmatprep.subr.bf16.mxu0 0
        %3010 = vmatpush2.bf16.msra.mxu0 %v2902
        %3011 = vmatprep.subr.bf16.mxu0 0
        %3012 = vmatpush2.bf16.msra.mxu0 %v2901
        %3013 = vmatprep.subr.bf16.mxu0 0
        %3014 = vmatpush2.bf16.msra.mxu0 %v2900
        %3015 = vmatprep.mubr.bf16.mxu0 %v2940
        %3016 = vmatmul.mubr.bf16.gmra.mxu0 %v2933
        %v3017 = vpop.f32.mrf.mxu0
        %v3018 = vadd.f32 %v2977, %v3017
        %v3019 = vpop.f32.mrf.mxu0
        %v3020 = vpop.f32.mrf.mxu0
        %v3021 = vadd.f32 %v2980, %v3020
        %v3022 = vpop.f32.mrf.mxu0
        %3023 = vdwg.mxu0
        %v3024 = vmax.f32 %v3018, 0.0
        %v3025 = vmax.f32 %v3021, 0.0
        %3028 = vrot.lane.b32.xlu0 %v3024, 9
        %v3029 = vpop.permute.xlu0 %3028
        %3030 = vrot.lane.b32.xlu0 %v3025, 9
        %v3031 = vpop.permute.xlu0 %3030
        %v3034 = vsel %vm1533, 0.0, %v3029
        %v3035 = vsel %vm1533, 0.0, %v3031
        %v3036 = vmul.f32 %v3034, %v1539
        %v3037 = vmul.f32 %v3035, %v1539
        %3038 = vrot.lane.b32.xlu0 %v3024, 8
        %v3039 = vpop.permute.xlu0 %3038
        %3040 = vrot.lane.b32.xlu0 %v3025, 8
        %v3041 = vpop.permute.xlu0 %3040
        %v3044 = vsel %vm1544, 0.0, %v3039
        %v3045 = vsel %vm1544, 0.0, %v3041
        %v3046 = vmul.f32 %v3044, %v1550
        %v3047 = vmul.f32 %v3045, %v1550
        %3048 = vrot.lane.b32.xlu0 %v3024, 7
        %v3049 = vpop.permute.xlu0 %3048
        %3050 = vrot.lane.b32.xlu0 %v3025, 7
        %v3051 = vpop.permute.xlu0 %3050
        %v3054 = vsel %vm1555, 0.0, %v3049
        %v3055 = vsel %vm1555, 0.0, %v3051
        %v3056 = vmul.f32 %v3054, %v1561
        %v3057 = vmul.f32 %v3055, %v1561
        %3058 = vrot.lane.b32.xlu0 %v3024, 1
        %v3059 = vpop.permute.xlu0 %3058
        %3060 = vrot.lane.b32.xlu0 %v3025, 1
        %v3061 = vpop.permute.xlu0 %3060
        %v3064 = vsel %vm1566, 0.0, %v3059
        %v3065 = vsel %vm1566, 0.0, %v3061
        %v3066 = vmul.f32 %v3064, %v1572
        %v3067 = vmul.f32 %v3065, %v1572
        %v3068 = vmul.f32 %v3024, %v1578
        %v3069 = vmul.f32 %v3025, %v1578
        %3070 = vrot.lane.b32.xlu0 %v3024, 127
        %v3071 = vpop.permute.xlu0 %3070
        %3072 = vrot.lane.b32.xlu0 %v3025, 127
        %v3073 = vpop.permute.xlu0 %3072
        %v3076 = vsel %vm1583, %v3071, 0.0
        %v3077 = vsel %vm1583, %v3073, 0.0
        %v3078 = vmul.f32 %v3076, %v1589
        %v3079 = vmul.f32 %v3077, %v1589
        %3080 = vrot.lane.b32.xlu0 %v3024, 121
        %v3081 = vpop.permute.xlu0 %3080
        %3082 = vrot.lane.b32.xlu0 %v3025, 121
        %v3083 = vpop.permute.xlu0 %3082
        %v3086 = vsel %vm1594, %v3081, 0.0
        %v3087 = vsel %vm1594, %v3083, 0.0
        %v3088 = vmul.f32 %v3086, %v1600
        %v3089 = vmul.f32 %v3087, %v1600
        %3090 = vrot.lane.b32.xlu0 %v3024, 120
        %v3091 = vpop.permute.xlu0 %3090
        %3092 = vrot.lane.b32.xlu0 %v3025, 120
        %v3093 = vpop.permute.xlu0 %3092
        %v3096 = vsel %vm1605, %v3091, 0.0
        %v3097 = vsel %vm1605, %v3093, 0.0
        %v3098 = vmul.f32 %v3096, %v1611
        %v3099 = vmul.f32 %v3097, %v1611
        %3100 = vrot.lane.b32.xlu0 %v3024, 119
        %v3101 = vpop.permute.xlu0 %3100
        %3102 = vrot.lane.b32.xlu0 %v3025, 119
        %v3103 = vpop.permute.xlu0 %3102
        %v3106 = vsel %vm1616, %v3101, 0.0
        %v3107 = vsel %vm1616, %v3103, 0.0
        %v3108 = vmul.f32 %v3106, %v1622
        %v3109 = vmul.f32 %v3107, %v1622
        %v3110 = vpack.c.bf16 %v3037, %v3036
        %v3111 = vpack.c.bf16 %v3047, %v3046
        %v3112 = vpack.c.bf16 %v3057, %v3056
        %v3113 = vpack.c.bf16 %v3067, %v3066
        %v3114 = vpack.c.bf16 %v3069, %v3068
        %v3115 = vpack.c.bf16 %v3079, %v3078
        %v3116 = vpack.c.bf16 %v3089, %v3088
        %v3117 = vpack.c.bf16 %v3099, %v3098
        %v3118 = vpack.c.bf16 %v3109, %v3108
        %v3119 = vld [vmem:[%s31] sm:$0xff]
        %v3120 = vld [vmem:[%s31 + $0x8] sm:$0xff]
        %v3121 = vld [vmem:[%s33] sm:$0xff]
        %v3122 = vld [vmem:[%s33 + $0x8] sm:$0xff]
        %3124 = vset.pattern.permute.xlu0 0
        %3125 = vperm.xlu0 %3124, %v3121
        %v3126 = vpop.permute.xlu0 %3125
        %3129 = vset.pattern.permute.xlu0 0
        %3130 = vperm.xlu0 %3129, %v3122
        %v3131 = vpop.permute.xlu0 %3130
        %v3135 = vunpack.c.l.b16 %v3119
        %v3136 = vunpack.c.h.b16 %v3119
        %v3137 = vunpack.c.l.b16 %v3120
        %v3138 = vunpack.c.h.b16 %v3120
        %v3139 = vpack.c.b16 %v3137, %v3135
        %v3140 = vpack.c.b16 %v3138, %v3136
        %v3143 = vsel %vm1813, %v3140, 0
        %3145 = vmatprep.subr.bf16.mxu0 0
        %3146 = vmatpush1.bf16.msra.mxu0 %v3117
        %3147 = vmatprep.subr.bf16.mxu0 0
        %3148 = vmatpush1.bf16.msra.mxu0 %v3116
        %3149 = vmatprep.subr.bf16.mxu0 0
        %3150 = vmatpush1.bf16.msra.mxu0 %v3115
        %3151 = vmatprep.subr.bf16.mxu0 0
        %3152 = vmatpush1.bf16.msra.mxu0 %v3114
        %3153 = vmatprep.subr.bf16.mxu0 0
        %3154 = vmatpush1.bf16.msra.mxu0 %v3113
        %3155 = vmatprep.subr.bf16.mxu0 0
        %3156 = vmatpush1.bf16.msra.mxu0 %v3112
        %3157 = vmatprep.subr.bf16.mxu0 0
        %3158 = vmatpush1.bf16.msra.mxu0 %v3111
        %3159 = vmatprep.subr.bf16.mxu0 0
        %3160 = vmatpush1.bf16.msra.mxu0 %v3110
        %3161 = vmatprep.subr.bf16.mxu0 0
        %3162 = vmatpush2.bf16.msra.mxu0 0
        %3163 = vmatprep.subr.bf16.mxu0 0
        %3164 = vmatpush2.bf16.msra.mxu0 0
        %3165 = vmatprep.subr.bf16.mxu0 0
        %3166 = vmatpush2.bf16.msra.mxu0 0
        %3167 = vmatprep.subr.bf16.mxu0 0
        %3168 = vmatpush2.bf16.msra.mxu0 0
        %3169 = vmatprep.subr.bf16.mxu0 0
        %3170 = vmatpush2.bf16.msra.mxu0 0
        %3171 = vmatprep.subr.bf16.mxu0 0
        %3172 = vmatpush2.bf16.msra.mxu0 0
        %3173 = vmatprep.subr.bf16.mxu0 0
        %3174 = vmatpush2.bf16.msra.mxu0 0
        %3175 = vmatprep.subr.bf16.mxu0 0
        %3176 = vmatpush2.bf16.msra.mxu0 %v3118
        %3177 = vmatprep.mubr.bf16.mxu0 %v3143
        %3178 = vmatmul.mubr.bf16.gmra.mxu0 %v3139
        %v3179 = vpop.f32.mrf.mxu0
        %v3180 = vadd.f32 %v3126, %v3179
        %v3181 = vpop.f32.mrf.mxu0
        %v3182 = vpop.f32.mrf.mxu0
        %v3183 = vadd.f32 %v3131, %v3182
        %v3184 = vpop.f32.mrf.mxu0
        %3185 = vdwg.mxu0
        %v3186 = vmax.f32 %v3180, 0.0
        %v3187 = vmax.f32 %v3183, 0.0
        %v3188 = vpack.c.bf16 %v3187, %v3186
        %v3189 = vld [vmem:[%s57] sm:$0xff]
        %v3190 = vld [vmem:[%s57 + $0x8] sm:$0xff]
        %v3191 = vld [vmem:[%s57 + $0x10] sm:$0xff]
        %v3192 = vld [vmem:[%s57 + $0x18] sm:$0xff]
        %v3193 = vld [vmem:[%s57 + $0x20] sm:$0xff]
        %v3194 = vld [vmem:[%s57 + $0x28] sm:$0xff]
        %v3195 = vld [vmem:[%s57 + $0x30] sm:$0xff]
        %v3196 = vld [vmem:[%s57 + $0x38] sm:$0xff]
        %v3205 = vunpack.c.l.b16 %v3189
        %v3206 = vunpack.c.h.b16 %v3189
        %v3207 = vunpack.c.l.b16 %v3190
        %v3208 = vunpack.c.h.b16 %v3190
        %v3209 = vunpack.c.l.b16 %v3191
        %v3210 = vunpack.c.h.b16 %v3191
        %v3211 = vunpack.c.l.b16 %v3192
        %v3212 = vunpack.c.h.b16 %v3192
        %v3213 = vunpack.c.l.b16 %v3193
        %v3214 = vunpack.c.h.b16 %v3193
        %v3215 = vunpack.c.l.b16 %v3194
        %v3216 = vunpack.c.h.b16 %v3194
        %v3217 = vunpack.c.l.b16 %v3195
        %v3218 = vunpack.c.h.b16 %v3195
        %v3219 = vunpack.c.l.b16 %v3196
        %v3220 = vunpack.c.h.b16 %v3196
        %v3221 = vpack.c.b16 %v3207, %v3205
        %v3222 = vpack.c.b16 %v3208, %v3206
        %v3223 = vpack.c.b16 %v3211, %v3209
        %v3224 = vpack.c.b16 %v3212, %v3210
        %v3225 = vpack.c.b16 %v3215, %v3213
        %v3226 = vpack.c.b16 %v3216, %v3214
        %v3227 = vpack.c.b16 %v3219, %v3217
        %v3228 = vpack.c.b16 %v3220, %v3218
        %v3238 = vsel %vm1917, %v3188, 0
        %3240 = vmatprep.subr.bf16.mxu0 0
        %3241 = vmatpush1.bf16.msra.mxu0 0
        %3242 = vmatprep.subr.bf16.mxu0 0
        %3243 = vmatpush1.bf16.msra.mxu0 0
        %3244 = vmatprep.subr.bf16.mxu0 0
        %3245 = vmatpush1.bf16.msra.mxu0 0
        %3246 = vmatprep.subr.bf16.mxu0 0
        %3247 = vmatpush1.bf16.msra.mxu0 0
        %3248 = vmatprep.subr.bf16.mxu0 %v3228
        %3249 = vmatpush1.bf16.msra.mxu0 %v3227
        %3250 = vmatprep.subr.bf16.mxu0 %v3226
        %3251 = vmatpush1.bf16.msra.mxu0 %v3225
        %3252 = vmatprep.subr.bf16.mxu0 %v3224
        %3253 = vmatpush1.bf16.msra.mxu0 %v3223
        %3254 = vmatprep.subr.bf16.mxu0 %v3222
        %3255 = vmatpush1.bf16.msra.mxu0 %v3221
        %3256 = vmatprep.subr.bf16.mxu0 0
        %3257 = vmatpush2.bf16.msra.mxu0 0
        %3258 = vmatprep.subr.bf16.mxu0 0
        %3259 = vmatpush2.bf16.msra.mxu0 0
        %3260 = vmatprep.subr.bf16.mxu0 0
        %3261 = vmatpush2.bf16.msra.mxu0 0
        %3262 = vmatprep.subr.bf16.mxu0 0
        %3263 = vmatpush2.bf16.msra.mxu0 0
        %3264 = vmatprep.subr.bf16.mxu0 0
        %3265 = vmatpush2.bf16.msra.mxu0 0
        %3266 = vmatprep.subr.bf16.mxu0 0
        %3267 = vmatpush2.bf16.msra.mxu0 0
        %3268 = vmatprep.subr.bf16.mxu0 0
        %3269 = vmatpush2.bf16.msra.mxu0 0
        %3270 = vmatprep.subr.bf16.mxu0 0
        %3271 = vmatpush2.bf16.msra.mxu0 0
        %3272 = vmatprep.mubr.bf16.mxu0 0
        %3273 = vmatmul.mubr.bf16.gmra.mxu0 %v3238
        %v3274 = vpop.f32.mrf.mxu0
        %v3275 = vadd.f32 0.0, %v3274
        %v3276 = vpop.f32.mrf.mxu0
        %v3277 = vadd.f32 0.0, %v3276
        %v3278 = vpop.f32.mrf.mxu0
        %v3279 = vadd.f32 0.0, %v3278
        %v3280 = vpop.f32.mrf.mxu0
        %v3281 = vadd.f32 0.0, %v3280
        %3282 = vdwg.mxu0
        %3283 = vrot.lane.b32.xlu0 %v1341, 17
        %v3284 = vpop.permute.xlu0 %3283
        %3285 = vrot.lane.b32.xlu0 %v3275, 17
        %v3286 = vpop.permute.xlu0 %3285
        %3287 = vrot.lane.b32.xlu0 %v3279, 17
        %v3288 = vpop.permute.xlu0 %3287
        %3289 = vrot.lane.b32.xlu0 %v1342, 17
        %v3290 = vpop.permute.xlu0 %3289
        %3291 = vrot.lane.b32.xlu0 %v3277, 17
        %v3292 = vpop.permute.xlu0 %3291
        %3293 = vrot.lane.b32.xlu0 %v3281, 17
        %v3294 = vpop.permute.xlu0 %3293
        %v3295 = vsel %vm951, %v3284, %v3290
        %v3296 = vsel %vm951, %v3286, %v3292
        %v3297 = vsel %vm951, %v3288, %v3294
        %v3298 = vsel %vm951, %v3290, %v3284
        %v3299 = vsel %vm951, %v3292, %v3286
        %v3300 = vsel %vm951, %v3294, %v3288
        %v3301 = vmul.f32 %v3298, %v959
        %v3302 = vmul.f32 %v3295, %v963
        %v3303 = vmul.f32 %v3299, %v959
        %v3304 = vmul.f32 %v3296, %v963
        %v3305 = vmul.f32 %v3300, %v959
        %v3306 = vmul.f32 %v3297, %v963
        %3307 = vrot.lane.b32.xlu0 %v1341, 16
        %v3308 = vpop.permute.xlu0 %3307
        %3309 = vrot.lane.b32.xlu0 %v3275, 16
        %v3310 = vpop.permute.xlu0 %3309
        %3311 = vrot.lane.b32.xlu0 %v3279, 16
        %v3312 = vpop.permute.xlu0 %3311
        %3313 = vrot.lane.b32.xlu0 %v1342, 16
        %v3314 = vpop.permute.xlu0 %3313
        %3315 = vrot.lane.b32.xlu0 %v3277, 16
        %v3316 = vpop.permute.xlu0 %3315
        %3317 = vrot.lane.b32.xlu0 %v3281, 16
        %v3318 = vpop.permute.xlu0 %3317
        %v3319 = vsel %vm972, %v3308, %v3314
        %v3320 = vsel %vm972, %v3310, %v3316
        %v3321 = vsel %vm972, %v3312, %v3318
        %v3322 = vsel %vm972, %v3314, %v3308
        %v3323 = vsel %vm972, %v3316, %v3310
        %v3324 = vsel %vm972, %v3318, %v3312
        %v3325 = vmul.f32 %v3322, %v981
        %v3326 = vmul.f32 %v3319, %v985
        %v3327 = vmul.f32 %v3323, %v981
        %v3328 = vmul.f32 %v3320, %v985
        %v3329 = vmul.f32 %v3324, %v981
        %v3330 = vmul.f32 %v3321, %v985
        %3331 = vrot.lane.b32.xlu0 %v1341, 15
        %v3332 = vpop.permute.xlu0 %3331
        %3333 = vrot.lane.b32.xlu0 %v3275, 15
        %v3334 = vpop.permute.xlu0 %3333
        %3335 = vrot.lane.b32.xlu0 %v3279, 15
        %v3336 = vpop.permute.xlu0 %3335
        %3337 = vrot.lane.b32.xlu0 %v1342, 15
        %v3338 = vpop.permute.xlu0 %3337
        %3339 = vrot.lane.b32.xlu0 %v3277, 15
        %v3340 = vpop.permute.xlu0 %3339
        %3341 = vrot.lane.b32.xlu0 %v3281, 15
        %v3342 = vpop.permute.xlu0 %3341
        %v3343 = vsel %vm994, %v3332, %v3338
        %v3344 = vsel %vm994, %v3334, %v3340
        %v3345 = vsel %vm994, %v3336, %v3342
        %v3346 = vsel %vm994, %v3338, %v3332
        %v3347 = vsel %vm994, %v3340, %v3334
        %v3348 = vsel %vm994, %v3342, %v3336
        %v3349 = vmul.f32 %v3346, %v1003
        %v3350 = vmul.f32 %v3343, %v1007
        %v3351 = vmul.f32 %v3347, %v1003
        %v3352 = vmul.f32 %v3344, %v1007
        %v3353 = vmul.f32 %v3348, %v1003
        %v3354 = vmul.f32 %v3345, %v1007
        %3355 = vrot.lane.b32.xlu0 %v1341, 1
        %v3356 = vpop.permute.xlu0 %3355
        %3357 = vrot.lane.b32.xlu0 %v3275, 1
        %v3358 = vpop.permute.xlu0 %3357
        %3359 = vrot.lane.b32.xlu0 %v3279, 1
        %v3360 = vpop.permute.xlu0 %3359
        %3361 = vrot.lane.b32.xlu0 %v1342, 1
        %v3362 = vpop.permute.xlu0 %3361
        %3363 = vrot.lane.b32.xlu0 %v3277, 1
        %v3364 = vpop.permute.xlu0 %3363
        %3365 = vrot.lane.b32.xlu0 %v3281, 1
        %v3366 = vpop.permute.xlu0 %3365
        %v3367 = vsel %vm1016, %v3356, %v3362
        %v3368 = vsel %vm1016, %v3358, %v3364
        %v3369 = vsel %vm1016, %v3360, %v3366
        %v3370 = vsel %vm1016, %v3362, %v3356
        %v3371 = vsel %vm1016, %v3364, %v3358
        %v3372 = vsel %vm1016, %v3366, %v3360
        %v3373 = vmul.f32 %v3370, %v1025
        %v3374 = vmul.f32 %v3367, %v1029
        %v3375 = vmul.f32 %v3371, %v1025
        %v3376 = vmul.f32 %v3368, %v1029
        %v3377 = vmul.f32 %v3372, %v1025
        %v3378 = vmul.f32 %v3369, %v1029
        %v3379 = vmul.f32 %v1341, %v1040
        %v3380 = vmul.f32 %v1342, %v1044
        %v3381 = vmul.f32 %v3275, %v1040
        %v3382 = vmul.f32 %v3277, %v1044
        %v3383 = vmul.f32 %v3279, %v1040
        %v3384 = vmul.f32 %v3281, %v1044
        %3385 = vrot.lane.b32.xlu0 %v3275, 127
        %v3386 = vpop.permute.xlu0 %3385
        %3387 = vrot.lane.b32.xlu0 %v3279, 127
        %v3388 = vpop.permute.xlu0 %3387
        %3389 = vrot.lane.b32.xlu0 %v3277, 127
        %v3390 = vpop.permute.xlu0 %3389
        %3391 = vrot.lane.b32.xlu0 %v3281, 127
        %v3392 = vpop.permute.xlu0 %3391
        %v3393 = vsel %vm1053, %v3386, %v3390
        %v3394 = vsel %vm1053, %v3388, %v3392
        %v3395 = vsel %vm1053, %v3390, %v3386
        %v3396 = vsel %vm1053, %v3392, %v3388
        %v3397 = vmul.f32 %v1347, %v1062
        %v3398 = vmul.f32 %v1348, %v1066
        %v3399 = vmul.f32 %v3393, %v1062
        %v3400 = vmul.f32 %v3395, %v1066
        %v3401 = vmul.f32 %v3394, %v1062
        %v3402 = vmul.f32 %v3396, %v1066
        %3403 = vrot.lane.b32.xlu0 %v1341, 113
        %v3404 = vpop.permute.xlu0 %3403
        %3405 = vrot.lane.b32.xlu0 %v3275, 113
        %v3406 = vpop.permute.xlu0 %3405
        %3407 = vrot.lane.b32.xlu0 %v3279, 113
        %v3408 = vpop.permute.xlu0 %3407
        %3409 = vrot.lane.b32.xlu0 %v1342, 113
        %v3410 = vpop.permute.xlu0 %3409
        %3411 = vrot.lane.b32.xlu0 %v3277, 113
        %v3412 = vpop.permute.xlu0 %3411
        %3413 = vrot.lane.b32.xlu0 %v3281, 113
        %v3414 = vpop.permute.xlu0 %3413
        %v3415 = vsel %vm1075, %v3404, %v3410
        %v3416 = vsel %vm1075, %v3406, %v3412
        %v3417 = vsel %vm1075, %v3408, %v3414
        %v3418 = vsel %vm1075, %v3410, %v3404
        %v3419 = vsel %vm1075, %v3412, %v3406
        %v3420 = vsel %vm1075, %v3414, %v3408
        %v3421 = vmul.f32 %v3415, %v1084
        %v3422 = vmul.f32 %v3418, %v1088
        %v3423 = vmul.f32 %v3416, %v1084
        %v3424 = vmul.f32 %v3419, %v1088
        %v3425 = vmul.f32 %v3417, %v1084
        %v3426 = vmul.f32 %v3420, %v1088
        %3427 = vrot.lane.b32.xlu0 %v1341, 112
        %v3428 = vpop.permute.xlu0 %3427
        %3429 = vrot.lane.b32.xlu0 %v3275, 112
        %v3430 = vpop.permute.xlu0 %3429
        %3431 = vrot.lane.b32.xlu0 %v3279, 112
        %v3432 = vpop.permute.xlu0 %3431
        %3433 = vrot.lane.b32.xlu0 %v1342, 112
        %v3434 = vpop.permute.xlu0 %3433
        %3435 = vrot.lane.b32.xlu0 %v3277, 112
        %v3436 = vpop.permute.xlu0 %3435
        %3437 = vrot.lane.b32.xlu0 %v3281, 112
        %v3438 = vpop.permute.xlu0 %3437
        %v3439 = vsel %vm1097, %v3428, %v3434
        %v3440 = vsel %vm1097, %v3430, %v3436
        %v3441 = vsel %vm1097, %v3432, %v3438
        %v3442 = vsel %vm1097, %v3434, %v3428
        %v3443 = vsel %vm1097, %v3436, %v3430
        %v3444 = vsel %vm1097, %v3438, %v3432
        %v3445 = vmul.f32 %v3439, %v1106
        %v3446 = vmul.f32 %v3442, %v1110
        %v3447 = vmul.f32 %v3440, %v1106
        %v3448 = vmul.f32 %v3443, %v1110
        %v3449 = vmul.f32 %v3441, %v1106
        %v3450 = vmul.f32 %v3444, %v1110
        %3451 = vrot.lane.b32.xlu0 %v1341, 111
        %v3452 = vpop.permute.xlu0 %3451
        %3453 = vrot.lane.b32.xlu0 %v3275, 111
        %v3454 = vpop.permute.xlu0 %3453
        %3455 = vrot.lane.b32.xlu0 %v3279, 111
        %v3456 = vpop.permute.xlu0 %3455
        %3457 = vrot.lane.b32.xlu0 %v1342, 111
        %v3458 = vpop.permute.xlu0 %3457
        %3459 = vrot.lane.b32.xlu0 %v3277, 111
        %v3460 = vpop.permute.xlu0 %3459
        %3461 = vrot.lane.b32.xlu0 %v3281, 111
        %v3462 = vpop.permute.xlu0 %3461
        %v3463 = vsel %vm1119, %v3452, %v3458
        %v3464 = vsel %vm1119, %v3454, %v3460
        %v3465 = vsel %vm1119, %v3456, %v3462
        %v3466 = vsel %vm1119, %v3458, %v3452
        %v3467 = vsel %vm1119, %v3460, %v3454
        %v3468 = vsel %vm1119, %v3462, %v3456
        %v3469 = vmul.f32 %v3463, %v1128
        %v3470 = vmul.f32 %v3466, %v1132
        %v3471 = vmul.f32 %v3464, %v1128
        %v3472 = vmul.f32 %v3467, %v1132
        %v3473 = vmul.f32 %v3465, %v1128
        %v3474 = vmul.f32 %v3468, %v1132
        %v3475 = vpack.c.bf16 %v3303, %v3301
        %v3476 = vpack.c.bf16 %v3304, %v3302
        %v3477 = vpack.c.bf16 %v3325, %v3305
        %v3478 = vpack.c.bf16 %v3326, %v3306
        %v3479 = vpack.c.bf16 %v3329, %v3327
        %v3480 = vpack.c.bf16 %v3330, %v3328
        %v3481 = vpack.c.bf16 %v3351, %v3349
        %v3482 = vpack.c.bf16 %v3352, %v3350
        %v3483 = vpack.c.bf16 %v3373, %v3353
        %v3484 = vpack.c.bf16 %v3374, %v3354
        %v3485 = vpack.c.bf16 %v3377, %v3375
        %v3486 = vpack.c.bf16 %v3378, %v3376
        %v3487 = vpack.c.bf16 %v3381, %v3379
        %v3488 = vpack.c.bf16 %v3382, %v3380
        %v3489 = vpack.c.bf16 %v3397, %v3383
        %v3490 = vpack.c.bf16 %v3398, %v3384
        %v3491 = vpack.c.bf16 %v3401, %v3399
        %v3492 = vpack.c.bf16 %v3402, %v3400
        %v3493 = vpack.c.bf16 %v3423, %v3421
        %v3494 = vpack.c.bf16 %v3424, %v3422
        %v3495 = vpack.c.bf16 %v3445, %v3425
        %v3496 = vpack.c.bf16 %v3446, %v3426
        %v3497 = vpack.c.bf16 %v3449, %v3447
        %v3498 = vpack.c.bf16 %v3450, %v3448
        %v3499 = vpack.c.bf16 %v3471, %v3469
        %v3500 = vpack.c.bf16 %v3472, %v3470
        %v3501 = vpack.c.bf16 %v3473, %v3473
        %v3502 = vpack.c.bf16 %v3474, %v3474
        %v3503 = vld [vmem:[%s35] sm:$0xff]
        %v3504 = vld [vmem:[%s37] sm:$0xff]
        %3506 = vset.pattern.permute.xlu0 0
        %3507 = vperm.xlu0 %3506, %v3504
        %v3508 = vpop.permute.xlu0 %3507
        %v3511 = vunpack.c.l.b16 %v3503
        %v3512 = vunpack.c.h.b16 %v3503
        %v3513 = vpack.c.b16 %v3511, %v3511
        %v3514 = vpack.c.b16 %v3512, %v3512
        %vm3516 = vcmask 719872
        %v3518 = vsel %vm3516, %v3514, 0
        %v3521 = vsel %vm1158, %v3501, 0
        %v3524 = vsel %vm1158, %v3502, 0
        %3526 = vmatprep.subr.bf16.mxu0 %v3490
        %3527 = vmatpush1.bf16.msra.mxu0 %v3489
        %3528 = vmatprep.subr.bf16.mxu0 %v3488
        %3529 = vmatpush1.bf16.msra.mxu0 %v3487
        %3530 = vmatprep.subr.bf16.mxu0 %v3486
        %3531 = vmatpush1.bf16.msra.mxu0 %v3485
        %3532 = vmatprep.subr.bf16.mxu0 %v3484
        %3533 = vmatpush1.bf16.msra.mxu0 %v3483
        %3534 = vmatprep.subr.bf16.mxu0 %v3482
        %3535 = vmatpush1.bf16.msra.mxu0 %v3481
        %3536 = vmatprep.subr.bf16.mxu0 %v3480
        %3537 = vmatpush1.bf16.msra.mxu0 %v3479
        %3538 = vmatprep.subr.bf16.mxu0 %v3478
        %3539 = vmatpush1.bf16.msra.mxu0 %v3477
        %3540 = vmatprep.subr.bf16.mxu0 %v3476
        %3541 = vmatpush1.bf16.msra.mxu0 %v3475
        %3542 = vmatprep.subr.bf16.mxu0 0
        %3543 = vmatpush2.bf16.msra.mxu0 0
        %3544 = vmatprep.subr.bf16.mxu0 0
        %3545 = vmatpush2.bf16.msra.mxu0 0
        %3546 = vmatprep.subr.bf16.mxu0 %v3524
        %3547 = vmatpush2.bf16.msra.mxu0 %v3521
        %3548 = vmatprep.subr.bf16.mxu0 %v3500
        %3549 = vmatpush2.bf16.msra.mxu0 %v3499
        %3550 = vmatprep.subr.bf16.mxu0 %v3498
        %3551 = vmatpush2.bf16.msra.mxu0 %v3497
        %3552 = vmatprep.subr.bf16.mxu0 %v3496
        %3553 = vmatpush2.bf16.msra.mxu0 %v3495
        %3554 = vmatprep.subr.bf16.mxu0 %v3494
        %3555 = vmatpush2.bf16.msra.mxu0 %v3493
        %3556 = vmatprep.subr.bf16.mxu0 %v3492
        %3557 = vmatpush2.bf16.msra.mxu0 %v3491
        %3558 = vmatprep.mubr.bf16.mxu0 %v3518
        %3559 = vmatmul.mubr.bf16.gmra.mxu0 %v3513
        %v3560 = vpop.f32.mrf.mxu0
        %v3561 = vadd.f32 %v3508, %v3560
        %v3562 = vpop.f32.mrf.mxu0
        %v3563 = vadd.f32 %v3508, %v3562
        %v3564 = vpop.f32.mrf.mxu0
        %v3565 = vpop.f32.mrf.mxu0
        %3566 = vdwg.mxu0
        %v3567 = vmax.f32 %v3561, 0.0
        %v3568 = vmax.f32 %v3563, 0.0
        %3569 = vrot.lane.b32.xlu0 %v3567, 17
        %v3570 = vpop.permute.xlu0 %3569
        %3571 = vrot.lane.b32.xlu0 %v3568, 17
        %v3572 = vpop.permute.xlu0 %3571
        %v3573 = vsel %vm951, %v3570, %v3572
        %v3574 = vsel %vm951, %v3572, %v3570
        %v3575 = vmul.f32 %v3574, %v959
        %v3576 = vmul.f32 %v3573, %v963
        %3577 = vrot.lane.b32.xlu0 %v3567, 16
        %v3578 = vpop.permute.xlu0 %3577
        %3579 = vrot.lane.b32.xlu0 %v3568, 16
        %v3580 = vpop.permute.xlu0 %3579
        %v3581 = vsel %vm972, %v3578, %v3580
        %v3582 = vsel %vm972, %v3580, %v3578
        %v3583 = vmul.f32 %v3582, %v981
        %v3584 = vmul.f32 %v3581, %v985
        %3585 = vrot.lane.b32.xlu0 %v3567, 15
        %v3586 = vpop.permute.xlu0 %3585
        %3587 = vrot.lane.b32.xlu0 %v3568, 15
        %v3588 = vpop.permute.xlu0 %3587
        %v3589 = vsel %vm994, %v3586, %v3588
        %v3590 = vsel %vm994, %v3588, %v3586
        %v3591 = vmul.f32 %v3590, %v1003
        %v3592 = vmul.f32 %v3589, %v1007
        %3593 = vrot.lane.b32.xlu0 %v3567, 1
        %v3594 = vpop.permute.xlu0 %3593
        %3595 = vrot.lane.b32.xlu0 %v3568, 1
        %v3596 = vpop.permute.xlu0 %3595
        %v3597 = vsel %vm1016, %v3594, %v3596
        %v3598 = vsel %vm1016, %v3596, %v3594
        %v3599 = vmul.f32 %v3598, %v1025
        %v3600 = vmul.f32 %v3597, %v1029
        %v3601 = vmul.f32 %v3567, %v1040
        %v3602 = vmul.f32 %v3568, %v1044
        %3603 = vrot.lane.b32.xlu0 %v3567, 127
        %v3604 = vpop.permute.xlu0 %3603
        %3605 = vrot.lane.b32.xlu0 %v3568, 127
        %v3606 = vpop.permute.xlu0 %3605
        %v3607 = vsel %vm1053, %v3604, %v3606
        %v3608 = vsel %vm1053, %v3606, %v3604
        %v3609 = vmul.f32 %v3607, %v1062
        %v3610 = vmul.f32 %v3608, %v1066
        %3611 = vrot.lane.b32.xlu0 %v3567, 113
        %v3612 = vpop.permute.xlu0 %3611
        %3613 = vrot.lane.b32.xlu0 %v3568, 113
        %v3614 = vpop.permute.xlu0 %3613
        %v3615 = vsel %vm1075, %v3612, %v3614
        %v3616 = vsel %vm1075, %v3614, %v3612
        %v3617 = vmul.f32 %v3615, %v1084
        %v3618 = vmul.f32 %v3616, %v1088
        %3619 = vrot.lane.b32.xlu0 %v3567, 112
        %v3620 = vpop.permute.xlu0 %3619
        %3621 = vrot.lane.b32.xlu0 %v3568, 112
        %v3622 = vpop.permute.xlu0 %3621
        %v3623 = vsel %vm1097, %v3620, %v3622
        %v3624 = vsel %vm1097, %v3622, %v3620
        %v3625 = vmul.f32 %v3623, %v1106
        %v3626 = vmul.f32 %v3624, %v1110
        %3627 = vrot.lane.b32.xlu0 %v3567, 111
        %v3628 = vpop.permute.xlu0 %3627
        %3629 = vrot.lane.b32.xlu0 %v3568, 111
        %v3630 = vpop.permute.xlu0 %3629
        %v3631 = vsel %vm1119, %v3628, %v3630
        %v3632 = vsel %vm1119, %v3630, %v3628
        %v3633 = vmul.f32 %v3631, %v1128
        %v3634 = vmul.f32 %v3632, %v1132
        %v3635 = vpack.c.bf16 %v3583, %v3575
        %v3636 = vpack.c.bf16 %v3584, %v3576
        %v3637 = vpack.c.bf16 %v3599, %v3591
        %v3638 = vpack.c.bf16 %v3600, %v3592
        %v3639 = vpack.c.bf16 %v3609, %v3601
        %v3640 = vpack.c.bf16 %v3610, %v3602
        %v3641 = vpack.c.bf16 %v3625, %v3617
        %v3642 = vpack.c.bf16 %v3626, %v3618
        %v3643 = vpack.c.bf16 %v3633, %v3633
        %v3644 = vpack.c.bf16 %v3634, %v3634
        %v3645 = vld [vmem:[%s39] sm:$0xf]
        %v3646 = vld [vmem:[%s41] sm:$0xff]
        %3648 = vset.pattern.permute.xlu0 0
        %3649 = vperm.xlu0 %3648, %v3646
        %v3650 = vpop.permute.xlu0 %3649
        %v3653 = vsel %vm1154, %v3645, 0
        %v3656 = vsel %vm1158, %v3643, 0
        %v3659 = vsel %vm1158, %v3644, 0
        %3661 = vmatprep.subr.bf16.mxu0 0
        %3662 = vmatpush1.bf16.msra.mxu0 0
        %3663 = vmatprep.subr.bf16.mxu0 0
        %3664 = vmatpush1.bf16.msra.mxu0 0
        %3665 = vmatprep.subr.bf16.mxu0 0
        %3666 = vmatpush1.bf16.msra.mxu0 0
        %3667 = vmatprep.subr.bf16.mxu0 %v3659
        %3668 = vmatpush1.bf16.msra.mxu0 %v3656
        %3669 = vmatprep.subr.bf16.mxu0 %v3642
        %3670 = vmatpush1.bf16.msra.mxu0 %v3641
        %3671 = vmatprep.subr.bf16.mxu0 %v3640
        %3672 = vmatpush1.bf16.msra.mxu0 %v3639
        %3673 = vmatprep.subr.bf16.mxu0 %v3638
        %3674 = vmatpush1.bf16.msra.mxu0 %v3637
        %3675 = vmatprep.subr.bf16.mxu0 %v3636
        %3676 = vmatpush1.bf16.msra.mxu0 %v3635
        %3677 = vmatprep.subr.bf16.mxu0 0
        %3678 = vmatpush2.bf16.msra.mxu0 0
        %3679 = vmatprep.subr.bf16.mxu0 0
        %3680 = vmatpush2.bf16.msra.mxu0 0
        %3681 = vmatprep.subr.bf16.mxu0 0
        %3682 = vmatpush2.bf16.msra.mxu0 0
        %3683 = vmatprep.subr.bf16.mxu0 0
        %3684 = vmatpush2.bf16.msra.mxu0 0
        %3685 = vmatprep.subr.bf16.mxu0 0
        %3686 = vmatpush2.bf16.msra.mxu0 0
        %3687 = vmatprep.subr.bf16.mxu0 0
        %3688 = vmatpush2.bf16.msra.mxu0 0
        %3689 = vmatprep.subr.bf16.mxu0 0
        %3690 = vmatpush2.bf16.msra.mxu0 0
        %3691 = vmatprep.subr.bf16.mxu0 0
        %3692 = vmatpush2.bf16.msra.mxu0 0
        %3693 = vmatprep.mubr.bf16.mxu0 0
        %3694 = vmatmul.mubr.bf16.gmra.mxu0 %v3653
        %v3695 = vpop.f32.mrf.mxu0
        %v3696 = vadd.f32 %v3650, %v3695
        %v3697 = vpop.f32.mrf.mxu0
        %v3698 = vadd.f32 %v3650, %v3697
        %v3699 = vpop.f32.mrf.mxu0
        %v3700 = vpop.f32.mrf.mxu0
        %3701 = vdwg.mxu0
        %v3702 = vmax.f32 %v3696, 0.0
        %v3703 = vmax.f32 %v3698, 0.0
        %3704 = vrot.lane.b32.xlu0 %v3702, 17
        %v3705 = vpop.permute.xlu0 %3704
        %3706 = vrot.lane.b32.xlu0 %v3703, 17
        %v3707 = vpop.permute.xlu0 %3706
        %v3708 = vsel %vm951, %v3705, %v3707
        %v3709 = vsel %vm951, %v3707, %v3705
        %v3710 = vmul.f32 %v3709, %v959
        %v3711 = vmul.f32 %v3708, %v963
        %3712 = vrot.lane.b32.xlu0 %v3702, 16
        %v3713 = vpop.permute.xlu0 %3712
        %3714 = vrot.lane.b32.xlu0 %v3703, 16
        %v3715 = vpop.permute.xlu0 %3714
        %v3716 = vsel %vm972, %v3713, %v3715
        %v3717 = vsel %vm972, %v3715, %v3713
        %v3718 = vmul.f32 %v3717, %v981
        %v3719 = vmul.f32 %v3716, %v985
        %3720 = vrot.lane.b32.xlu0 %v3702, 15
        %v3721 = vpop.permute.xlu0 %3720
        %3722 = vrot.lane.b32.xlu0 %v3703, 15
        %v3723 = vpop.permute.xlu0 %3722
        %v3724 = vsel %vm994, %v3721, %v3723
        %v3725 = vsel %vm994, %v3723, %v3721
        %v3726 = vmul.f32 %v3725, %v1003
        %v3727 = vmul.f32 %v3724, %v1007
        %3728 = vrot.lane.b32.xlu0 %v3702, 1
        %v3729 = vpop.permute.xlu0 %3728
        %3730 = vrot.lane.b32.xlu0 %v3703, 1
        %v3731 = vpop.permute.xlu0 %3730
        %v3732 = vsel %vm1016, %v3729, %v3731
        %v3733 = vsel %vm1016, %v3731, %v3729
        %v3734 = vmul.f32 %v3733, %v1025
        %v3735 = vmul.f32 %v3732, %v1029
        %v3736 = vmul.f32 %v3702, %v1040
        %v3737 = vmul.f32 %v3703, %v1044
        %3738 = vrot.lane.b32.xlu0 %v3702, 127
        %v3739 = vpop.permute.xlu0 %3738
        %3740 = vrot.lane.b32.xlu0 %v3703, 127
        %v3741 = vpop.permute.xlu0 %3740
        %v3742 = vsel %vm1053, %v3739, %v3741
        %v3743 = vsel %vm1053, %v3741, %v3739
        %v3744 = vmul.f32 %v3742, %v1062
        %v3745 = vmul.f32 %v3743, %v1066
        %3746 = vrot.lane.b32.xlu0 %v3702, 113
        %v3747 = vpop.permute.xlu0 %3746
        %3748 = vrot.lane.b32.xlu0 %v3703, 113
        %v3749 = vpop.permute.xlu0 %3748
        %v3750 = vsel %vm1075, %v3747, %v3749
        %v3751 = vsel %vm1075, %v3749, %v3747
        %v3752 = vmul.f32 %v3750, %v1084
        %v3753 = vmul.f32 %v3751, %v1088
        %3754 = vrot.lane.b32.xlu0 %v3702, 112
        %v3755 = vpop.permute.xlu0 %3754
        %3756 = vrot.lane.b32.xlu0 %v3703, 112
        %v3757 = vpop.permute.xlu0 %3756
        %v3758 = vsel %vm1097, %v3755, %v3757
        %v3759 = vsel %vm1097, %v3757, %v3755
        %v3760 = vmul.f32 %v3758, %v1106
        %v3761 = vmul.f32 %v3759, %v1110
        %3762 = vrot.lane.b32.xlu0 %v3702, 111
        %v3763 = vpop.permute.xlu0 %3762
        %3764 = vrot.lane.b32.xlu0 %v3703, 111
        %v3765 = vpop.permute.xlu0 %3764
        %v3766 = vsel %vm1119, %v3763, %v3765
        %v3767 = vsel %vm1119, %v3765, %v3763
        %v3768 = vmul.f32 %v3766, %v1128
        %v3769 = vmul.f32 %v3767, %v1132
        %v3770 = vpack.c.bf16 %v3718, %v3710
        %v3771 = vpack.c.bf16 %v3719, %v3711
        %v3772 = vpack.c.bf16 %v3734, %v3726
        %v3773 = vpack.c.bf16 %v3735, %v3727
        %v3774 = vpack.c.bf16 %v3744, %v3736
        %v3775 = vpack.c.bf16 %v3745, %v3737
        %v3776 = vpack.c.bf16 %v3760, %v3752
        %v3777 = vpack.c.bf16 %v3761, %v3753
        %v3778 = vpack.c.bf16 %v3768, %v3768
        %v3779 = vpack.c.bf16 %v3769, %v3769
        %v3780 = vld [vmem:[%s43] sm:$0x1]
        %v3781 = vld [vmem:[%s45] sm:$0x3]
        %3783 = vset.pattern.permute.xlu0 0
        %3784 = vperm.xlu0 %3783, %v3781
        %v3785 = vpop.permute.xlu0 %3784
        %v3788 = vsel %vm1154, %v3780, 0
        %v3791 = vsel %vm1158, %v3778, 0
        %v3794 = vsel %vm1158, %v3779, 0
        %3796 = vmatprep.subr.bf16.mxu0 0
        %3797 = vmatpush1.bf16.msra.mxu0 0
        %3798 = vmatprep.subr.bf16.mxu0 0
        %3799 = vmatpush1.bf16.msra.mxu0 0
        %3800 = vmatprep.subr.bf16.mxu0 0
        %3801 = vmatpush1.bf16.msra.mxu0 0
        %3802 = vmatprep.subr.bf16.mxu0 %v3794
        %3803 = vmatpush1.bf16.msra.mxu0 %v3791
        %3804 = vmatprep.subr.bf16.mxu0 %v3777
        %3805 = vmatpush1.bf16.msra.mxu0 %v3776
        %3806 = vmatprep.subr.bf16.mxu0 %v3775
        %3807 = vmatpush1.bf16.msra.mxu0 %v3774
        %3808 = vmatprep.subr.bf16.mxu0 %v3773
        %3809 = vmatpush1.bf16.msra.mxu0 %v3772
        %3810 = vmatprep.subr.bf16.mxu0 %v3771
        %3811 = vmatpush1.bf16.msra.mxu0 %v3770
        %3812 = vmatprep.subr.bf16.mxu0 0
        %3813 = vmatpush2.bf16.msra.mxu0 0
        %3814 = vmatprep.subr.bf16.mxu0 0
        %3815 = vmatpush2.bf16.msra.mxu0 0
        %3816 = vmatprep.subr.bf16.mxu0 0
        %3817 = vmatpush2.bf16.msra.mxu0 0
        %3818 = vmatprep.subr.bf16.mxu0 0
        %3819 = vmatpush2.bf16.msra.mxu0 0
        %3820 = vmatprep.subr.bf16.mxu0 0
        %3821 = vmatpush2.bf16.msra.mxu0 0
        %3822 = vmatprep.subr.bf16.mxu0 0
        %3823 = vmatpush2.bf16.msra.mxu0 0
        %3824 = vmatprep.subr.bf16.mxu0 0
        %3825 = vmatpush2.bf16.msra.mxu0 0
        %3826 = vmatprep.subr.bf16.mxu0 0
        %3827 = vmatpush2.bf16.msra.mxu0 0
        %3828 = vmatprep.mubr.bf16.mxu0 0
        %3829 = vmatmul.mubr.bf16.gmra.mxu0 %v3788
        %v3830 = vpop.f32.mrf.mxu0
        %v3831 = vadd.f32 %v3785, %v3830
        %v3832 = vpop.f32.mrf.mxu0
        %v3833 = vadd.f32 %v3785, %v3832
        %v3834 = vpop.f32.mrf.mxu0
        %v3835 = vpop.f32.mrf.mxu0
        %3836 = vdwg.mxu0
        %vm3837 = vcmask 1041408
        %v3838 = vsel %vm3837, %v3831, -inf
        %v3839 = vrot.slane %v3838, 4
        %v3840 = vmax.f32 %v3838, %v3839
        %v3841 = vrot.slane %v3840, 2
        %v3842 = vmax.f32 %v3840, %v3841
        %v3843 = vrot.slane %v3842, 1
        %v3844 = vmax.f32 %v3842, %v3843
        %v3845 = vsel %vm3837, %v3833, -inf
        %v3846 = vrot.slane %v3845, 4
        %v3847 = vmax.f32 %v3845, %v3846
        %v3848 = vrot.slane %v3847, 2
        %v3849 = vmax.f32 %v3847, %v3848
        %v3850 = vrot.slane %v3849, 1
        %v3851 = vmax.f32 %v3849, %v3850
        %v3852 = vsub.f32 %v3831, %v3844
        %v3853 = vsub.f32 %v3833, %v3851
        %v3854 = vmul.f32 %v3852, 1.442695
        %v3855 = vpow.pop %v3854
        %v3856 = vmul.f32 %v3853, 1.442695
        %v3857 = vpow.pop %v3856
        %v3858 = vsel %vm3837, %v3855, 0.0
        %v3859 = vrot.slane %v3858, 4
        %v3860 = vadd.f32 %v3858, %v3859
        %v3861 = vrot.slane %v3860, 2
        %v3862 = vadd.f32 %v3860, %v3861
        %v3863 = vrot.slane %v3862, 1
        %v3864 = vadd.f32 %v3862, %v3863
        %v3865 = vsel %vm3837, %v3857, 0.0
        %v3866 = vrot.slane %v3865, 4
        %v3867 = vadd.f32 %v3865, %v3866
        %v3868 = vrot.slane %v3867, 2
        %v3869 = vadd.f32 %v3867, %v3868
        %v3870 = vrot.slane %v3869, 1
        %v3871 = vadd.f32 %v3869, %v3870
        %v3872 = vrcp.pop %v3864
        %v3873 = vrcp.pop %v3871
        %v3874 = vmul.f32 %v3855, %v3872
        %v3875 = vmul.f32 %v3857, %v3873
        %v3878 = vcombine.low %v3874, %v3875
        %v3880 = vunpack.c.l.s4 1983009808
        %v3881 = vunpack.c.0.s8 %v3880
        %v3882 = vlaneseq
        %v3883 = vshrl.u32 %v3882, 7
        %v3884 = vsub.s32 %v3881, %v3883
        %v3885 = vrot.slane %v3878, %v3884
        %3887 = vst [vmem:[%s936] sm:$0xf] %v3885
        %s3888 = sand.u32 %s719, 1
        %s3889 = scalar_lea.sflag [#allocation4], %s3888
        %s3890 = sand.u32 %s719, 1
        %s3891 = smul.addr %s3890, 4
        %s3892 = scalar_lea.vmem [#allocation5], %s3891
        // Predicated region
        $region145: #{tpu_custom_call.1} parent=139 // pred_check
          %p3893 = pneg %p729
        $region146: #{tpu_custom_call.1} parent=139 // pred_check_branch
          %3895 = sbr.rel (%p3893) target = $region148
        $region147: #{tpu_custom_call.1} parent=139 // pred_region
          %s3897 = ssub.s32 64, 64
          %3898 = vsyncadd %s3889, %s3897
          %s3899 = smul.addr %s76, 2
          %s3900 = smul.addr %s3899, 32
          %s3901 = scalar_lea.hbm %s61, %s3900
          %s3903 = sshll.u32 %s3892, 4
          %s3904 = int_to_ptr.vmem [resolvable:$true] %s3903
          %3906 = dma.vmem_to_hbm [thread:$0]  %s3904, 64, %s3901, %s3889
        $region148: #{tpu_custom_call.1} parent=139 // pred_fallthru
          _
      $region140: #{tpu_custom_call.1} parent=5 // pred_fallthru
        _
      %p3907 = scmp.le.s32.totalorder 2, %s71
      // Predicated region
      $region149: #{tpu_custom_call.1} parent=5 // pred_check
        %p3908 = pneg %p3907
      $region150: #{tpu_custom_call.1} parent=5 // pred_check_branch
        %3910 = sbr.rel (%p3908) target = $region152
      $region151: #{tpu_custom_call.1} parent=5 // pred_region
        %s3911 = ssub.s32 %s71, 2
        // Predicated region
        $region153: #{tpu_custom_call.1} parent=151 // pred_check
          %p3912 = pneg %p735
        $region154: #{tpu_custom_call.1} parent=151 // pred_check_branch
          %3914 = sbr.rel (%p3912) target = $region156
        $region155: #{tpu_custom_call.1} parent=151 // pred_region
          %s3915 = sand.u32 %s720, 1
          %s3916 = scalar_lea.sflag [#allocation4], %s3915
          %s3917 = sand.u32 %s720, 1
          %s3918 = smul.addr %s3917, 4
          %s3919 = scalar_lea.vmem [#allocation5], %s3918
          %3920 = dma.done %s3916, 64
        $region156: #{tpu_custom_call.1} parent=151 // pred_fallthru
          _
      $region152: #{tpu_custom_call.1} parent=5 // pred_fallthru
        _
    $region6: #{tpu_custom_call.1} parent=1 // loop_footer
      %s75 = sadd.s32 1, %s71
    $region7: #{tpu_custom_call.1} parent=1 // loop_footer_branch
      %70 = sbr.rel target = $region3
    $region8: #{tpu_custom_call.1} parent=1 // loop_exit
      _
    %3921 = vsyncpa [#allocation3], 1
    %s3922 = scalar_lea.sflag [#allocation3], 1
    %3923 = vsyncpa %s3922, 1
    %3924 = vsyncpa [#allocation4], 1
    %s3925 = scalar_lea.sflag [#allocation4], 1
    %3926 = vsyncpa %s3925, 1

</llo_original>
